<compile_context>
chip_gen: v7x
topology: tpu7x:2x2x1
jax: 0.10.0
libtpu: 0.0.40
codegen_flags: <defaults>
</compile_context>

<pallas_src>
import functools

import numpy as np
import jax
import jax.numpy as jnp
from jax import lax
from jax.experimental import pallas as pl
from jax.experimental.pallas import tpu as pltpu


LANE = 128  # TPU vreg lane width


def _round_up(x, m):
    return (x + m - 1) // m * m


# ----------------------------------------------------------------------------
# Fused kernel: 1x1 expand + BN + PReLU -> 3x3 depthwise (stride, pad=1) + BN +
# PReLU -> 1x1 project + BN (+ residual).  One grid step per batch element.
# ----------------------------------------------------------------------------
def _bottleneck_kernel(stride, cin, connect, use_mxu,
                       x_ref, w1_ref, s1_ref, b1_ref, a1_ref,
                       wdw_ref, s2_ref, b2_ref, a2_ref,
                       w3_ref, s3_ref, b3_ref,
                       o_ref, pad_ref):
    _, H, W, Cpi = x_ref.shape          # padded input channels on lanes
    _, Ho, Wo, Cpo = o_ref.shape        # padded output channels on lanes
    Cpm = s1_ref.shape[1]               # padded expanded channels

    x = x_ref[0]                        # (H, W, Cpi), bf16

    # ---- 1x1 expand conv + BN1 + PReLU1 -------------------------------------
    xf32 = None
    if use_mxu:
        # bf16 x bf16 -> f32 accumulate on the MXU.
        h = jnp.dot(x.reshape(H * W, Cpi), w1_ref[...],
                    preferred_element_type=jnp.float32)          # (H*W, Cpm)
    else:
        # K = cin is tiny (<32): a cin-term VPU broadcast-MAC beats a nearly
        # empty systolic-array pass.
        xf32 = x.reshape(H * W, Cpi).astype(jnp.float32)
        w1v = w1_ref[0:cin, :].astype(jnp.float32)               # (cin, Cpm)
        h = None
        for c in range(cin):
            term = xf32[:, c:c + 1] * w1v[c:c + 1, :]            # (H*W, Cpm)
            h = term if h is None else h + term
    h = h * s1_ref[...] + b1_ref[...]                            # folded BN1
    h = jnp.where(h > 0, h, h * a1_ref[...])                     # PReLU1
    h = h.reshape(H, W, Cpm)

    # ---- 3x3 depthwise conv (pad=1), stride applied at output resolution ----
    # Scratch layout (H+2, W+16, Cpm):
    #   rows  1..H      <- h rows 0..H-1          (row 0 / H+1 are the halo)
    #   cols  8..W+7    <- h cols 0..W-1          (col 7 / W+8 are the halo)
    # Interior store lands at sublane offset 8 -> tile-aligned (no masked vst);
    # only the halo rows/column-blocks are zero-filled.
    Wb = W + 16
    zrow = jnp.zeros((1, Wb, Cpm), jnp.float32)
    pad_ref[0:1] = zrow
    pad_ref[H + 1:H + 2] = zrow
    zcol = jnp.zeros((H, 8, Cpm), jnp.float32)
    pad_ref[1:H + 1, 0:8, :] = zcol
    pad_ref[1:H + 1, W + 8:Wb, :] = zcol
    pad_ref[1:H + 1, 8:W + 8, :] = h

    w9 = wdw_ref[...]                                            # (9, Cpm) f32
    acc = None
    for kh in range(3):
        for kw in range(3):
            if stride == 1:
                tap = pad_ref[kh:kh + Ho, 7 + kw:7 + kw + Wo, :]
            else:
                tap = pad_ref[pl.ds(kh, Ho, stride=stride),
                              pl.ds(7 + kw, Wo, stride=stride), :]
            term = tap * w9[3 * kh + kw:3 * kh + kw + 1, :]      # (Ho, Wo, Cpm)
            acc = term if acc is None else acc + term

    y = acc * s2_ref[...] + b2_ref[...]                          # folded BN2
    y = jnp.where(y > 0, y, y * a2_ref[...])                     # PReLU2

    # ---- 1x1 projection conv + BN3 (+ residual) ------------------------------
    # w3 is stored/shipped in bf16 (halved HBM bytes) and upcast at use; the
    # matmul runs in f32 so the in-script check against the f32 reference stays
    # tight.  TODO(synk): keep activations bf16 end-to-end in production.
    y2d = y.reshape(Ho * Wo, Cpm)
    out = jnp.dot(y2d, w3_ref[...].astype(jnp.float32),
                  preferred_element_type=jnp.float32)            # (Ho*Wo, Cpo)
    out = out * s3_ref[...] + b3_ref[...]                        # folded BN3
    if connect:                                                  # residual
        res = xf32 if xf32 is not None else x.reshape(H * W, Cpi).astype(jnp.float32)
        out = out + res
    o_ref[0] = out.reshape(Ho, Wo, Cpo)


# ----------------------------------------------------------------------------
# Wrapper (NCHW in / NCHW out, like the PyTorch module)
# ----------------------------------------------------------------------------
@functools.partial(jax.jit, static_argnames=("stride",))
def bottleneck_forward(x_nchw, params, *, stride):
    w1, wdw, w3 = params["w1"], params["wdw"], params["w3"]
    Cin, Cm = w1.shape
    Cout = w3.shape[1]
    connect = (stride == 1) and (Cin == Cout)
    use_mxu = Cin >= 32

    N, _, H, W = x_nchw.shape
    Ho = (H - 1) // stride + 1
    Wo = (W - 1) // stride + 1

    Cpi = _round_up(Cin, LANE)
    Cpm = _round_up(Cm, LANE)
    Cpo = _round_up(Cout, LANE)

    def pad_to(a, shape):
        return jnp.pad(a, [(0, t - s) for s, t in zip(a.shape, shape)])

    # NCHW -> NHWC, bf16 compute dtype, channels zero-padded to lane multiples.
    x = jnp.transpose(x_nchw, (0, 2, 3, 1)).astype(jnp.bfloat16)
    x = pad_to(x, (N, H, W, Cpi))

    w1_p = pad_to(w1, (Cpi, Cpm)).astype(jnp.bfloat16)
    w3_p = pad_to(w3, (Cpm, Cpo)).astype(jnp.bfloat16)
    wdw_p = pad_to(wdw.reshape(9, Cm), (9, Cpm)).astype(jnp.float32)
    s1 = pad_to(params["s1"], (1, Cpm)); b1 = pad_to(params["b1"], (1, Cpm))
    a1 = pad_to(params["a1"], (1, Cpm))
    s2 = pad_to(params["s2"], (1, Cpm)); b2 = pad_to(params["b2"], (1, Cpm))
    a2 = pad_to(params["a2"], (1, Cpm))
    s3 = pad_to(params["s3"], (1, Cpo)); b3 = pad_to(params["b3"], (1, Cpo))

    vec = lambda c: pl.BlockSpec((1, c), lambda n: (0, 0))
    kernel = functools.partial(_bottleneck_kernel, stride, Cin, connect, use_mxu)

    out_p = pl.pallas_call(
        kernel,
        out_shape=jax.ShapeDtypeStruct((N, Ho, Wo, Cpo), jnp.float32),
        grid_spec=pltpu.PrefetchScalarGridSpec(
            num_scalar_prefetch=0,
            grid=(N,),
            in_specs=[
                pl.BlockSpec((1, H, W, Cpi), lambda n: (n, 0, 0, 0)),
                pl.BlockSpec((Cpi, Cpm), lambda n: (0, 0)),        # w1 (resident)
                vec(Cpm), vec(Cpm), vec(Cpm),                      # s1, b1, a1
                pl.BlockSpec((9, Cpm), lambda n: (0, 0)),          # wdw taps
                vec(Cpm), vec(Cpm), vec(Cpm),                      # s2, b2, a2
                pl.BlockSpec((Cpm, Cpo), lambda n: (0, 0)),        # w3 (resident)
                vec(Cpo), vec(Cpo),                                # s3, b3
            ],
            out_specs=pl.BlockSpec((1, Ho, Wo, Cpo), lambda n: (n, 0, 0, 0)),
            scratch_shapes=[pltpu.VMEM((H + 2, W + 16, Cpm), jnp.float32)],
        ),
        compiler_params=pltpu.CompilerParams(dimension_semantics=("parallel",)),
    )(x, w1_p, s1, b1, a1, wdw_p, s2, b2, a2, w3_p, s3, b3)

    out = out_p[..., :Cout]                       # drop lane padding
    return jnp.transpose(out, (0, 3, 1, 2))       # NHWC -> NCHW


# ----------------------------------------------------------------------------
# Pure-JAX reference (lax convolutions) mirroring the kernel's dtype choices
# ----------------------------------------------------------------------------
def bottleneck_ref(x_nchw, params, *, stride):
    Cin, Cm = params["w1"].shape
    Cout = params["w3"].shape[1]
    connect = (stride == 1) and (Cin == Cout)
    dn = ("NHWC", "HWIO", "NHWC")

    x = jnp.transpose(x_nchw, (0, 2, 3, 1)).astype(jnp.bfloat16)
    w1 = params["w1"].astype(jnp.bfloat16).reshape(1, 1, Cin, Cm)
    h = lax.conv_general_dilated(x, w1, (1, 1), "VALID", dimension_numbers=dn,
                                 preferred_element_type=jnp.float32)
    h = h * params["s1"] + params["b1"]
    h = jnp.where(h > 0, h, h * params["a1"])
    h = lax.conv_general_dilated(h, params["wdw"].reshape(3, 3, 1, Cm),
                                 (stride, stride), ((1, 1), (1, 1)),
                                 dimension_numbers=dn, feature_group_count=Cm,
                                 precision=lax.Precision.HIGHEST)
    h = h * params["s2"] + params["b2"]
    h = jnp.where(h > 0, h, h * params["a2"])
    w3 = params["w3"].astype(jnp.bfloat16).astype(jnp.float32).reshape(1, 1, Cm, Cout)
    out = lax.conv_general_dilated(h, w3, (1, 1), "VALID", dimension_numbers=dn,
                                   precision=lax.Precision.HIGHEST)
    out = out * params["s3"] + params["b3"]
    if connect:
        out = out + x.astype(jnp.float32)
    return jnp.transpose(out, (0, 3, 1, 2))


# ----------------------------------------------------------------------------
# Deterministic synthetic parameters (shapes from the module's __init__)
# ----------------------------------------------------------------------------
def init_params(key, inp, oup, expansion):
    Cm = inp * expansion
    ks = jax.random.split(key, 6)

    def bn_fold(k, c):
        k1, k2, k3, k4 = jax.random.split(k, 4)
        gamma = 1.0 + 0.1 * jax.random.normal(k1, (1, c), jnp.float32)
        beta = 0.1 * jax.random.normal(k2, (1, c), jnp.float32)
        mean = 0.1 * jax.random.normal(k3, (1, c), jnp.float32)
        var = 1.0 + 0.2 * jnp.abs(jax.random.normal(k4, (1, c), jnp.float32))
        scale = gamma * lax.rsqrt(var + 1e-5)
        bias = beta - mean * scale
        return scale, bias

    w1 = 0.3 * jax.random.normal(ks[0], (inp, Cm), jnp.float32)       # 1x1 expand
    s1, b1 = bn_fold(ks[1], Cm)
    a1 = jnp.full((1, Cm), 0.25, jnp.float32)                         # nn.PReLU init
    wdw = 0.3 * jax.random.normal(ks[2], (3, 3, 1, Cm), jnp.float32)  # depthwise 3x3
    s2, b2 = bn_fold(ks[3], Cm)
    a2 = jnp.full((1, Cm), 0.25, jnp.float32)
    w3 = 0.3 * jax.random.normal(ks[4], (Cm, oup), jnp.float32)       # 1x1 project
    s3, b3 = bn_fold(ks[5], oup)
    return dict(w1=w1, s1=s1, b1=b1, a1=a1,
                wdw=wdw, s2=s2, b2=b2, a2=a2,
                w3=w3, s3=s3, b3=b3)


if __name__ == "__main__":
    key = jax.random.PRNGKey(0)
    kx1, kx2, kx3, kp1, kp2, kp3 = jax.random.split(key, 6)
    TOL = dict(rtol=1e-3, atol=1e-3)

    # Config 1: residual ("connect") branch — stride=1, inp == oup (VPU expand path)
    p1 = init_params(kp1, 4, 4, 2)
    x1 = jax.random.normal(kx1, (2, 4, 16, 16), jnp.float32)
    o1 = jax.block_until_ready(bottleneck_forward(x1, p1, stride=1))
    np.testing.assert_allclose(np.asarray(o1),
                               np.asarray(bottleneck_ref(x1, p1, stride=1)), **TOL)

    # Config 2: projection branch — stride=2, inp != oup (strided in-kernel taps)
    p2 = init_params(kp2, 4, 8, 2)
    x2 = jax.random.normal(kx2, (2, 4, 16, 16), jnp.float32)
    o2 = jax.block_until_ready(bottleneck_forward(x2, p2, stride=2))
    np.testing.assert_allclose(np.asarray(o2),
                               np.asarray(bottleneck_ref(x2, p2, stride=2)), **TOL)

    # Config 3: production-like channel counts (Cin=32, Cm=128) — MXU expand path
    p3 = init_params(kp3, 32, 32, 4)
    x3 = jax.random.normal(kx3, (2, 32, 16, 16), jnp.float32)
    o3 = jax.block_until_ready(bottleneck_forward(x3, p3, stride=1))
    np.testing.assert_allclose(np.asarray(o3),
                               np.asarray(bottleneck_ref(x3, p3, stride=1)), **TOL)

    print("KERNEL_OK")
</pallas_src>

<mosaic_0001>
module attributes {stable_mosaic.version = 11 : i64} {
  func.func @_bottleneck_kernel(%arg0: i32, %arg1: memref<1x16x16x128xbf16, #tpu.memory_space<vmem>>, %arg2: memref<128x128xbf16, #tpu.memory_space<vmem>>, %arg3: memref<1x128xf32, #tpu.memory_space<vmem>>, %arg4: memref<1x128xf32, #tpu.memory_space<vmem>>, %arg5: memref<1x128xf32, #tpu.memory_space<vmem>>, %arg6: memref<9x128xf32, #tpu.memory_space<vmem>>, %arg7: memref<1x128xf32, #tpu.memory_space<vmem>>, %arg8: memref<1x128xf32, #tpu.memory_space<vmem>>, %arg9: memref<1x128xf32, #tpu.memory_space<vmem>>, %arg10: memref<128x128xbf16, #tpu.memory_space<vmem>>, %arg11: memref<1x128xf32, #tpu.memory_space<vmem>>, %arg12: memref<1x128xf32, #tpu.memory_space<vmem>>, %arg13: memref<1x16x16x128xf32, #tpu.memory_space<vmem>>, %arg14: memref<18x32x128xf32, #tpu.memory_space<vmem>>) attributes {dimension_semantics = [#tpu.dimension_semantics<parallel>], iteration_bounds = array<i64: 2>, scalar_prefetch = 0 : i64, scratch_operands = 1 : i64, tpu.core_type = #tpu.core_type<tc>, window_params = [{transform_indices = @transform_0, window_bounds = array<i64: 1, 16, 16, 128>}, {pipeline_mode = #tpu.pipeline_mode<synchronous>, transform_indices = @transform_1, window_bounds = array<i64: 128, 128>}, {pipeline_mode = #tpu.pipeline_mode<synchronous>, transform_indices = @transform_2, window_bounds = array<i64: 1, 128>}, {pipeline_mode = #tpu.pipeline_mode<synchronous>, transform_indices = @transform_3, window_bounds = array<i64: 1, 128>}, {pipeline_mode = #tpu.pipeline_mode<synchronous>, transform_indices = @transform_4, window_bounds = array<i64: 1, 128>}, {pipeline_mode = #tpu.pipeline_mode<synchronous>, transform_indices = @transform_5, window_bounds = array<i64: 9, 128>}, {pipeline_mode = #tpu.pipeline_mode<synchronous>, transform_indices = @transform_6, window_bounds = array<i64: 1, 128>}, {pipeline_mode = #tpu.pipeline_mode<synchronous>, transform_indices = @transform_7, window_bounds = array<i64: 1, 128>}, {pipeline_mode = #tpu.pipeline_mode<synchronous>, transform_indices = @transform_8, window_bounds = array<i64: 1, 128>}, {pipeline_mode = #tpu.pipeline_mode<synchronous>, transform_indices = @transform_9, window_bounds = array<i64: 128, 128>}, {pipeline_mode = #tpu.pipeline_mode<synchronous>, transform_indices = @transform_10, window_bounds = array<i64: 1, 128>}, {pipeline_mode = #tpu.pipeline_mode<synchronous>, transform_indices = @transform_11, window_bounds = array<i64: 1, 128>}, {transform_indices = @transform_12, window_bounds = array<i64: 1, 16, 16, 128>}]} {
    %c0 = arith.constant 0 : index
    %c0_0 = arith.constant 0 : index
    %c0_1 = arith.constant 0 : index
    %c0_2 = arith.constant 0 : index
    %0 = vector.load %arg1[%c0, %c0_0, %c0_1, %c0_2] : memref<1x16x16x128xbf16, #tpu.memory_space<vmem>>, vector<1x16x16x128xbf16>
    %1 = vector.shape_cast %0 : vector<1x16x16x128xbf16> to vector<16x16x128xbf16>
    %2 = vector.shape_cast %1 : vector<16x16x128xbf16> to vector<256x128xbf16>
    %3 = arith.extf %2 : vector<256x128xbf16> to vector<256x128xf32>
    %c0_3 = arith.constant 0 : index
    %c0_4 = arith.constant 0 : index
    %4 = vector.load %arg2[%c0_3, %c0_4] : memref<128x128xbf16, #tpu.memory_space<vmem>>, vector<4x128xbf16>
    %5 = arith.extf %4 : vector<4x128xbf16> to vector<4x128xf32>
    %6 = vector.extract_strided_slice %3 {offsets = [0, 0], sizes = [256, 1], strides = [1, 1]} : vector<256x128xf32> to vector<256x1xf32>
    %7 = vector.extract_strided_slice %5 {offsets = [0, 0], sizes = [1, 128], strides = [1, 1]} : vector<4x128xf32> to vector<1x128xf32>
    %8 = vector.broadcast %6 : vector<256x1xf32> to vector<256x128xf32>
    %9 = vector.broadcast %7 : vector<1x128xf32> to vector<256x128xf32>
    %10 = arith.mulf %8, %9 : vector<256x128xf32>
    %11 = vector.extract_strided_slice %3 {offsets = [0, 1], sizes = [256, 1], strides = [1, 1]} : vector<256x128xf32> to vector<256x1xf32>
    %12 = vector.extract_strided_slice %5 {offsets = [1, 0], sizes = [1, 128], strides = [1, 1]} : vector<4x128xf32> to vector<1x128xf32>
    %13 = vector.broadcast %11 : vector<256x1xf32> to vector<256x128xf32>
    %14 = vector.broadcast %12 : vector<1x128xf32> to vector<256x128xf32>
    %15 = arith.mulf %13, %14 : vector<256x128xf32>
    %16 = arith.addf %10, %15 : vector<256x128xf32>
    %17 = vector.extract_strided_slice %3 {offsets = [0, 2], sizes = [256, 1], strides = [1, 1]} : vector<256x128xf32> to vector<256x1xf32>
    %18 = vector.extract_strided_slice %5 {offsets = [2, 0], sizes = [1, 128], strides = [1, 1]} : vector<4x128xf32> to vector<1x128xf32>
    %19 = vector.broadcast %17 : vector<256x1xf32> to vector<256x128xf32>
    %20 = vector.broadcast %18 : vector<1x128xf32> to vector<256x128xf32>
    %21 = arith.mulf %19, %20 : vector<256x128xf32>
    %22 = arith.addf %16, %21 : vector<256x128xf32>
    %23 = vector.extract_strided_slice %3 {offsets = [0, 3], sizes = [256, 1], strides = [1, 1]} : vector<256x128xf32> to vector<256x1xf32>
    %24 = vector.extract_strided_slice %5 {offsets = [3, 0], sizes = [1, 128], strides = [1, 1]} : vector<4x128xf32> to vector<1x128xf32>
    %25 = vector.broadcast %23 : vector<256x1xf32> to vector<256x128xf32>
    %26 = vector.broadcast %24 : vector<1x128xf32> to vector<256x128xf32>
    %27 = arith.mulf %25, %26 : vector<256x128xf32>
    %28 = arith.addf %22, %27 : vector<256x128xf32>
    %c0_5 = arith.constant 0 : index
    %c0_6 = arith.constant 0 : index
    %29 = vector.load %arg3[%c0_5, %c0_6] : memref<1x128xf32, #tpu.memory_space<vmem>>, vector<1x128xf32>
    %30 = vector.broadcast %29 : vector<1x128xf32> to vector<256x128xf32>
    %31 = arith.mulf %28, %30 : vector<256x128xf32>
    %c0_7 = arith.constant 0 : index
    %c0_8 = arith.constant 0 : index
    %32 = vector.load %arg4[%c0_7, %c0_8] : memref<1x128xf32, #tpu.memory_space<vmem>>, vector<1x128xf32>
    %33 = vector.broadcast %32 : vector<1x128xf32> to vector<256x128xf32>
    %34 = arith.addf %31, %33 : vector<256x128xf32>
    %cst = arith.constant 0.000000e+00 : f32
    %35 = vector.broadcast %cst : f32 to vector<256x128xf32>
    %36 = arith.cmpf ogt, %34, %35 : vector<256x128xf32>
    %c0_9 = arith.constant 0 : index
    %c0_10 = arith.constant 0 : index
    %37 = vector.load %arg5[%c0_9, %c0_10] : memref<1x128xf32, #tpu.memory_space<vmem>>, vector<1x128xf32>
    %38 = vector.broadcast %37 : vector<1x128xf32> to vector<256x128xf32>
    %39 = arith.mulf %34, %38 : vector<256x128xf32>
    %40 = arith.select %36, %34, %39 : vector<256x128xi1>, vector<256x128xf32>
    %41 = vector.shape_cast %40 : vector<256x128xf32> to vector<16x16x128xf32>
    %cst_11 = arith.constant 0.000000e+00 : f32
    %42 = vector.broadcast %cst_11 : f32 to vector<1x32x128xf32>
    %c0_12 = arith.constant 0 : index
    %c0_13 = arith.constant 0 : index
    %c0_14 = arith.constant 0 : index
    %43 = vector.load %arg14[%c0_12, %c0_13, %c0_14] : memref<18x32x128xf32, #tpu.memory_space<vmem>>, vector<1x32x128xf32>
    tpu.vector_store %arg14[%c0_12, %c0_13, %c0_14], %42 {strides = array<i32>} : memref<18x32x128xf32, #tpu.memory_space<vmem>>, vector<1x32x128xf32>,
    %c17 = arith.constant 17 : index
    %c0_15 = arith.constant 0 : index
    %c0_16 = arith.constant 0 : index
    %44 = vector.load %arg14[%c17, %c0_15, %c0_16] : memref<18x32x128xf32, #tpu.memory_space<vmem>>, vector<1x32x128xf32>
    tpu.vector_store %arg14[%c17, %c0_15, %c0_16], %42 {strides = array<i32>} : memref<18x32x128xf32, #tpu.memory_space<vmem>>, vector<1x32x128xf32>,
    %cst_17 = arith.constant 0.000000e+00 : f32
    %45 = vector.broadcast %cst_17 : f32 to vector<16x8x128xf32>
    %c1 = arith.constant 1 : index
    %c0_18 = arith.constant 0 : index
    %c0_19 = arith.constant 0 : index
    %46 = vector.load %arg14[%c1, %c0_18, %c0_19] : memref<18x32x128xf32, #tpu.memory_space<vmem>>, vector<16x8x128xf32>
    tpu.vector_store %arg14[%c1, %c0_18, %c0_19], %45 {strides = array<i32>} : memref<18x32x128xf32, #tpu.memory_space<vmem>>, vector<16x8x128xf32>,
    %c1_20 = arith.constant 1 : index
    %c24 = arith.constant 24 : index
    %c0_21 = arith.constant 0 : index
    %47 = vector.load %arg14[%c1_20, %c24, %c0_21] : memref<18x32x128xf32, #tpu.memory_space<vmem>>, vector<16x8x128xf32>
    tpu.vector_store %arg14[%c1_20, %c24, %c0_21], %45 {strides = array<i32>} : memref<18x32x128xf32, #tpu.memory_space<vmem>>, vector<16x8x128xf32>,
    %c1_22 = arith.constant 1 : index
    %c8 = arith.constant 8 : index
    %c0_23 = arith.constant 0 : index
    %48 = vector.load %arg14[%c1_22, %c8, %c0_23] : memref<18x32x128xf32, #tpu.memory_space<vmem>>, vector<16x16x128xf32>
    tpu.vector_store %arg14[%c1_22, %c8, %c0_23], %41 {strides = array<i32>} : memref<18x32x128xf32, #tpu.memory_space<vmem>>, vector<16x16x128xf32>,
    %c0_24 = arith.constant 0 : index
    %c0_25 = arith.constant 0 : index
    %49 = vector.load %arg6[%c0_24, %c0_25] : memref<9x128xf32, #tpu.memory_space<vmem>>, vector<9x128xf32>
    %c0_26 = arith.constant 0 : index
    %c7 = arith.constant 7 : index
    %c0_27 = arith.constant 0 : index
    %50 = vector.load %arg14[%c0_26, %c7, %c0_27] : memref<18x32x128xf32, #tpu.memory_space<vmem>>, vector<16x16x128xf32>
    %51 = vector.extract_strided_slice %49 {offsets = [0, 0], sizes = [1, 128], strides = [1, 1]} : vector<9x128xf32> to vector<1x128xf32>
    %52 = vector.shape_cast %51 : vector<1x128xf32> to vector<1x1x128xf32>
    %53 = vector.broadcast %52 : vector<1x1x128xf32> to vector<16x16x128xf32>
    %54 = arith.mulf %50, %53 : vector<16x16x128xf32>
    %c0_28 = arith.constant 0 : index
    %c8_29 = arith.constant 8 : index
    %c0_30 = arith.constant 0 : index
    %55 = vector.load %arg14[%c0_28, %c8_29, %c0_30] : memref<18x32x128xf32, #tpu.memory_space<vmem>>, vector<16x16x128xf32>
    %56 = vector.extract_strided_slice %49 {offsets = [1, 0], sizes = [1, 128], strides = [1, 1]} : vector<9x128xf32> to vector<1x128xf32>
    %57 = vector.shape_cast %56 : vector<1x128xf32> to vector<1x1x128xf32>
    %58 = vector.broadcast %57 : vector<1x1x128xf32> to vector<16x16x128xf32>
    %59 = arith.mulf %55, %58 : vector<16x16x128xf32>
    %60 = arith.addf %54, %59 : vector<16x16x128xf32>
    %c0_31 = arith.constant 0 : index
    %c9 = arith.constant 9 : index
    %c0_32 = arith.constant 0 : index
    %61 = vector.load %arg14[%c0_31, %c9, %c0_32] : memref<18x32x128xf32, #tpu.memory_space<vmem>>, vector<16x16x128xf32>
    %62 = vector.extract_strided_slice %49 {offsets = [2, 0], sizes = [1, 128], strides = [1, 1]} : vector<9x128xf32> to vector<1x128xf32>
    %63 = vector.shape_cast %62 : vector<1x128xf32> to vector<1x1x128xf32>
    %64 = vector.broadcast %63 : vector<1x1x128xf32> to vector<16x16x128xf32>
    %65 = arith.mulf %61, %64 : vector<16x16x128xf32>
    %66 = arith.addf %60, %65 : vector<16x16x128xf32>
    %c1_33 = arith.constant 1 : index
    %c7_34 = arith.constant 7 : index
    %c0_35 = arith.constant 0 : index
    %67 = vector.load %arg14[%c1_33, %c7_34, %c0_35] : memref<18x32x128xf32, #tpu.memory_space<vmem>>, vector<16x16x128xf32>
    %68 = vector.extract_strided_slice %49 {offsets = [3, 0], sizes = [1, 128], strides = [1, 1]} : vector<9x128xf32> to vector<1x128xf32>
    %69 = vector.shape_cast %68 : vector<1x128xf32> to vector<1x1x128xf32>
    %70 = vector.broadcast %69 : vector<1x1x128xf32> to vector<16x16x128xf32>
    %71 = arith.mulf %67, %70 : vector<16x16x128xf32>
    %72 = arith.addf %66, %71 : vector<16x16x128xf32>
    %c1_36 = arith.constant 1 : index
    %c8_37 = arith.constant 8 : index
    %c0_38 = arith.constant 0 : index
    %73 = vector.load %arg14[%c1_36, %c8_37, %c0_38] : memref<18x32x128xf32, #tpu.memory_space<vmem>>, vector<16x16x128xf32>
    %74 = vector.extract_strided_slice %49 {offsets = [4, 0], sizes = [1, 128], strides = [1, 1]} : vector<9x128xf32> to vector<1x128xf32>
    %75 = vector.shape_cast %74 : vector<1x128xf32> to vector<1x1x128xf32>
    %76 = vector.broadcast %75 : vector<1x1x128xf32> to vector<16x16x128xf32>
    %77 = arith.mulf %73, %76 : vector<16x16x128xf32>
    %78 = arith.addf %72, %77 : vector<16x16x128xf32>
    %c1_39 = arith.constant 1 : index
    %c9_40 = arith.constant 9 : index
    %c0_41 = arith.constant 0 : index
    %79 = vector.load %arg14[%c1_39, %c9_40, %c0_41] : memref<18x32x128xf32, #tpu.memory_space<vmem>>, vector<16x16x128xf32>
    %80 = vector.extract_strided_slice %49 {offsets = [5, 0], sizes = [1, 128], strides = [1, 1]} : vector<9x128xf32> to vector<1x128xf32>
    %81 = vector.shape_cast %80 : vector<1x128xf32> to vector<1x1x128xf32>
    %82 = vector.broadcast %81 : vector<1x1x128xf32> to vector<16x16x128xf32>
    %83 = arith.mulf %79, %82 : vector<16x16x128xf32>
    %84 = arith.addf %78, %83 : vector<16x16x128xf32>
    %c2 = arith.constant 2 : index
    %c7_42 = arith.constant 7 : index
    %c0_43 = arith.constant 0 : index
    %85 = vector.load %arg14[%c2, %c7_42, %c0_43] : memref<18x32x128xf32, #tpu.memory_space<vmem>>, vector<16x16x128xf32>
    %86 = vector.extract_strided_slice %49 {offsets = [6, 0], sizes = [1, 128], strides = [1, 1]} : vector<9x128xf32> to vector<1x128xf32>
    %87 = vector.shape_cast %86 : vector<1x128xf32> to vector<1x1x128xf32>
    %88 = vector.broadcast %87 : vector<1x1x128xf32> to vector<16x16x128xf32>
    %89 = arith.mulf %85, %88 : vector<16x16x128xf32>
    %90 = arith.addf %84, %89 : vector<16x16x128xf32>
    %c2_44 = arith.constant 2 : index
    %c8_45 = arith.constant 8 : index
    %c0_46 = arith.constant 0 : index
    %91 = vector.load %arg14[%c2_44, %c8_45, %c0_46] : memref<18x32x128xf32, #tpu.memory_space<vmem>>, vector<16x16x128xf32>
    %92 = vector.extract_strided_slice %49 {offsets = [7, 0], sizes = [1, 128], strides = [1, 1]} : vector<9x128xf32> to vector<1x128xf32>
    %93 = vector.shape_cast %92 : vector<1x128xf32> to vector<1x1x128xf32>
    %94 = vector.broadcast %93 : vector<1x1x128xf32> to vector<16x16x128xf32>
    %95 = arith.mulf %91, %94 : vector<16x16x128xf32>
    %96 = arith.addf %90, %95 : vector<16x16x128xf32>
    %c2_47 = arith.constant 2 : index
    %c9_48 = arith.constant 9 : index
    %c0_49 = arith.constant 0 : index
    %97 = vector.load %arg14[%c2_47, %c9_48, %c0_49] : memref<18x32x128xf32, #tpu.memory_space<vmem>>, vector<16x16x128xf32>
    %98 = vector.extract_strided_slice %49 {offsets = [8, 0], sizes = [1, 128], strides = [1, 1]} : vector<9x128xf32> to vector<1x128xf32>
    %99 = vector.shape_cast %98 : vector<1x128xf32> to vector<1x1x128xf32>
    %100 = vector.broadcast %99 : vector<1x1x128xf32> to vector<16x16x128xf32>
    %101 = arith.mulf %97, %100 : vector<16x16x128xf32>
    %102 = arith.addf %96, %101 : vector<16x16x128xf32>
    %c0_50 = arith.constant 0 : index
    %c0_51 = arith.constant 0 : index
    %103 = vector.load %arg7[%c0_50, %c0_51] : memref<1x128xf32, #tpu.memory_space<vmem>>, vector<1x128xf32>
    %104 = vector.shape_cast %103 : vector<1x128xf32> to vector<1x1x128xf32>
    %105 = vector.broadcast %104 : vector<1x1x128xf32> to vector<16x16x128xf32>
    %106 = arith.mulf %102, %105 : vector<16x16x128xf32>
    %c0_52 = arith.constant 0 : index
    %c0_53 = arith.constant 0 : index
    %107 = vector.load %arg8[%c0_52, %c0_53] : memref<1x128xf32, #tpu.memory_space<vmem>>, vector<1x128xf32>
    %108 = vector.shape_cast %107 : vector<1x128xf32> to vector<1x1x128xf32>
    %109 = vector.broadcast %108 : vector<1x1x128xf32> to vector<16x16x128xf32>
    %110 = arith.addf %106, %109 : vector<16x16x128xf32>
    %cst_54 = arith.constant 0.000000e+00 : f32
    %111 = vector.broadcast %cst_54 : f32 to vector<16x16x128xf32>
    %112 = arith.cmpf ogt, %110, %111 : vector<16x16x128xf32>
    %c0_55 = arith.constant 0 : index
    %c0_56 = arith.constant 0 : index
    %113 = vector.load %arg9[%c0_55, %c0_56] : memref<1x128xf32, #tpu.memory_space<vmem>>, vector<1x128xf32>
    %114 = vector.shape_cast %113 : vector<1x128xf32> to vector<1x1x128xf32>
    %115 = vector.broadcast %114 : vector<1x1x128xf32> to vector<16x16x128xf32>
    %116 = arith.mulf %110, %115 : vector<16x16x128xf32>
    %117 = arith.select %112, %110, %116 : vector<16x16x128xi1>, vector<16x16x128xf32>
    %118 = vector.shape_cast %117 : vector<16x16x128xf32> to vector<256x128xf32>
    %c0_57 = arith.constant 0 : index
    %c0_58 = arith.constant 0 : index
    %119 = vector.load %arg10[%c0_57, %c0_58] : memref<128x128xbf16, #tpu.memory_space<vmem>>, vector<128x128xbf16>
    %120 = arith.extf %119 : vector<128x128xbf16> to vector<128x128xf32>
    %cst_59 = arith.constant dense<0.000000e+00> : vector<256x128xf32>
    %121 = tpu.matmul %118, %120, %cst_59 {dimension_numbers = #tpu.dot_dimension_numbers<[1], [0], [0], [1], [0, 0, 1, 1], [], []>} : vector<256x128xf32>, vector<128x128xf32>, vector<256x128xf32> -> vector<256x128xf32>
    %c0_60 = arith.constant 0 : index
    %c0_61 = arith.constant 0 : index
    %122 = vector.load %arg11[%c0_60, %c0_61] : memref<1x128xf32, #tpu.memory_space<vmem>>, vector<1x128xf32>
    %123 = vector.broadcast %122 : vector<1x128xf32> to vector<256x128xf32>
    %124 = arith.mulf %121, %123 : vector<256x128xf32>
    %c0_62 = arith.constant 0 : index
    %c0_63 = arith.constant 0 : index
    %125 = vector.load %arg12[%c0_62, %c0_63] : memref<1x128xf32, #tpu.memory_space<vmem>>, vector<1x128xf32>
    %126 = vector.broadcast %125 : vector<1x128xf32> to vector<256x128xf32>
    %127 = arith.addf %124, %126 : vector<256x128xf32>
    %128 = arith.addf %127, %3 : vector<256x128xf32>
    %129 = vector.shape_cast %128 : vector<256x128xf32> to vector<16x16x128xf32>
    %c0_64 = arith.constant 0 : index
    %c0_65 = arith.constant 0 : index
    %c0_66 = arith.constant 0 : index
    %c0_67 = arith.constant 0 : index
    %130 = vector.load %arg13[%c0_64, %c0_65, %c0_66, %c0_67] : memref<1x16x16x128xf32, #tpu.memory_space<vmem>>, vector<1x16x16x128xf32>
    %131 = vector.shape_cast %130 : vector<1x16x16x128xf32> to vector<16x16x128xf32>
    %132 = vector.shape_cast %129 : vector<16x16x128xf32> to vector<1x16x16x128xf32>
    tpu.vector_store %arg13[%c0_64, %c0_65, %c0_66, %c0_67], %132 {strides = array<i32>} : memref<1x16x16x128xf32, #tpu.memory_space<vmem>>, vector<1x16x16x128xf32>,
    return
  }
  func.func @transform_0(%arg0: i32) -> (i32, i32, i32, i32) {
    %c0_i32 = arith.constant 0 : i32
    %c0_i32_0 = arith.constant 0 : i32
    %c0_i32_1 = arith.constant 0 : i32
    %c0_i32_2 = arith.constant 0 : i32
    return %arg0, %c0_i32, %c0_i32_0, %c0_i32_1 : i32, i32, i32, i32
  }
  func.func @transform_1(%arg0: i32) -> (i32, i32) {
    %c0_i32 = arith.constant 0 : i32
    %c0_i32_0 = arith.constant 0 : i32
    %c0_i32_1 = arith.constant 0 : i32
    return %c0_i32, %c0_i32_0 : i32, i32
  }
  func.func @transform_2(%arg0: i32) -> (i32, i32) {
    %c0_i32 = arith.constant 0 : i32
    %c0_i32_0 = arith.constant 0 : i32
    %c0_i32_1 = arith.constant 0 : i32
    return %c0_i32, %c0_i32_0 : i32, i32
  }
  func.func @transform_3(%arg0: i32) -> (i32, i32) {
    %c0_i32 = arith.constant 0 : i32
    %c0_i32_0 = arith.constant 0 : i32
    %c0_i32_1 = arith.constant 0 : i32
    return %c0_i32, %c0_i32_0 : i32, i32
  }
  func.func @transform_4(%arg0: i32) -> (i32, i32) {
    %c0_i32 = arith.constant 0 : i32
    %c0_i32_0 = arith.constant 0 : i32
    %c0_i32_1 = arith.constant 0 : i32
    return %c0_i32, %c0_i32_0 : i32, i32
  }
  func.func @transform_5(%arg0: i32) -> (i32, i32) {
    %c0_i32 = arith.constant 0 : i32
    %c0_i32_0 = arith.constant 0 : i32
    %c0_i32_1 = arith.constant 0 : i32
    return %c0_i32, %c0_i32_0 : i32, i32
  }
  func.func @transform_6(%arg0: i32) -> (i32, i32) {
    %c0_i32 = arith.constant 0 : i32
    %c0_i32_0 = arith.constant 0 : i32
    %c0_i32_1 = arith.constant 0 : i32
    return %c0_i32, %c0_i32_0 : i32, i32
  }
  func.func @transform_7(%arg0: i32) -> (i32, i32) {
    %c0_i32 = arith.constant 0 : i32
    %c0_i32_0 = arith.constant 0 : i32
    %c0_i32_1 = arith.constant 0 : i32
    return %c0_i32, %c0_i32_0 : i32, i32
  }
  func.func @transform_8(%arg0: i32) -> (i32, i32) {
    %c0_i32 = arith.constant 0 : i32
    %c0_i32_0 = arith.constant 0 : i32
    %c0_i32_1 = arith.constant 0 : i32
    return %c0_i32, %c0_i32_0 : i32, i32
  }
  func.func @transform_9(%arg0: i32) -> (i32, i32) {
    %c0_i32 = arith.constant 0 : i32
    %c0_i32_0 = arith.constant 0 : i32
    %c0_i32_1 = arith.constant 0 : i32
    return %c0_i32, %c0_i32_0 : i32, i32
  }
  func.func @transform_10(%arg0: i32) -> (i32, i32) {
    %c0_i32 = arith.constant 0 : i32
    %c0_i32_0 = arith.constant 0 : i32
    %c0_i32_1 = arith.constant 0 : i32
    return %c0_i32, %c0_i32_0 : i32, i32
  }
  func.func @transform_11(%arg0: i32) -> (i32, i32) {
    %c0_i32 = arith.constant 0 : i32
    %c0_i32_0 = arith.constant 0 : i32
    %c0_i32_1 = arith.constant 0 : i32
    return %c0_i32, %c0_i32_0 : i32, i32
  }
  func.func @transform_12(%arg0: i32) -> (i32, i32, i32, i32) {
    %c0_i32 = arith.constant 0 : i32
    %c0_i32_0 = arith.constant 0 : i32
    %c0_i32_1 = arith.constant 0 : i32
    %c0_i32_2 = arith.constant 0 : i32
    return %arg0, %c0_i32, %c0_i32_0, %c0_i32_1 : i32, i32, i32, i32
  }
}

</mosaic_0001>

<llo_original>
// kernel: bottleneck_forward.1
$region0: #{bottleneck_forward.1}
  #allocation0 [shape = 'u32[]', space=smem, size = 0x4, offset = 0x4, fixed_abs, tag = 'smem constant byte address 0x4 - core index']
  #allocation1 [shape = 'u32[144,128]{1,0:T(1,128)}', space=vmem, size = 0x12000, scoped, tag = 'internal scratch']
  #allocation2 [shape = 'f32[18,32,128]{2,1,0:T(8,128)}', space=vmem, size = 0x48000, scoped, tag = 'scratch operand']
  %s0 = inlined_call_operand.vmem [shape: bf16[2,16,16,128], index: 0, kind: input, shape index: {}]
  %s1 = inlined_call_operand.vmem [shape: bf16[128,128], index: 1, kind: input, shape index: {}]
  %s2 = inlined_call_operand.vmem [shape: f32[1,128], index: 2, kind: input, shape index: {}]
  %s3 = inlined_call_operand.vmem [shape: f32[1,128], index: 3, kind: input, shape index: {}]
  %s4 = inlined_call_operand.vmem [shape: f32[1,128], index: 4, kind: input, shape index: {}]
  %s5 = inlined_call_operand.vmem [shape: f32[9,128], index: 5, kind: input, shape index: {}]
  %s6 = inlined_call_operand.vmem [shape: f32[1,128], index: 6, kind: input, shape index: {}]
  %s7 = inlined_call_operand.vmem [shape: f32[1,128], index: 7, kind: input, shape index: {}]
  %s8 = inlined_call_operand.vmem [shape: f32[1,128], index: 8, kind: input, shape index: {}]
  %s9 = inlined_call_operand.vmem [shape: bf16[128,128], index: 9, kind: input, shape index: {}]
  %s10 = inlined_call_operand.vmem [shape: f32[1,128], index: 10, kind: input, shape index: {}]
  %s11 = inlined_call_operand.vmem [shape: f32[1,128], index: 11, kind: input, shape index: {}]
  %s12 = inlined_call_operand.vmem [shape: f32[2,16,16,128], index: 12, kind: output, shape index: {}]
  %s13 = sld [smem:[#allocation0]]
  $region81: #{bottleneck_forward.1} parent=0
    _
  %s15 = ssub.s32 1, %s13
  %s16 = scalar_select 0, %s15, %s13
  loop: start=0, step=1, limit=4
  $region2: #{bottleneck_forward.1} parent=0 // loop_pre_header
    _
  $region3: #{bottleneck_forward.1} parent=0 // loop_header
    %s18 = sphi 0, %s22
    %p19 = scmp.ge.s32.totalorder %s18, 4
    %s28 = sphi 0, %s30
    %s31 = sphi 0, %s28
    %s32 = sphi 0, %s31
    %s48 = sphi 0, %s32
    %s52 = sphi 0, %s52
    %s54 = sphi 0, %s52
    %s55 = sphi 0, %s54
    %s69 = sphi 0, %s55
    %s73 = sphi 0, %s73
    %s75 = sphi 0, %s73
    %s76 = sphi 0, %s75
    %s90 = sphi 0, %s76
    %s94 = sphi 0, %s94
    %s96 = sphi 0, %s94
    %s97 = sphi 0, %s96
    %s111 = sphi 0, %s97
    %s115 = sphi 0, %s115
    %s117 = sphi 0, %s115
    %s118 = sphi 0, %s117
    %s132 = sphi 0, %s118
    %s136 = sphi 0, %s136
    %s138 = sphi 0, %s136
    %s139 = sphi 0, %s138
    %s153 = sphi 0, %s139
    %s157 = sphi 0, %s157
    %s159 = sphi 0, %s157
    %s160 = sphi 0, %s159
    %s174 = sphi 0, %s160
    %s178 = sphi 0, %s178
    %s180 = sphi 0, %s178
    %s181 = sphi 0, %s180
    %s195 = sphi 0, %s181
    %s199 = sphi 0, %s199
    %s201 = sphi 0, %s199
    %s202 = sphi 0, %s201
    %s216 = sphi 0, %s202
    %s220 = sphi 0, %s220
    %s222 = sphi 0, %s220
    %s223 = sphi 0, %s222
    %s237 = sphi 0, %s223
    %s241 = sphi 0, %s241
    %s243 = sphi 0, %s241
    %s244 = sphi 0, %s243
    %s258 = sphi 0, %s244
    %s262 = sphi 0, %s262
    %s264 = sphi 0, %s262
    %s265 = sphi 0, %s264
    %s279 = sphi 0, %s265
    %s285 = sphi 0, %s287
    %s288 = sphi 0, %s285
    %s289 = sphi 0, %s288
    %s305 = sphi 0, %s289
  $region4: #{bottleneck_forward.1} parent=0 // loop_header_branch
    %21 = sbr.rel (%p19) target = $region8
  $region5: #{bottleneck_forward.1} parent=0 // loop_body
    %s23 = ssub.s32 %s18, 1
    %s24 = ssub.s32 %s18, 2
    %s25 = sadd.s32 %s18, 1
    %s26 = ssub.s32 %s18, %s25
    %p27 = scmp.eq.s32.totalorder %s26, 0
    %s29 = sadd.s32 %s28, 1
    %s30 = scalar_select %p27, %s28, %s29
    %p33 = pneg %p27
    %p34 = scmp.eq.s32.totalorder %s18, 1
    %p35 = por %p33, %p34
    %p36 = scmp.ne.s32.totalorder %s28, %s31
    %p37 = scmp.eq.s32.totalorder %s18, 0
    %p38 = por %p36, %p37
    %p39 = scmp.ne.s32.totalorder %s28, %s31
    %p40 = scmp.eq.s32.totalorder %s23, 1
    %p41 = por %p39, %p40
    %p42 = scmp.ne.s32.totalorder %s31, %s32
    %p43 = scmp.eq.s32.totalorder %s23, 0
    %p44 = por %p42, %p43
    %p45 = scmp.ne.s32.totalorder %s31, %s32
    %p46 = scmp.eq.s32.totalorder %s24, 1
    %p47 = por %p45, %p46
    %p49 = scmp.ne.s32.totalorder %s32, %s48
    %p50 = scmp.eq.s32.totalorder %s24, 0
    %p51 = por %p49, %p50
    %s53 = sadd.s32 %s52, 1
    %p56 = scmp.eq.s32.totalorder %s18, 1
    %p57 = scmp.ne.s32.totalorder %s52, %s54
    %p58 = scmp.eq.s32.totalorder %s18, 0
    %p59 = por %p57, %p58
    %p60 = scmp.ne.s32.totalorder %s52, %s54
    %p61 = scmp.eq.s32.totalorder %s23, 1
    %p62 = por %p60, %p61
    %p63 = scmp.ne.s32.totalorder %s54, %s55
    %p64 = scmp.eq.s32.totalorder %s23, 0
    %p65 = por %p63, %p64
    %p66 = scmp.ne.s32.totalorder %s54, %s55
    %p67 = scmp.eq.s32.totalorder %s24, 1
    %p68 = por %p66, %p67
    %p70 = scmp.ne.s32.totalorder %s55, %s69
    %p71 = scmp.eq.s32.totalorder %s24, 0
    %p72 = por %p70, %p71
    %s74 = sadd.s32 %s73, 1
    %p77 = scmp.eq.s32.totalorder %s18, 1
    %p78 = scmp.ne.s32.totalorder %s73, %s75
    %p79 = scmp.eq.s32.totalorder %s18, 0
    %p80 = por %p78, %p79
    %p81 = scmp.ne.s32.totalorder %s73, %s75
    %p82 = scmp.eq.s32.totalorder %s23, 1
    %p83 = por %p81, %p82
    %p84 = scmp.ne.s32.totalorder %s75, %s76
    %p85 = scmp.eq.s32.totalorder %s23, 0
    %p86 = por %p84, %p85
    %p87 = scmp.ne.s32.totalorder %s75, %s76
    %p88 = scmp.eq.s32.totalorder %s24, 1
    %p89 = por %p87, %p88
    %p91 = scmp.ne.s32.totalorder %s76, %s90
    %p92 = scmp.eq.s32.totalorder %s24, 0
    %p93 = por %p91, %p92
    %s95 = sadd.s32 %s94, 1
    %p98 = scmp.eq.s32.totalorder %s18, 1
    %p99 = scmp.ne.s32.totalorder %s94, %s96
    %p100 = scmp.eq.s32.totalorder %s18, 0
    %p101 = por %p99, %p100
    %p102 = scmp.ne.s32.totalorder %s94, %s96
    %p103 = scmp.eq.s32.totalorder %s23, 1
    %p104 = por %p102, %p103
    %p105 = scmp.ne.s32.totalorder %s96, %s97
    %p106 = scmp.eq.s32.totalorder %s23, 0
    %p107 = por %p105, %p106
    %p108 = scmp.ne.s32.totalorder %s96, %s97
    %p109 = scmp.eq.s32.totalorder %s24, 1
    %p110 = por %p108, %p109
    %p112 = scmp.ne.s32.totalorder %s97, %s111
    %p113 = scmp.eq.s32.totalorder %s24, 0
    %p114 = por %p112, %p113
    %s116 = sadd.s32 %s115, 1
    %p119 = scmp.eq.s32.totalorder %s18, 1
    %p120 = scmp.ne.s32.totalorder %s115, %s117
    %p121 = scmp.eq.s32.totalorder %s18, 0
    %p122 = por %p120, %p121
    %p123 = scmp.ne.s32.totalorder %s115, %s117
    %p124 = scmp.eq.s32.totalorder %s23, 1
    %p125 = por %p123, %p124
    %p126 = scmp.ne.s32.totalorder %s117, %s118
    %p127 = scmp.eq.s32.totalorder %s23, 0
    %p128 = por %p126, %p127
    %p129 = scmp.ne.s32.totalorder %s117, %s118
    %p130 = scmp.eq.s32.totalorder %s24, 1
    %p131 = por %p129, %p130
    %p133 = scmp.ne.s32.totalorder %s118, %s132
    %p134 = scmp.eq.s32.totalorder %s24, 0
    %p135 = por %p133, %p134
    %s137 = sadd.s32 %s136, 1
    %p140 = scmp.eq.s32.totalorder %s18, 1
    %p141 = scmp.ne.s32.totalorder %s136, %s138
    %p142 = scmp.eq.s32.totalorder %s18, 0
    %p143 = por %p141, %p142
    %p144 = scmp.ne.s32.totalorder %s136, %s138
    %p145 = scmp.eq.s32.totalorder %s23, 1
    %p146 = por %p144, %p145
    %p147 = scmp.ne.s32.totalorder %s138, %s139
    %p148 = scmp.eq.s32.totalorder %s23, 0
    %p149 = por %p147, %p148
    %p150 = scmp.ne.s32.totalorder %s138, %s139
    %p151 = scmp.eq.s32.totalorder %s24, 1
    %p152 = por %p150, %p151
    %p154 = scmp.ne.s32.totalorder %s139, %s153
    %p155 = scmp.eq.s32.totalorder %s24, 0
    %p156 = por %p154, %p155
    %s158 = sadd.s32 %s157, 1
    %p161 = scmp.eq.s32.totalorder %s18, 1
    %p162 = scmp.ne.s32.totalorder %s157, %s159
    %p163 = scmp.eq.s32.totalorder %s18, 0
    %p164 = por %p162, %p163
    %p165 = scmp.ne.s32.totalorder %s157, %s159
    %p166 = scmp.eq.s32.totalorder %s23, 1
    %p167 = por %p165, %p166
    %p168 = scmp.ne.s32.totalorder %s159, %s160
    %p169 = scmp.eq.s32.totalorder %s23, 0
    %p170 = por %p168, %p169
    %p171 = scmp.ne.s32.totalorder %s159, %s160
    %p172 = scmp.eq.s32.totalorder %s24, 1
    %p173 = por %p171, %p172
    %p175 = scmp.ne.s32.totalorder %s160, %s174
    %p176 = scmp.eq.s32.totalorder %s24, 0
    %p177 = por %p175, %p176
    %s179 = sadd.s32 %s178, 1
    %p182 = scmp.eq.s32.totalorder %s18, 1
    %p183 = scmp.ne.s32.totalorder %s178, %s180
    %p184 = scmp.eq.s32.totalorder %s18, 0
    %p185 = por %p183, %p184
    %p186 = scmp.ne.s32.totalorder %s178, %s180
    %p187 = scmp.eq.s32.totalorder %s23, 1
    %p188 = por %p186, %p187
    %p189 = scmp.ne.s32.totalorder %s180, %s181
    %p190 = scmp.eq.s32.totalorder %s23, 0
    %p191 = por %p189, %p190
    %p192 = scmp.ne.s32.totalorder %s180, %s181
    %p193 = scmp.eq.s32.totalorder %s24, 1
    %p194 = por %p192, %p193
    %p196 = scmp.ne.s32.totalorder %s181, %s195
    %p197 = scmp.eq.s32.totalorder %s24, 0
    %p198 = por %p196, %p197
    %s200 = sadd.s32 %s199, 1
    %p203 = scmp.eq.s32.totalorder %s18, 1
    %p204 = scmp.ne.s32.totalorder %s199, %s201
    %p205 = scmp.eq.s32.totalorder %s18, 0
    %p206 = por %p204, %p205
    %p207 = scmp.ne.s32.totalorder %s199, %s201
    %p208 = scmp.eq.s32.totalorder %s23, 1
    %p209 = por %p207, %p208
    %p210 = scmp.ne.s32.totalorder %s201, %s202
    %p211 = scmp.eq.s32.totalorder %s23, 0
    %p212 = por %p210, %p211
    %p213 = scmp.ne.s32.totalorder %s201, %s202
    %p214 = scmp.eq.s32.totalorder %s24, 1
    %p215 = por %p213, %p214
    %p217 = scmp.ne.s32.totalorder %s202, %s216
    %p218 = scmp.eq.s32.totalorder %s24, 0
    %p219 = por %p217, %p218
    %s221 = sadd.s32 %s220, 1
    %p224 = scmp.eq.s32.totalorder %s18, 1
    %p225 = scmp.ne.s32.totalorder %s220, %s222
    %p226 = scmp.eq.s32.totalorder %s18, 0
    %p227 = por %p225, %p226
    %p228 = scmp.ne.s32.totalorder %s220, %s222
    %p229 = scmp.eq.s32.totalorder %s23, 1
    %p230 = por %p228, %p229
    %p231 = scmp.ne.s32.totalorder %s222, %s223
    %p232 = scmp.eq.s32.totalorder %s23, 0
    %p233 = por %p231, %p232
    %p234 = scmp.ne.s32.totalorder %s222, %s223
    %p235 = scmp.eq.s32.totalorder %s24, 1
    %p236 = por %p234, %p235
    %p238 = scmp.ne.s32.totalorder %s223, %s237
    %p239 = scmp.eq.s32.totalorder %s24, 0
    %p240 = por %p238, %p239
    %s242 = sadd.s32 %s241, 1
    %p245 = scmp.eq.s32.totalorder %s18, 1
    %p246 = scmp.ne.s32.totalorder %s241, %s243
    %p247 = scmp.eq.s32.totalorder %s18, 0
    %p248 = por %p246, %p247
    %p249 = scmp.ne.s32.totalorder %s241, %s243
    %p250 = scmp.eq.s32.totalorder %s23, 1
    %p251 = por %p249, %p250
    %p252 = scmp.ne.s32.totalorder %s243, %s244
    %p253 = scmp.eq.s32.totalorder %s23, 0
    %p254 = por %p252, %p253
    %p255 = scmp.ne.s32.totalorder %s243, %s244
    %p256 = scmp.eq.s32.totalorder %s24, 1
    %p257 = por %p255, %p256
    %p259 = scmp.ne.s32.totalorder %s244, %s258
    %p260 = scmp.eq.s32.totalorder %s24, 0
    %p261 = por %p259, %p260
    %s263 = sadd.s32 %s262, 1
    %p266 = scmp.eq.s32.totalorder %s18, 1
    %p267 = scmp.ne.s32.totalorder %s262, %s264
    %p268 = scmp.eq.s32.totalorder %s18, 0
    %p269 = por %p267, %p268
    %p270 = scmp.ne.s32.totalorder %s262, %s264
    %p271 = scmp.eq.s32.totalorder %s23, 1
    %p272 = por %p270, %p271
    %p273 = scmp.ne.s32.totalorder %s264, %s265
    %p274 = scmp.eq.s32.totalorder %s23, 0
    %p275 = por %p273, %p274
    %p276 = scmp.ne.s32.totalorder %s264, %s265
    %p277 = scmp.eq.s32.totalorder %s24, 1
    %p278 = por %p276, %p277
    %p280 = scmp.ne.s32.totalorder %s265, %s279
    %p281 = scmp.eq.s32.totalorder %s24, 0
    %p282 = por %p280, %p281
    %s283 = ssub.s32 %s18, %s25
    %p284 = scmp.eq.s32.totalorder %s283, 0
    %s286 = sadd.s32 %s285, 1
    %s287 = scalar_select %p284, %s285, %s286
    %p290 = pneg %p284
    %p291 = scmp.eq.s32.totalorder %s18, 1
    %p292 = por %p290, %p291
    %p293 = scmp.ne.s32.totalorder %s285, %s288
    %p294 = scmp.eq.s32.totalorder %s18, 0
    %p295 = por %p293, %p294
    %p296 = scmp.ne.s32.totalorder %s285, %s288
    %p297 = scmp.eq.s32.totalorder %s23, 1
    %p298 = por %p296, %p297
    %p299 = scmp.ne.s32.totalorder %s288, %s289
    %p300 = scmp.eq.s32.totalorder %s23, 0
    %p301 = por %p299, %p300
    %p302 = scmp.ne.s32.totalorder %s288, %s289
    %p303 = scmp.eq.s32.totalorder %s24, 1
    %p304 = por %p302, %p303
    %p306 = scmp.ne.s32.totalorder %s289, %s305
    %p307 = scmp.eq.s32.totalorder %s24, 0
    %p308 = por %p306, %p307
    %p309 = scmp.le.s32.totalorder 1, %s18
    %p310 = scmp.lt.s32.totalorder %s18, 3
    %p311 = pnand %p309, %p310
    %p312 = pneg %p311
    // Predicated region
    $region9: #{bottleneck_forward.1} parent=5 // pred_check
      _
    $region10: #{bottleneck_forward.1} parent=5 // pred_check_branch
      %314 = sbr.rel (%p311) target = $region12
    $region11: #{bottleneck_forward.1} parent=5 // pred_region
      %s315 = ssub.s32 %s18, 1
      // Predicated region
      $region13: #{bottleneck_forward.1} parent=11 // pred_check
        %p316 = pneg %p65
      $region14: #{bottleneck_forward.1} parent=11 // pred_check_branch
        %318 = sbr.rel (%p316) target = $region16
      $region15: #{bottleneck_forward.1} parent=11 // pred_region
        _
      $region16: #{bottleneck_forward.1} parent=11 // pred_fallthru
        _
      // Predicated region
      $region17: #{bottleneck_forward.1} parent=11 // pred_check
        %p319 = pneg %p86
      $region18: #{bottleneck_forward.1} parent=11 // pred_check_branch
        %321 = sbr.rel (%p319) target = $region20
      $region19: #{bottleneck_forward.1} parent=11 // pred_region
        _
      $region20: #{bottleneck_forward.1} parent=11 // pred_fallthru
        _
      // Predicated region
      $region21: #{bottleneck_forward.1} parent=11 // pred_check
        %p322 = pneg %p107
      $region22: #{bottleneck_forward.1} parent=11 // pred_check_branch
        %324 = sbr.rel (%p322) target = $region24
      $region23: #{bottleneck_forward.1} parent=11 // pred_region
        _
      $region24: #{bottleneck_forward.1} parent=11 // pred_fallthru
        _
      // Predicated region
      $region25: #{bottleneck_forward.1} parent=11 // pred_check
        %p325 = pneg %p128
      $region26: #{bottleneck_forward.1} parent=11 // pred_check_branch
        %327 = sbr.rel (%p325) target = $region28
      $region27: #{bottleneck_forward.1} parent=11 // pred_region
        _
      $region28: #{bottleneck_forward.1} parent=11 // pred_fallthru
        _
      // Predicated region
      $region29: #{bottleneck_forward.1} parent=11 // pred_check
        %p328 = pneg %p149
      $region30: #{bottleneck_forward.1} parent=11 // pred_check_branch
        %330 = sbr.rel (%p328) target = $region32
      $region31: #{bottleneck_forward.1} parent=11 // pred_region
        _
      $region32: #{bottleneck_forward.1} parent=11 // pred_fallthru
        _
      // Predicated region
      $region33: #{bottleneck_forward.1} parent=11 // pred_check
        %p331 = pneg %p170
      $region34: #{bottleneck_forward.1} parent=11 // pred_check_branch
        %333 = sbr.rel (%p331) target = $region36
      $region35: #{bottleneck_forward.1} parent=11 // pred_region
        _
      $region36: #{bottleneck_forward.1} parent=11 // pred_fallthru
        _
      // Predicated region
      $region37: #{bottleneck_forward.1} parent=11 // pred_check
        %p334 = pneg %p191
      $region38: #{bottleneck_forward.1} parent=11 // pred_check_branch
        %336 = sbr.rel (%p334) target = $region40
      $region39: #{bottleneck_forward.1} parent=11 // pred_region
        _
      $region40: #{bottleneck_forward.1} parent=11 // pred_fallthru
        _
      // Predicated region
      $region41: #{bottleneck_forward.1} parent=11 // pred_check
        %p337 = pneg %p212
      $region42: #{bottleneck_forward.1} parent=11 // pred_check_branch
        %339 = sbr.rel (%p337) target = $region44
      $region43: #{bottleneck_forward.1} parent=11 // pred_region
        _
      $region44: #{bottleneck_forward.1} parent=11 // pred_fallthru
        _
      // Predicated region
      $region45: #{bottleneck_forward.1} parent=11 // pred_check
        %p340 = pneg %p233
      $region46: #{bottleneck_forward.1} parent=11 // pred_check_branch
        %342 = sbr.rel (%p340) target = $region48
      $region47: #{bottleneck_forward.1} parent=11 // pred_region
        _
      $region48: #{bottleneck_forward.1} parent=11 // pred_fallthru
        _
      // Predicated region
      $region49: #{bottleneck_forward.1} parent=11 // pred_check
        %p343 = pneg %p254
      $region50: #{bottleneck_forward.1} parent=11 // pred_check_branch
        %345 = sbr.rel (%p343) target = $region52
      $region51: #{bottleneck_forward.1} parent=11 // pred_region
        _
      $region52: #{bottleneck_forward.1} parent=11 // pred_fallthru
        _
      // Predicated region
      $region53: #{bottleneck_forward.1} parent=11 // pred_check
        %p346 = pneg %p275
      $region54: #{bottleneck_forward.1} parent=11 // pred_check_branch
        %348 = sbr.rel (%p346) target = $region56
      $region55: #{bottleneck_forward.1} parent=11 // pred_region
        _
      $region56: #{bottleneck_forward.1} parent=11 // pred_fallthru
        _
    $region12: #{bottleneck_forward.1} parent=5 // pred_fallthru
      _
    %p349 = scmp.lt.s32.totalorder %s18, 2
    // Predicated region
    $region57: #{bottleneck_forward.1} parent=5 // pred_check
      %p350 = pneg %p349
    $region58: #{bottleneck_forward.1} parent=5 // pred_check_branch
      %352 = sbr.rel (%p350) target = $region60
    $region59: #{bottleneck_forward.1} parent=5 // pred_region
      // Predicated region
      $region61: #{bottleneck_forward.1} parent=59 // pred_check
        %p353 = pneg %p38
      $region62: #{bottleneck_forward.1} parent=59 // pred_check_branch
        %355 = sbr.rel (%p353) target = $region64
      $region63: #{bottleneck_forward.1} parent=59 // pred_region
        %p356 = scmp.lt.s32.totalorder %s18, 1
        %s357 = scalar_select %p356, %s18, 1
        %s358 = smul.addr %s357, 32
        %s359 = smul.addr %s358, 4
        %s360 = scalar_lea.vmem %s0, %s359
      $region64: #{bottleneck_forward.1} parent=59 // pred_fallthru
        _
    $region60: #{bottleneck_forward.1} parent=5 // pred_fallthru
      _
    %p361 = scmp.le.s32.totalorder 1, %s18
    %p362 = scmp.lt.s32.totalorder %s18, 3
    %p363 = pnand %p361, %p362
    %p364 = pneg %p363
    // Predicated region
    $region65: #{bottleneck_forward.1} parent=5 // pred_check
      _
    $region66: #{bottleneck_forward.1} parent=5 // pred_check_branch
      %366 = sbr.rel (%p363) target = $region68
    $region67: #{bottleneck_forward.1} parent=5 // pred_region
      %s367 = ssub.s32 %s18, 1
      %p368 = scmp.lt.s32.totalorder %s23, 1
      %s369 = scalar_select %p368, %s23, 1
      %s370 = smul.addr %s369, 32
      %s371 = smul.addr %s370, 4
      %s372 = scalar_lea.vmem %s0, %s371
      %p373 = pneg %p44
      %p374 = pneg %p41
      %p375 = pneg %p65
      %p376 = pneg %p62
      %p377 = pneg %p86
      %p378 = pneg %p83
      %p379 = pneg %p107
      %p380 = pneg %p104
      %p381 = pneg %p128
      %p382 = pneg %p125
      %p383 = pneg %p149
      %p384 = pneg %p146
      %p385 = pneg %p170
      %p386 = pneg %p167
      %p387 = pneg %p191
      %p388 = pneg %p188
      %p389 = pneg %p212
      %p390 = pneg %p209
      %p391 = pneg %p233
      %p392 = pneg %p230
      %p393 = pneg %p254
      %p394 = pneg %p251
      %p395 = pneg %p275
      %p396 = pneg %p272
      %p397 = pneg %p301
      %p398 = pneg %p298
      %p399 = scmp.lt.s32.totalorder %s23, 1
      %s400 = scalar_select %p399, %s23, 1
      %s401 = smul.addr %s400, 32
      %s402 = smul.addr %s401, 8
      %s403 = scalar_lea.vmem %s12, %s402
      %p404 = scmp.lt.s32.totalorder %s23, 1
      %s405 = scalar_select %p404, %s23, 1
      %s406 = smul.addr %s405, 32
      %s407 = smul.addr %s406, 4
      %s408 = scalar_lea.vmem %s0, %s407
      %p409 = scmp.lt.s32.totalorder %s23, 1
      %s410 = scalar_select %p409, %s23, 1
      %s411 = smul.addr %s410, 32
      %s412 = smul.addr %s411, 8
      %s413 = scalar_lea.vmem %s12, %s412
      %v414 = vld [vmem:[%s408] sm:$0xf]
      %v415 = vld [vmem:[%s408 + $0x4] sm:$0xf]
      %v416 = vld [vmem:[%s408 + $0x8] sm:$0xf]
      %v417 = vld [vmem:[%s408 + $0xc] sm:$0xf]
      %v418 = vld [vmem:[%s408 + $0x10] sm:$0xf]
      %v419 = vld [vmem:[%s408 + $0x14] sm:$0xf]
      %v420 = vld [vmem:[%s408 + $0x18] sm:$0xf]
      %v421 = vld [vmem:[%s408 + $0x1c] sm:$0xf]
      %v422 = vld [vmem:[%s408 + $0x20] sm:$0xf]
      %v423 = vld [vmem:[%s408 + $0x24] sm:$0xf]
      %v424 = vld [vmem:[%s408 + $0x28] sm:$0xf]
      %v425 = vld [vmem:[%s408 + $0x2c] sm:$0xf]
      %v426 = vld [vmem:[%s408 + $0x30] sm:$0xf]
      %v427 = vld [vmem:[%s408 + $0x34] sm:$0xf]
      %v428 = vld [vmem:[%s408 + $0x38] sm:$0xf]
      %v429 = vld [vmem:[%s408 + $0x3c] sm:$0xf]
      %v430 = vld [vmem:[%s408 + $0x40] sm:$0xf]
      %v431 = vld [vmem:[%s408 + $0x44] sm:$0xf]
      %v432 = vld [vmem:[%s408 + $0x48] sm:$0xf]
      %v433 = vld [vmem:[%s408 + $0x4c] sm:$0xf]
      %v434 = vld [vmem:[%s408 + $0x50] sm:$0xf]
      %v435 = vld [vmem:[%s408 + $0x54] sm:$0xf]
      %v436 = vld [vmem:[%s408 + $0x58] sm:$0xf]
      %v437 = vld [vmem:[%s408 + $0x5c] sm:$0xf]
      %v438 = vld [vmem:[%s408 + $0x60] sm:$0xf]
      %v439 = vld [vmem:[%s408 + $0x64] sm:$0xf]
      %v440 = vld [vmem:[%s408 + $0x68] sm:$0xf]
      %v441 = vld [vmem:[%s408 + $0x6c] sm:$0xf]
      %v442 = vld [vmem:[%s408 + $0x70] sm:$0xf]
      %v443 = vld [vmem:[%s408 + $0x74] sm:$0xf]
      %v444 = vld [vmem:[%s408 + $0x78] sm:$0xf]
      %v445 = vld [vmem:[%s408 + $0x7c] sm:$0xf]
      %v446 = vunpack.c.l.bf16 %v414
      %v447 = vunpack.c.l.bf16 %v415
      %v448 = vunpack.c.l.bf16 %v416
      %v449 = vunpack.c.l.bf16 %v417
      %v450 = vunpack.c.l.bf16 %v418
      %v451 = vunpack.c.l.bf16 %v419
      %v452 = vunpack.c.l.bf16 %v420
      %v453 = vunpack.c.l.bf16 %v421
      %v454 = vunpack.c.l.bf16 %v422
      %v455 = vunpack.c.l.bf16 %v423
      %v456 = vunpack.c.l.bf16 %v424
      %v457 = vunpack.c.l.bf16 %v425
      %v458 = vunpack.c.l.bf16 %v426
      %v459 = vunpack.c.l.bf16 %v427
      %v460 = vunpack.c.l.bf16 %v428
      %v461 = vunpack.c.l.bf16 %v429
      %v462 = vunpack.c.l.bf16 %v430
      %v463 = vunpack.c.l.bf16 %v431
      %v464 = vunpack.c.l.bf16 %v432
      %v465 = vunpack.c.l.bf16 %v433
      %v466 = vunpack.c.l.bf16 %v434
      %v467 = vunpack.c.l.bf16 %v435
      %v468 = vunpack.c.l.bf16 %v436
      %v469 = vunpack.c.l.bf16 %v437
      %v470 = vunpack.c.l.bf16 %v438
      %v471 = vunpack.c.l.bf16 %v439
      %v472 = vunpack.c.l.bf16 %v440
      %v473 = vunpack.c.l.bf16 %v441
      %v474 = vunpack.c.l.bf16 %v442
      %v475 = vunpack.c.l.bf16 %v443
      %v476 = vunpack.c.l.bf16 %v444
      %v477 = vunpack.c.l.bf16 %v445
      %v478 = vld [vmem:[%s1] sm:$0x3]
      %v479 = vunpack.c.l.bf16 %v478
      %481 = vset.pattern.permute.xlu0 0
      %482 = vperm.xlu0 %481, %v446
      %v483 = vpop.permute.xlu0 %482
      %486 = vset.pattern.permute.xlu0 0
      %487 = vperm.xlu0 %486, %v447
      %v488 = vpop.permute.xlu0 %487
      %491 = vset.pattern.permute.xlu0 0
      %492 = vperm.xlu0 %491, %v448
      %v493 = vpop.permute.xlu0 %492
      %496 = vset.pattern.permute.xlu0 0
      %497 = vperm.xlu0 %496, %v449
      %v498 = vpop.permute.xlu0 %497
      %501 = vset.pattern.permute.xlu0 0
      %502 = vperm.xlu0 %501, %v450
      %v503 = vpop.permute.xlu0 %502
      %506 = vset.pattern.permute.xlu0 0
      %507 = vperm.xlu0 %506, %v451
      %v508 = vpop.permute.xlu0 %507
      %511 = vset.pattern.permute.xlu0 0
      %512 = vperm.xlu0 %511, %v452
      %v513 = vpop.permute.xlu0 %512
      %516 = vset.pattern.permute.xlu0 0
      %517 = vperm.xlu0 %516, %v453
      %v518 = vpop.permute.xlu0 %517
      %521 = vset.pattern.permute.xlu0 0
      %522 = vperm.xlu0 %521, %v454
      %v523 = vpop.permute.xlu0 %522
      %526 = vset.pattern.permute.xlu0 0
      %527 = vperm.xlu0 %526, %v455
      %v528 = vpop.permute.xlu0 %527
      %531 = vset.pattern.permute.xlu0 0
      %532 = vperm.xlu0 %531, %v456
      %v533 = vpop.permute.xlu0 %532
      %536 = vset.pattern.permute.xlu0 0
      %537 = vperm.xlu0 %536, %v457
      %v538 = vpop.permute.xlu0 %537
      %541 = vset.pattern.permute.xlu0 0
      %542 = vperm.xlu0 %541, %v458
      %v543 = vpop.permute.xlu0 %542
      %546 = vset.pattern.permute.xlu0 0
      %547 = vperm.xlu0 %546, %v459
      %v548 = vpop.permute.xlu0 %547
      %551 = vset.pattern.permute.xlu0 0
      %552 = vperm.xlu0 %551, %v460
      %v553 = vpop.permute.xlu0 %552
      %556 = vset.pattern.permute.xlu0 0
      %557 = vperm.xlu0 %556, %v461
      %v558 = vpop.permute.xlu0 %557
      %561 = vset.pattern.permute.xlu0 0
      %562 = vperm.xlu0 %561, %v462
      %v563 = vpop.permute.xlu0 %562
      %566 = vset.pattern.permute.xlu0 0
      %567 = vperm.xlu0 %566, %v463
      %v568 = vpop.permute.xlu0 %567
      %571 = vset.pattern.permute.xlu0 0
      %572 = vperm.xlu0 %571, %v464
      %v573 = vpop.permute.xlu0 %572
      %576 = vset.pattern.permute.xlu0 0
      %577 = vperm.xlu0 %576, %v465
      %v578 = vpop.permute.xlu0 %577
      %581 = vset.pattern.permute.xlu0 0
      %582 = vperm.xlu0 %581, %v466
      %v583 = vpop.permute.xlu0 %582
      %586 = vset.pattern.permute.xlu0 0
      %587 = vperm.xlu0 %586, %v467
      %v588 = vpop.permute.xlu0 %587
      %591 = vset.pattern.permute.xlu0 0
      %592 = vperm.xlu0 %591, %v468
      %v593 = vpop.permute.xlu0 %592
      %596 = vset.pattern.permute.xlu0 0
      %597 = vperm.xlu0 %596, %v469
      %v598 = vpop.permute.xlu0 %597
      %601 = vset.pattern.permute.xlu0 0
      %602 = vperm.xlu0 %601, %v470
      %v603 = vpop.permute.xlu0 %602
      %606 = vset.pattern.permute.xlu0 0
      %607 = vperm.xlu0 %606, %v471
      %v608 = vpop.permute.xlu0 %607
      %611 = vset.pattern.permute.xlu0 0
      %612 = vperm.xlu0 %611, %v472
      %v613 = vpop.permute.xlu0 %612
      %616 = vset.pattern.permute.xlu0 0
      %617 = vperm.xlu0 %616, %v473
      %v618 = vpop.permute.xlu0 %617
      %621 = vset.pattern.permute.xlu0 0
      %622 = vperm.xlu0 %621, %v474
      %v623 = vpop.permute.xlu0 %622
      %626 = vset.pattern.permute.xlu0 0
      %627 = vperm.xlu0 %626, %v475
      %v628 = vpop.permute.xlu0 %627
      %631 = vset.pattern.permute.xlu0 0
      %632 = vperm.xlu0 %631, %v476
      %v633 = vpop.permute.xlu0 %632
      %636 = vset.pattern.permute.xlu0 0
      %637 = vperm.xlu0 %636, %v477
      %v638 = vpop.permute.xlu0 %637
      %v640 = vlaneseq
      %v641 = vshrl.u32 %v640, 7
      %v642 = vsub.s32 0, %v641
      %v643 = vrot.slane %v479, %v642
      %v644 = vmul.f32 %v483, %v643
      %v645 = vmul.f32 %v488, %v643
      %v646 = vmul.f32 %v493, %v643
      %v647 = vmul.f32 %v498, %v643
      %v648 = vmul.f32 %v503, %v643
      %v649 = vmul.f32 %v508, %v643
      %v650 = vmul.f32 %v513, %v643
      %v651 = vmul.f32 %v518, %v643
      %v652 = vmul.f32 %v523, %v643
      %v653 = vmul.f32 %v528, %v643
      %v654 = vmul.f32 %v533, %v643
      %v655 = vmul.f32 %v538, %v643
      %v656 = vmul.f32 %v543, %v643
      %v657 = vmul.f32 %v548, %v643
      %v658 = vmul.f32 %v553, %v643
      %v659 = vmul.f32 %v558, %v643
      %v660 = vmul.f32 %v563, %v643
      %v661 = vmul.f32 %v568, %v643
      %v662 = vmul.f32 %v573, %v643
      %v663 = vmul.f32 %v578, %v643
      %v664 = vmul.f32 %v583, %v643
      %v665 = vmul.f32 %v588, %v643
      %v666 = vmul.f32 %v593, %v643
      %v667 = vmul.f32 %v598, %v643
      %v668 = vmul.f32 %v603, %v643
      %v669 = vmul.f32 %v608, %v643
      %v670 = vmul.f32 %v613, %v643
      %v671 = vmul.f32 %v618, %v643
      %v672 = vmul.f32 %v623, %v643
      %v673 = vmul.f32 %v628, %v643
      %v674 = vmul.f32 %v633, %v643
      %v675 = vmul.f32 %v638, %v643
      %676 = vset.pattern.permute.xlu0 1
      %677 = vperm.xlu0 %676, %v446
      %v678 = vpop.permute.xlu0 %677
      %680 = vset.pattern.permute.xlu0 1
      %681 = vperm.xlu0 %680, %v447
      %v682 = vpop.permute.xlu0 %681
      %684 = vset.pattern.permute.xlu0 1
      %685 = vperm.xlu0 %684, %v448
      %v686 = vpop.permute.xlu0 %685
      %688 = vset.pattern.permute.xlu0 1
      %689 = vperm.xlu0 %688, %v449
      %v690 = vpop.permute.xlu0 %689
      %692 = vset.pattern.permute.xlu0 1
      %693 = vperm.xlu0 %692, %v450
      %v694 = vpop.permute.xlu0 %693
      %696 = vset.pattern.permute.xlu0 1
      %697 = vperm.xlu0 %696, %v451
      %v698 = vpop.permute.xlu0 %697
      %700 = vset.pattern.permute.xlu0 1
      %701 = vperm.xlu0 %700, %v452
      %v702 = vpop.permute.xlu0 %701
      %704 = vset.pattern.permute.xlu0 1
      %705 = vperm.xlu0 %704, %v453
      %v706 = vpop.permute.xlu0 %705
      %708 = vset.pattern.permute.xlu0 1
      %709 = vperm.xlu0 %708, %v454
      %v710 = vpop.permute.xlu0 %709
      %712 = vset.pattern.permute.xlu0 1
      %713 = vperm.xlu0 %712, %v455
      %v714 = vpop.permute.xlu0 %713
      %716 = vset.pattern.permute.xlu0 1
      %717 = vperm.xlu0 %716, %v456
      %v718 = vpop.permute.xlu0 %717
      %720 = vset.pattern.permute.xlu0 1
      %721 = vperm.xlu0 %720, %v457
      %v722 = vpop.permute.xlu0 %721
      %724 = vset.pattern.permute.xlu0 1
      %725 = vperm.xlu0 %724, %v458
      %v726 = vpop.permute.xlu0 %725
      %728 = vset.pattern.permute.xlu0 1
      %729 = vperm.xlu0 %728, %v459
      %v730 = vpop.permute.xlu0 %729
      %732 = vset.pattern.permute.xlu0 1
      %733 = vperm.xlu0 %732, %v460
      %v734 = vpop.permute.xlu0 %733
      %736 = vset.pattern.permute.xlu0 1
      %737 = vperm.xlu0 %736, %v461
      %v738 = vpop.permute.xlu0 %737
      %740 = vset.pattern.permute.xlu0 1
      %741 = vperm.xlu0 %740, %v462
      %v742 = vpop.permute.xlu0 %741
      %744 = vset.pattern.permute.xlu0 1
      %745 = vperm.xlu0 %744, %v463
      %v746 = vpop.permute.xlu0 %745
      %748 = vset.pattern.permute.xlu0 1
      %749 = vperm.xlu0 %748, %v464
      %v750 = vpop.permute.xlu0 %749
      %752 = vset.pattern.permute.xlu0 1
      %753 = vperm.xlu0 %752, %v465
      %v754 = vpop.permute.xlu0 %753
      %756 = vset.pattern.permute.xlu0 1
      %757 = vperm.xlu0 %756, %v466
      %v758 = vpop.permute.xlu0 %757
      %760 = vset.pattern.permute.xlu0 1
      %761 = vperm.xlu0 %760, %v467
      %v762 = vpop.permute.xlu0 %761
      %764 = vset.pattern.permute.xlu0 1
      %765 = vperm.xlu0 %764, %v468
      %v766 = vpop.permute.xlu0 %765
      %768 = vset.pattern.permute.xlu0 1
      %769 = vperm.xlu0 %768, %v469
      %v770 = vpop.permute.xlu0 %769
      %772 = vset.pattern.permute.xlu0 1
      %773 = vperm.xlu0 %772, %v470
      %v774 = vpop.permute.xlu0 %773
      %776 = vset.pattern.permute.xlu0 1
      %777 = vperm.xlu0 %776, %v471
      %v778 = vpop.permute.xlu0 %777
      %780 = vset.pattern.permute.xlu0 1
      %781 = vperm.xlu0 %780, %v472
      %v782 = vpop.permute.xlu0 %781
      %784 = vset.pattern.permute.xlu0 1
      %785 = vperm.xlu0 %784, %v473
      %v786 = vpop.permute.xlu0 %785
      %788 = vset.pattern.permute.xlu0 1
      %789 = vperm.xlu0 %788, %v474
      %v790 = vpop.permute.xlu0 %789
      %792 = vset.pattern.permute.xlu0 1
      %793 = vperm.xlu0 %792, %v475
      %v794 = vpop.permute.xlu0 %793
      %796 = vset.pattern.permute.xlu0 1
      %797 = vperm.xlu0 %796, %v476
      %v798 = vpop.permute.xlu0 %797
      %800 = vset.pattern.permute.xlu0 1
      %801 = vperm.xlu0 %800, %v477
      %v802 = vpop.permute.xlu0 %801
      %v804 = vlaneseq
      %v805 = vshrl.u32 %v804, 7
      %v806 = vsub.s32 1, %v805
      %v807 = vrot.slane %v479, %v806
      %v808 = vmul.f32 %v678, %v807
      %v809 = vmul.f32 %v682, %v807
      %v810 = vmul.f32 %v686, %v807
      %v811 = vmul.f32 %v690, %v807
      %v812 = vmul.f32 %v694, %v807
      %v813 = vmul.f32 %v698, %v807
      %v814 = vmul.f32 %v702, %v807
      %v815 = vmul.f32 %v706, %v807
      %v816 = vmul.f32 %v710, %v807
      %v817 = vmul.f32 %v714, %v807
      %v818 = vmul.f32 %v718, %v807
      %v819 = vmul.f32 %v722, %v807
      %v820 = vmul.f32 %v726, %v807
      %v821 = vmul.f32 %v730, %v807
      %v822 = vmul.f32 %v734, %v807
      %v823 = vmul.f32 %v738, %v807
      %v824 = vmul.f32 %v742, %v807
      %v825 = vmul.f32 %v746, %v807
      %v826 = vmul.f32 %v750, %v807
      %v827 = vmul.f32 %v754, %v807
      %v828 = vmul.f32 %v758, %v807
      %v829 = vmul.f32 %v762, %v807
      %v830 = vmul.f32 %v766, %v807
      %v831 = vmul.f32 %v770, %v807
      %v832 = vmul.f32 %v774, %v807
      %v833 = vmul.f32 %v778, %v807
      %v834 = vmul.f32 %v782, %v807
      %v835 = vmul.f32 %v786, %v807
      %v836 = vmul.f32 %v790, %v807
      %v837 = vmul.f32 %v794, %v807
      %v838 = vmul.f32 %v798, %v807
      %v839 = vmul.f32 %v802, %v807
      %v840 = vadd.f32 %v644, %v808
      %v841 = vadd.f32 %v645, %v809
      %v842 = vadd.f32 %v646, %v810
      %v843 = vadd.f32 %v647, %v811
      %v844 = vadd.f32 %v648, %v812
      %v845 = vadd.f32 %v649, %v813
      %v846 = vadd.f32 %v650, %v814
      %v847 = vadd.f32 %v651, %v815
      %v848 = vadd.f32 %v652, %v816
      %v849 = vadd.f32 %v653, %v817
      %v850 = vadd.f32 %v654, %v818
      %v851 = vadd.f32 %v655, %v819
      %v852 = vadd.f32 %v656, %v820
      %v853 = vadd.f32 %v657, %v821
      %v854 = vadd.f32 %v658, %v822
      %v855 = vadd.f32 %v659, %v823
      %v856 = vadd.f32 %v660, %v824
      %v857 = vadd.f32 %v661, %v825
      %v858 = vadd.f32 %v662, %v826
      %v859 = vadd.f32 %v663, %v827
      %v860 = vadd.f32 %v664, %v828
      %v861 = vadd.f32 %v665, %v829
      %v862 = vadd.f32 %v666, %v830
      %v863 = vadd.f32 %v667, %v831
      %v864 = vadd.f32 %v668, %v832
      %v865 = vadd.f32 %v669, %v833
      %v866 = vadd.f32 %v670, %v834
      %v867 = vadd.f32 %v671, %v835
      %v868 = vadd.f32 %v672, %v836
      %v869 = vadd.f32 %v673, %v837
      %v870 = vadd.f32 %v674, %v838
      %v871 = vadd.f32 %v675, %v839
      %872 = vset.pattern.permute.xlu0 2
      %873 = vperm.xlu0 %872, %v446
      %v874 = vpop.permute.xlu0 %873
      %876 = vset.pattern.permute.xlu0 2
      %877 = vperm.xlu0 %876, %v447
      %v878 = vpop.permute.xlu0 %877
      %880 = vset.pattern.permute.xlu0 2
      %881 = vperm.xlu0 %880, %v448
      %v882 = vpop.permute.xlu0 %881
      %884 = vset.pattern.permute.xlu0 2
      %885 = vperm.xlu0 %884, %v449
      %v886 = vpop.permute.xlu0 %885
      %888 = vset.pattern.permute.xlu0 2
      %889 = vperm.xlu0 %888, %v450
      %v890 = vpop.permute.xlu0 %889
      %892 = vset.pattern.permute.xlu0 2
      %893 = vperm.xlu0 %892, %v451
      %v894 = vpop.permute.xlu0 %893
      %896 = vset.pattern.permute.xlu0 2
      %897 = vperm.xlu0 %896, %v452
      %v898 = vpop.permute.xlu0 %897
      %900 = vset.pattern.permute.xlu0 2
      %901 = vperm.xlu0 %900, %v453
      %v902 = vpop.permute.xlu0 %901
      %904 = vset.pattern.permute.xlu0 2
      %905 = vperm.xlu0 %904, %v454
      %v906 = vpop.permute.xlu0 %905
      %908 = vset.pattern.permute.xlu0 2
      %909 = vperm.xlu0 %908, %v455
      %v910 = vpop.permute.xlu0 %909
      %912 = vset.pattern.permute.xlu0 2
      %913 = vperm.xlu0 %912, %v456
      %v914 = vpop.permute.xlu0 %913
      %916 = vset.pattern.permute.xlu0 2
      %917 = vperm.xlu0 %916, %v457
      %v918 = vpop.permute.xlu0 %917
      %920 = vset.pattern.permute.xlu0 2
      %921 = vperm.xlu0 %920, %v458
      %v922 = vpop.permute.xlu0 %921
      %924 = vset.pattern.permute.xlu0 2
      %925 = vperm.xlu0 %924, %v459
      %v926 = vpop.permute.xlu0 %925
      %928 = vset.pattern.permute.xlu0 2
      %929 = vperm.xlu0 %928, %v460
      %v930 = vpop.permute.xlu0 %929
      %932 = vset.pattern.permute.xlu0 2
      %933 = vperm.xlu0 %932, %v461
      %v934 = vpop.permute.xlu0 %933
      %936 = vset.pattern.permute.xlu0 2
      %937 = vperm.xlu0 %936, %v462
      %v938 = vpop.permute.xlu0 %937
      %940 = vset.pattern.permute.xlu0 2
      %941 = vperm.xlu0 %940, %v463
      %v942 = vpop.permute.xlu0 %941
      %944 = vset.pattern.permute.xlu0 2
      %945 = vperm.xlu0 %944, %v464
      %v946 = vpop.permute.xlu0 %945
      %948 = vset.pattern.permute.xlu0 2
      %949 = vperm.xlu0 %948, %v465
      %v950 = vpop.permute.xlu0 %949
      %952 = vset.pattern.permute.xlu0 2
      %953 = vperm.xlu0 %952, %v466
      %v954 = vpop.permute.xlu0 %953
      %956 = vset.pattern.permute.xlu0 2
      %957 = vperm.xlu0 %956, %v467
      %v958 = vpop.permute.xlu0 %957
      %960 = vset.pattern.permute.xlu0 2
      %961 = vperm.xlu0 %960, %v468
      %v962 = vpop.permute.xlu0 %961
      %964 = vset.pattern.permute.xlu0 2
      %965 = vperm.xlu0 %964, %v469
      %v966 = vpop.permute.xlu0 %965
      %968 = vset.pattern.permute.xlu0 2
      %969 = vperm.xlu0 %968, %v470
      %v970 = vpop.permute.xlu0 %969
      %972 = vset.pattern.permute.xlu0 2
      %973 = vperm.xlu0 %972, %v471
      %v974 = vpop.permute.xlu0 %973
      %976 = vset.pattern.permute.xlu0 2
      %977 = vperm.xlu0 %976, %v472
      %v978 = vpop.permute.xlu0 %977
      %980 = vset.pattern.permute.xlu0 2
      %981 = vperm.xlu0 %980, %v473
      %v982 = vpop.permute.xlu0 %981
      %984 = vset.pattern.permute.xlu0 2
      %985 = vperm.xlu0 %984, %v474
      %v986 = vpop.permute.xlu0 %985
      %988 = vset.pattern.permute.xlu0 2
      %989 = vperm.xlu0 %988, %v475
      %v990 = vpop.permute.xlu0 %989
      %992 = vset.pattern.permute.xlu0 2
      %993 = vperm.xlu0 %992, %v476
      %v994 = vpop.permute.xlu0 %993
      %996 = vset.pattern.permute.xlu0 2
      %997 = vperm.xlu0 %996, %v477
      %v998 = vpop.permute.xlu0 %997
      %v1000 = vlaneseq
      %v1001 = vshrl.u32 %v1000, 7
      %v1002 = vsub.s32 2, %v1001
      %v1003 = vrot.slane %v479, %v1002
      %v1004 = vmul.f32 %v874, %v1003
      %v1005 = vmul.f32 %v878, %v1003
      %v1006 = vmul.f32 %v882, %v1003
      %v1007 = vmul.f32 %v886, %v1003
      %v1008 = vmul.f32 %v890, %v1003
      %v1009 = vmul.f32 %v894, %v1003
      %v1010 = vmul.f32 %v898, %v1003
      %v1011 = vmul.f32 %v902, %v1003
      %v1012 = vmul.f32 %v906, %v1003
      %v1013 = vmul.f32 %v910, %v1003
      %v1014 = vmul.f32 %v914, %v1003
      %v1015 = vmul.f32 %v918, %v1003
      %v1016 = vmul.f32 %v922, %v1003
      %v1017 = vmul.f32 %v926, %v1003
      %v1018 = vmul.f32 %v930, %v1003
      %v1019 = vmul.f32 %v934, %v1003
      %v1020 = vmul.f32 %v938, %v1003
      %v1021 = vmul.f32 %v942, %v1003
      %v1022 = vmul.f32 %v946, %v1003
      %v1023 = vmul.f32 %v950, %v1003
      %v1024 = vmul.f32 %v954, %v1003
      %v1025 = vmul.f32 %v958, %v1003
      %v1026 = vmul.f32 %v962, %v1003
      %v1027 = vmul.f32 %v966, %v1003
      %v1028 = vmul.f32 %v970, %v1003
      %v1029 = vmul.f32 %v974, %v1003
      %v1030 = vmul.f32 %v978, %v1003
      %v1031 = vmul.f32 %v982, %v1003
      %v1032 = vmul.f32 %v986, %v1003
      %v1033 = vmul.f32 %v990, %v1003
      %v1034 = vmul.f32 %v994, %v1003
      %v1035 = vmul.f32 %v998, %v1003
      %v1036 = vadd.f32 %v840, %v1004
      %v1037 = vadd.f32 %v841, %v1005
      %v1038 = vadd.f32 %v842, %v1006
      %v1039 = vadd.f32 %v843, %v1007
      %v1040 = vadd.f32 %v844, %v1008
      %v1041 = vadd.f32 %v845, %v1009
      %v1042 = vadd.f32 %v846, %v1010
      %v1043 = vadd.f32 %v847, %v1011
      %v1044 = vadd.f32 %v848, %v1012
      %v1045 = vadd.f32 %v849, %v1013
      %v1046 = vadd.f32 %v850, %v1014
      %v1047 = vadd.f32 %v851, %v1015
      %v1048 = vadd.f32 %v852, %v1016
      %v1049 = vadd.f32 %v853, %v1017
      %v1050 = vadd.f32 %v854, %v1018
      %v1051 = vadd.f32 %v855, %v1019
      %v1052 = vadd.f32 %v856, %v1020
      %v1053 = vadd.f32 %v857, %v1021
      %v1054 = vadd.f32 %v858, %v1022
      %v1055 = vadd.f32 %v859, %v1023
      %v1056 = vadd.f32 %v860, %v1024
      %v1057 = vadd.f32 %v861, %v1025
      %v1058 = vadd.f32 %v862, %v1026
      %v1059 = vadd.f32 %v863, %v1027
      %v1060 = vadd.f32 %v864, %v1028
      %v1061 = vadd.f32 %v865, %v1029
      %v1062 = vadd.f32 %v866, %v1030
      %v1063 = vadd.f32 %v867, %v1031
      %v1064 = vadd.f32 %v868, %v1032
      %v1065 = vadd.f32 %v869, %v1033
      %v1066 = vadd.f32 %v870, %v1034
      %v1067 = vadd.f32 %v871, %v1035
      %1068 = vset.pattern.permute.xlu0 3
      %1069 = vperm.xlu0 %1068, %v446
      %v1070 = vpop.permute.xlu0 %1069
      %1072 = vset.pattern.permute.xlu0 3
      %1073 = vperm.xlu0 %1072, %v447
      %v1074 = vpop.permute.xlu0 %1073
      %1076 = vset.pattern.permute.xlu0 3
      %1077 = vperm.xlu0 %1076, %v448
      %v1078 = vpop.permute.xlu0 %1077
      %1080 = vset.pattern.permute.xlu0 3
      %1081 = vperm.xlu0 %1080, %v449
      %v1082 = vpop.permute.xlu0 %1081
      %1084 = vset.pattern.permute.xlu0 3
      %1085 = vperm.xlu0 %1084, %v450
      %v1086 = vpop.permute.xlu0 %1085
      %1088 = vset.pattern.permute.xlu0 3
      %1089 = vperm.xlu0 %1088, %v451
      %v1090 = vpop.permute.xlu0 %1089
      %1092 = vset.pattern.permute.xlu0 3
      %1093 = vperm.xlu0 %1092, %v452
      %v1094 = vpop.permute.xlu0 %1093
      %1096 = vset.pattern.permute.xlu0 3
      %1097 = vperm.xlu0 %1096, %v453
      %v1098 = vpop.permute.xlu0 %1097
      %1100 = vset.pattern.permute.xlu0 3
      %1101 = vperm.xlu0 %1100, %v454
      %v1102 = vpop.permute.xlu0 %1101
      %1104 = vset.pattern.permute.xlu0 3
      %1105 = vperm.xlu0 %1104, %v455
      %v1106 = vpop.permute.xlu0 %1105
      %1108 = vset.pattern.permute.xlu0 3
      %1109 = vperm.xlu0 %1108, %v456
      %v1110 = vpop.permute.xlu0 %1109
      %1112 = vset.pattern.permute.xlu0 3
      %1113 = vperm.xlu0 %1112, %v457
      %v1114 = vpop.permute.xlu0 %1113
      %1116 = vset.pattern.permute.xlu0 3
      %1117 = vperm.xlu0 %1116, %v458
      %v1118 = vpop.permute.xlu0 %1117
      %1120 = vset.pattern.permute.xlu0 3
      %1121 = vperm.xlu0 %1120, %v459
      %v1122 = vpop.permute.xlu0 %1121
      %1124 = vset.pattern.permute.xlu0 3
      %1125 = vperm.xlu0 %1124, %v460
      %v1126 = vpop.permute.xlu0 %1125
      %1128 = vset.pattern.permute.xlu0 3
      %1129 = vperm.xlu0 %1128, %v461
      %v1130 = vpop.permute.xlu0 %1129
      %1132 = vset.pattern.permute.xlu0 3
      %1133 = vperm.xlu0 %1132, %v462
      %v1134 = vpop.permute.xlu0 %1133
      %1136 = vset.pattern.permute.xlu0 3
      %1137 = vperm.xlu0 %1136, %v463
      %v1138 = vpop.permute.xlu0 %1137
      %1140 = vset.pattern.permute.xlu0 3
      %1141 = vperm.xlu0 %1140, %v464
      %v1142 = vpop.permute.xlu0 %1141
      %1144 = vset.pattern.permute.xlu0 3
      %1145 = vperm.xlu0 %1144, %v465
      %v1146 = vpop.permute.xlu0 %1145
      %1148 = vset.pattern.permute.xlu0 3
      %1149 = vperm.xlu0 %1148, %v466
      %v1150 = vpop.permute.xlu0 %1149
      %1152 = vset.pattern.permute.xlu0 3
      %1153 = vperm.xlu0 %1152, %v467
      %v1154 = vpop.permute.xlu0 %1153
      %1156 = vset.pattern.permute.xlu0 3
      %1157 = vperm.xlu0 %1156, %v468
      %v1158 = vpop.permute.xlu0 %1157
      %1160 = vset.pattern.permute.xlu0 3
      %1161 = vperm.xlu0 %1160, %v469
      %v1162 = vpop.permute.xlu0 %1161
      %1164 = vset.pattern.permute.xlu0 3
      %1165 = vperm.xlu0 %1164, %v470
      %v1166 = vpop.permute.xlu0 %1165
      %1168 = vset.pattern.permute.xlu0 3
      %1169 = vperm.xlu0 %1168, %v471
      %v1170 = vpop.permute.xlu0 %1169
      %1172 = vset.pattern.permute.xlu0 3
      %1173 = vperm.xlu0 %1172, %v472
      %v1174 = vpop.permute.xlu0 %1173
      %1176 = vset.pattern.permute.xlu0 3
      %1177 = vperm.xlu0 %1176, %v473
      %v1178 = vpop.permute.xlu0 %1177
      %1180 = vset.pattern.permute.xlu0 3
      %1181 = vperm.xlu0 %1180, %v474
      %v1182 = vpop.permute.xlu0 %1181
      %1184 = vset.pattern.permute.xlu0 3
      %1185 = vperm.xlu0 %1184, %v475
      %v1186 = vpop.permute.xlu0 %1185
      %1188 = vset.pattern.permute.xlu0 3
      %1189 = vperm.xlu0 %1188, %v476
      %v1190 = vpop.permute.xlu0 %1189
      %1192 = vset.pattern.permute.xlu0 3
      %1193 = vperm.xlu0 %1192, %v477
      %v1194 = vpop.permute.xlu0 %1193
      %v1196 = vlaneseq
      %v1197 = vshrl.u32 %v1196, 7
      %v1198 = vsub.s32 3, %v1197
      %v1199 = vrot.slane %v479, %v1198
      %v1200 = vmul.f32 %v1070, %v1199
      %v1201 = vmul.f32 %v1074, %v1199
      %v1202 = vmul.f32 %v1078, %v1199
      %v1203 = vmul.f32 %v1082, %v1199
      %v1204 = vmul.f32 %v1086, %v1199
      %v1205 = vmul.f32 %v1090, %v1199
      %v1206 = vmul.f32 %v1094, %v1199
      %v1207 = vmul.f32 %v1098, %v1199
      %v1208 = vmul.f32 %v1102, %v1199
      %v1209 = vmul.f32 %v1106, %v1199
      %v1210 = vmul.f32 %v1110, %v1199
      %v1211 = vmul.f32 %v1114, %v1199
      %v1212 = vmul.f32 %v1118, %v1199
      %v1213 = vmul.f32 %v1122, %v1199
      %v1214 = vmul.f32 %v1126, %v1199
      %v1215 = vmul.f32 %v1130, %v1199
      %v1216 = vmul.f32 %v1134, %v1199
      %v1217 = vmul.f32 %v1138, %v1199
      %v1218 = vmul.f32 %v1142, %v1199
      %v1219 = vmul.f32 %v1146, %v1199
      %v1220 = vmul.f32 %v1150, %v1199
      %v1221 = vmul.f32 %v1154, %v1199
      %v1222 = vmul.f32 %v1158, %v1199
      %v1223 = vmul.f32 %v1162, %v1199
      %v1224 = vmul.f32 %v1166, %v1199
      %v1225 = vmul.f32 %v1170, %v1199
      %v1226 = vmul.f32 %v1174, %v1199
      %v1227 = vmul.f32 %v1178, %v1199
      %v1228 = vmul.f32 %v1182, %v1199
      %v1229 = vmul.f32 %v1186, %v1199
      %v1230 = vmul.f32 %v1190, %v1199
      %v1231 = vmul.f32 %v1194, %v1199
      %v1232 = vadd.f32 %v1036, %v1200
      %v1233 = vadd.f32 %v1037, %v1201
      %v1234 = vadd.f32 %v1038, %v1202
      %v1235 = vadd.f32 %v1039, %v1203
      %v1236 = vadd.f32 %v1040, %v1204
      %v1237 = vadd.f32 %v1041, %v1205
      %v1238 = vadd.f32 %v1042, %v1206
      %v1239 = vadd.f32 %v1043, %v1207
      %v1240 = vadd.f32 %v1044, %v1208
      %v1241 = vadd.f32 %v1045, %v1209
      %v1242 = vadd.f32 %v1046, %v1210
      %v1243 = vadd.f32 %v1047, %v1211
      %v1244 = vadd.f32 %v1048, %v1212
      %v1245 = vadd.f32 %v1049, %v1213
      %v1246 = vadd.f32 %v1050, %v1214
      %v1247 = vadd.f32 %v1051, %v1215
      %v1248 = vadd.f32 %v1052, %v1216
      %v1249 = vadd.f32 %v1053, %v1217
      %v1250 = vadd.f32 %v1054, %v1218
      %v1251 = vadd.f32 %v1055, %v1219
      %v1252 = vadd.f32 %v1056, %v1220
      %v1253 = vadd.f32 %v1057, %v1221
      %v1254 = vadd.f32 %v1058, %v1222
      %v1255 = vadd.f32 %v1059, %v1223
      %v1256 = vadd.f32 %v1060, %v1224
      %v1257 = vadd.f32 %v1061, %v1225
      %v1258 = vadd.f32 %v1062, %v1226
      %v1259 = vadd.f32 %v1063, %v1227
      %v1260 = vadd.f32 %v1064, %v1228
      %v1261 = vadd.f32 %v1065, %v1229
      %v1262 = vadd.f32 %v1066, %v1230
      %v1263 = vadd.f32 %v1067, %v1231
      %v1264 = vld [vmem:[%s2] sm:$0x1]
      %v1266 = vlaneseq
      %v1267 = vshrl.u32 %v1266, 7
      %v1268 = vsub.s32 0, %v1267
      %v1269 = vrot.slane %v1264, %v1268
      %v1271 = vmul.f32 %v1232, %v1269
      %v1272 = vmul.f32 %v1233, %v1269
      %v1273 = vmul.f32 %v1234, %v1269
      %v1274 = vmul.f32 %v1235, %v1269
      %v1275 = vmul.f32 %v1236, %v1269
      %v1276 = vmul.f32 %v1237, %v1269
      %v1277 = vmul.f32 %v1238, %v1269
      %v1278 = vmul.f32 %v1239, %v1269
      %v1279 = vmul.f32 %v1240, %v1269
      %v1280 = vmul.f32 %v1241, %v1269
      %v1281 = vmul.f32 %v1242, %v1269
      %v1282 = vmul.f32 %v1243, %v1269
      %v1283 = vmul.f32 %v1244, %v1269
      %v1284 = vmul.f32 %v1245, %v1269
      %v1285 = vmul.f32 %v1246, %v1269
      %v1286 = vmul.f32 %v1247, %v1269
      %v1287 = vmul.f32 %v1248, %v1269
      %v1288 = vmul.f32 %v1249, %v1269
      %v1289 = vmul.f32 %v1250, %v1269
      %v1290 = vmul.f32 %v1251, %v1269
      %v1291 = vmul.f32 %v1252, %v1269
      %v1292 = vmul.f32 %v1253, %v1269
      %v1293 = vmul.f32 %v1254, %v1269
      %v1294 = vmul.f32 %v1255, %v1269
      %v1295 = vmul.f32 %v1256, %v1269
      %v1296 = vmul.f32 %v1257, %v1269
      %v1297 = vmul.f32 %v1258, %v1269
      %v1298 = vmul.f32 %v1259, %v1269
      %v1299 = vmul.f32 %v1260, %v1269
      %v1300 = vmul.f32 %v1261, %v1269
      %v1301 = vmul.f32 %v1262, %v1269
      %v1302 = vmul.f32 %v1263, %v1269
      %v1303 = vld [vmem:[%s3] sm:$0x1]
      %v1305 = vlaneseq
      %v1306 = vshrl.u32 %v1305, 7
      %v1307 = vsub.s32 0, %v1306
      %v1308 = vrot.slane %v1303, %v1307
      %v1310 = vadd.f32 %v1271, %v1308
      %v1311 = vadd.f32 %v1272, %v1308
      %v1312 = vadd.f32 %v1273, %v1308
      %v1313 = vadd.f32 %v1274, %v1308
      %v1314 = vadd.f32 %v1275, %v1308
      %v1315 = vadd.f32 %v1276, %v1308
      %v1316 = vadd.f32 %v1277, %v1308
      %v1317 = vadd.f32 %v1278, %v1308
      %v1318 = vadd.f32 %v1279, %v1308
      %v1319 = vadd.f32 %v1280, %v1308
      %v1320 = vadd.f32 %v1281, %v1308
      %v1321 = vadd.f32 %v1282, %v1308
      %v1322 = vadd.f32 %v1283, %v1308
      %v1323 = vadd.f32 %v1284, %v1308
      %v1324 = vadd.f32 %v1285, %v1308
      %v1325 = vadd.f32 %v1286, %v1308
      %v1326 = vadd.f32 %v1287, %v1308
      %v1327 = vadd.f32 %v1288, %v1308
      %v1328 = vadd.f32 %v1289, %v1308
      %v1329 = vadd.f32 %v1290, %v1308
      %v1330 = vadd.f32 %v1291, %v1308
      %v1331 = vadd.f32 %v1292, %v1308
      %v1332 = vadd.f32 %v1293, %v1308
      %v1333 = vadd.f32 %v1294, %v1308
      %v1334 = vadd.f32 %v1295, %v1308
      %v1335 = vadd.f32 %v1296, %v1308
      %v1336 = vadd.f32 %v1297, %v1308
      %v1337 = vadd.f32 %v1298, %v1308
      %v1338 = vadd.f32 %v1299, %v1308
      %v1339 = vadd.f32 %v1300, %v1308
      %v1340 = vadd.f32 %v1301, %v1308
      %v1341 = vadd.f32 %v1302, %v1308
      %vm1342 = vcmp.gt.f32.partialorder %v1310, 0.0
      %vm1343 = vcmp.gt.f32.partialorder %v1311, 0.0
      %vm1344 = vcmp.gt.f32.partialorder %v1312, 0.0
      %vm1345 = vcmp.gt.f32.partialorder %v1313, 0.0
      %vm1346 = vcmp.gt.f32.partialorder %v1314, 0.0
      %vm1347 = vcmp.gt.f32.partialorder %v1315, 0.0
      %vm1348 = vcmp.gt.f32.partialorder %v1316, 0.0
      %vm1349 = vcmp.gt.f32.partialorder %v1317, 0.0
      %vm1350 = vcmp.gt.f32.partialorder %v1318, 0.0
      %vm1351 = vcmp.gt.f32.partialorder %v1319, 0.0
      %vm1352 = vcmp.gt.f32.partialorder %v1320, 0.0
      %vm1353 = vcmp.gt.f32.partialorder %v1321, 0.0
      %vm1354 = vcmp.gt.f32.partialorder %v1322, 0.0
      %vm1355 = vcmp.gt.f32.partialorder %v1323, 0.0
      %vm1356 = vcmp.gt.f32.partialorder %v1324, 0.0
      %vm1357 = vcmp.gt.f32.partialorder %v1325, 0.0
      %vm1358 = vcmp.gt.f32.partialorder %v1326, 0.0
      %vm1359 = vcmp.gt.f32.partialorder %v1327, 0.0
      %vm1360 = vcmp.gt.f32.partialorder %v1328, 0.0
      %vm1361 = vcmp.gt.f32.partialorder %v1329, 0.0
      %vm1362 = vcmp.gt.f32.partialorder %v1330, 0.0
      %vm1363 = vcmp.gt.f32.partialorder %v1331, 0.0
      %vm1364 = vcmp.gt.f32.partialorder %v1332, 0.0
      %vm1365 = vcmp.gt.f32.partialorder %v1333, 0.0
      %vm1366 = vcmp.gt.f32.partialorder %v1334, 0.0
      %vm1367 = vcmp.gt.f32.partialorder %v1335, 0.0
      %vm1368 = vcmp.gt.f32.partialorder %v1336, 0.0
      %vm1369 = vcmp.gt.f32.partialorder %v1337, 0.0
      %vm1370 = vcmp.gt.f32.partialorder %v1338, 0.0
      %vm1371 = vcmp.gt.f32.partialorder %v1339, 0.0
      %vm1372 = vcmp.gt.f32.partialorder %v1340, 0.0
      %vm1373 = vcmp.gt.f32.partialorder %v1341, 0.0
      %v1374 = vld [vmem:[%s4] sm:$0x1]
      %v1376 = vlaneseq
      %v1377 = vshrl.u32 %v1376, 7
      %v1378 = vsub.s32 0, %v1377
      %v1379 = vrot.slane %v1374, %v1378
      %v1381 = vmul.f32 %v1310, %v1379
      %v1382 = vmul.f32 %v1311, %v1379
      %v1383 = vmul.f32 %v1312, %v1379
      %v1384 = vmul.f32 %v1313, %v1379
      %v1385 = vmul.f32 %v1314, %v1379
      %v1386 = vmul.f32 %v1315, %v1379
      %v1387 = vmul.f32 %v1316, %v1379
      %v1388 = vmul.f32 %v1317, %v1379
      %v1389 = vmul.f32 %v1318, %v1379
      %v1390 = vmul.f32 %v1319, %v1379
      %v1391 = vmul.f32 %v1320, %v1379
      %v1392 = vmul.f32 %v1321, %v1379
      %v1393 = vmul.f32 %v1322, %v1379
      %v1394 = vmul.f32 %v1323, %v1379
      %v1395 = vmul.f32 %v1324, %v1379
      %v1396 = vmul.f32 %v1325, %v1379
      %v1397 = vmul.f32 %v1326, %v1379
      %v1398 = vmul.f32 %v1327, %v1379
      %v1399 = vmul.f32 %v1328, %v1379
      %v1400 = vmul.f32 %v1329, %v1379
      %v1401 = vmul.f32 %v1330, %v1379
      %v1402 = vmul.f32 %v1331, %v1379
      %v1403 = vmul.f32 %v1332, %v1379
      %v1404 = vmul.f32 %v1333, %v1379
      %v1405 = vmul.f32 %v1334, %v1379
      %v1406 = vmul.f32 %v1335, %v1379
      %v1407 = vmul.f32 %v1336, %v1379
      %v1408 = vmul.f32 %v1337, %v1379
      %v1409 = vmul.f32 %v1338, %v1379
      %v1410 = vmul.f32 %v1339, %v1379
      %v1411 = vmul.f32 %v1340, %v1379
      %v1412 = vmul.f32 %v1341, %v1379
      %v1413 = vsel %vm1342, %v1310, %v1381
      %v1414 = vsel %vm1343, %v1311, %v1382
      %v1415 = vsel %vm1344, %v1312, %v1383
      %v1416 = vsel %vm1345, %v1313, %v1384
      %v1417 = vsel %vm1346, %v1314, %v1385
      %v1418 = vsel %vm1347, %v1315, %v1386
      %v1419 = vsel %vm1348, %v1316, %v1387
      %v1420 = vsel %vm1349, %v1317, %v1388
      %v1421 = vsel %vm1350, %v1318, %v1389
      %v1422 = vsel %vm1351, %v1319, %v1390
      %v1423 = vsel %vm1352, %v1320, %v1391
      %v1424 = vsel %vm1353, %v1321, %v1392
      %v1425 = vsel %vm1354, %v1322, %v1393
      %v1426 = vsel %vm1355, %v1323, %v1394
      %v1427 = vsel %vm1356, %v1324, %v1395
      %v1428 = vsel %vm1357, %v1325, %v1396
      %v1429 = vsel %vm1358, %v1326, %v1397
      %v1430 = vsel %vm1359, %v1327, %v1398
      %v1431 = vsel %vm1360, %v1328, %v1399
      %v1432 = vsel %vm1361, %v1329, %v1400
      %v1433 = vsel %vm1362, %v1330, %v1401
      %v1434 = vsel %vm1363, %v1331, %v1402
      %v1435 = vsel %vm1364, %v1332, %v1403
      %v1436 = vsel %vm1365, %v1333, %v1404
      %v1437 = vsel %vm1366, %v1334, %v1405
      %v1438 = vsel %vm1367, %v1335, %v1406
      %v1439 = vsel %vm1368, %v1336, %v1407
      %v1440 = vsel %vm1369, %v1337, %v1408
      %v1441 = vsel %vm1370, %v1338, %v1409
      %v1442 = vsel %vm1371, %v1339, %v1410
      %v1443 = vsel %vm1372, %v1340, %v1411
      %v1444 = vsel %vm1373, %v1341, %v1412
      %1445 = vst [vmem:[#allocation2] sm:$0xff] 0.0
      %1446 = vst [vmem:[#allocation2 + $0x8] sm:$0xff] 0.0
      %1447 = vst [vmem:[#allocation2 + $0x10] sm:$0xff] 0.0
      %1448 = vst [vmem:[#allocation2 + $0x18] sm:$0xff] 0.0
      %s1449 = scalar_lea.vmem [#allocation2], 544
      %1450 = vst [vmem:[%s1449] sm:$0xff] 0.0
      %1451 = vst [vmem:[%s1449 + $0x8] sm:$0xff] 0.0
      %1452 = vst [vmem:[%s1449 + $0x10] sm:$0xff] 0.0
      %1453 = vst [vmem:[%s1449 + $0x18] sm:$0xff] 0.0
      %s1454 = scalar_lea.vmem [#allocation2], 32
      %1455 = vst [vmem:[%s1454] sm:$0xff] 0.0
      %1456 = vst [vmem:[%s1454 + $0x20] sm:$0xff] 0.0
      %1457 = vst [vmem:[%s1454 + $0x40] sm:$0xff] 0.0
      %1458 = vst [vmem:[%s1454 + $0x60] sm:$0xff] 0.0
      %1459 = vst [vmem:[%s1454 + $0x80] sm:$0xff] 0.0
      %1460 = vst [vmem:[%s1454 + $0xa0] sm:$0xff] 0.0
      %1461 = vst [vmem:[%s1454 + $0xc0] sm:$0xff] 0.0
      %1462 = vst [vmem:[%s1454 + $0xe0] sm:$0xff] 0.0
      %1463 = vst [vmem:[%s1454 + $0x100] sm:$0xff] 0.0
      %1464 = vst [vmem:[%s1454 + $0x120] sm:$0xff] 0.0
      %1465 = vst [vmem:[%s1454 + $0x140] sm:$0xff] 0.0
      %1466 = vst [vmem:[%s1454 + $0x160] sm:$0xff] 0.0
      %1467 = vst [vmem:[%s1454 + $0x180] sm:$0xff] 0.0
      %1468 = vst [vmem:[%s1454 + $0x1a0] sm:$0xff] 0.0
      %1469 = vst [vmem:[%s1454 + $0x1c0] sm:$0xff] 0.0
      %1470 = vst [vmem:[%s1454 + $0x1e0] sm:$0xff] 0.0
      %1471 = vst [vmem:[%s1454 + $0x18] sm:$0xff] 0.0
      %1472 = vst [vmem:[%s1454 + $0x38] sm:$0xff] 0.0
      %1473 = vst [vmem:[%s1454 + $0x58] sm:$0xff] 0.0
      %1474 = vst [vmem:[%s1454 + $0x78] sm:$0xff] 0.0
      %1475 = vst [vmem:[%s1454 + $0x98] sm:$0xff] 0.0
      %1476 = vst [vmem:[%s1454 + $0xb8] sm:$0xff] 0.0
      %1477 = vst [vmem:[%s1454 + $0xd8] sm:$0xff] 0.0
      %1478 = vst [vmem:[%s1454 + $0xf8] sm:$0xff] 0.0
      %1479 = vst [vmem:[%s1454 + $0x118] sm:$0xff] 0.0
      %1480 = vst [vmem:[%s1454 + $0x138] sm:$0xff] 0.0
      %1481 = vst [vmem:[%s1454 + $0x158] sm:$0xff] 0.0
      %1482 = vst [vmem:[%s1454 + $0x178] sm:$0xff] 0.0
      %1483 = vst [vmem:[%s1454 + $0x198] sm:$0xff] 0.0
      %1484 = vst [vmem:[%s1454 + $0x1b8] sm:$0xff] 0.0
      %1485 = vst [vmem:[%s1454 + $0x1d8] sm:$0xff] 0.0
      %1486 = vst [vmem:[%s1454 + $0x1f8] sm:$0xff] 0.0
      %1487 = vst [vmem:[%s1454 + $0x8] sm:$0xff] %v1413
      %1488 = vst [vmem:[%s1454 + $0x10] sm:$0xff] %v1414
      %1489 = vst [vmem:[%s1454 + $0x28] sm:$0xff] %v1415
      %1490 = vst [vmem:[%s1454 + $0x30] sm:$0xff] %v1416
      %1491 = vst [vmem:[%s1454 + $0x48] sm:$0xff] %v1417
      %1492 = vst [vmem:[%s1454 + $0x50] sm:$0xff] %v1418
      %1493 = vst [vmem:[%s1454 + $0x68] sm:$0xff] %v1419
      %1494 = vst [vmem:[%s1454 + $0x70] sm:$0xff] %v1420
      %1495 = vst [vmem:[%s1454 + $0x88] sm:$0xff] %v1421
      %1496 = vst [vmem:[%s1454 + $0x90] sm:$0xff] %v1422
      %1497 = vst [vmem:[%s1454 + $0xa8] sm:$0xff] %v1423
      %1498 = vst [vmem:[%s1454 + $0xb0] sm:$0xff] %v1424
      %1499 = vst [vmem:[%s1454 + $0xc8] sm:$0xff] %v1425
      %1500 = vst [vmem:[%s1454 + $0xd0] sm:$0xff] %v1426
      %1501 = vst [vmem:[%s1454 + $0xe8] sm:$0xff] %v1427
      %1502 = vst [vmem:[%s1454 + $0xf0] sm:$0xff] %v1428
      %1503 = vst [vmem:[%s1454 + $0x108] sm:$0xff] %v1429
      %1504 = vst [vmem:[%s1454 + $0x110] sm:$0xff] %v1430
      %1505 = vst [vmem:[%s1454 + $0x128] sm:$0xff] %v1431
      %1506 = vst [vmem:[%s1454 + $0x130] sm:$0xff] %v1432
      %1507 = vst [vmem:[%s1454 + $0x148] sm:$0xff] %v1433
      %1508 = vst [vmem:[%s1454 + $0x150] sm:$0xff] %v1434
      %1509 = vst [vmem:[%s1454 + $0x168] sm:$0xff] %v1435
      %1510 = vst [vmem:[%s1454 + $0x170] sm:$0xff] %v1436
      %1511 = vst [vmem:[%s1454 + $0x188] sm:$0xff] %v1437
      %1512 = vst [vmem:[%s1454 + $0x190] sm:$0xff] %v1438
      %1513 = vst [vmem:[%s1454 + $0x1a8] sm:$0xff] %v1439
      %1514 = vst [vmem:[%s1454 + $0x1b0] sm:$0xff] %v1440
      %1515 = vst [vmem:[%s1454 + $0x1c8] sm:$0xff] %v1441
      %1516 = vst [vmem:[%s1454 + $0x1d0] sm:$0xff] %v1442
      %1517 = vst [vmem:[%s1454 + $0x1e8] sm:$0xff] %v1443
      %1518 = vst [vmem:[%s1454 + $0x1f0] sm:$0xff] %v1444
      %v1519 = vld [vmem:[%s5] sm:$0xff]
      %v1520 = vld [vmem:[%s5 + $0x8] sm:$0x1]
      %v1521 = vld [vmem:[#allocation2 + $0x7] sm:$0xff]
      %v1522 = vld [vmem:[#allocation2 + $0xf] sm:$0xff]
      %v1523 = vld [vmem:[#allocation2 + $0x27] sm:$0xff]
      %v1524 = vld [vmem:[#allocation2 + $0x2f] sm:$0xff]
      %v1525 = vld [vmem:[#allocation2 + $0x47] sm:$0xff]
      %v1526 = vld [vmem:[#allocation2 + $0x4f] sm:$0xff]
      %v1527 = vld [vmem:[#allocation2 + $0x67] sm:$0xff]
      %v1528 = vld [vmem:[#allocation2 + $0x6f] sm:$0xff]
      %v1529 = vld [vmem:[#allocation2 + $0x87] sm:$0xff]
      %v1530 = vld [vmem:[#allocation2 + $0x8f] sm:$0xff]
      %v1531 = vld [vmem:[#allocation2 + $0xa7] sm:$0xff]
      %v1532 = vld [vmem:[#allocation2 + $0xaf] sm:$0xff]
      %v1533 = vld [vmem:[#allocation2 + $0xc7] sm:$0xff]
      %v1534 = vld [vmem:[#allocation2 + $0xcf] sm:$0xff]
      %v1535 = vld [vmem:[#allocation2 + $0xe7] sm:$0xff]
      %v1536 = vld [vmem:[#allocation2 + $0xef] sm:$0xff]
      %v1537 = vld [vmem:[#allocation2 + $0x107] sm:$0xff]
      %v1538 = vld [vmem:[#allocation2 + $0x10f] sm:$0xff]
      %v1539 = vld [vmem:[#allocation2 + $0x127] sm:$0xff]
      %v1540 = vld [vmem:[#allocation2 + $0x12f] sm:$0xff]
      %v1541 = vld [vmem:[#allocation2 + $0x147] sm:$0xff]
      %v1542 = vld [vmem:[#allocation2 + $0x14f] sm:$0xff]
      %v1543 = vld [vmem:[#allocation2 + $0x167] sm:$0xff]
      %v1544 = vld [vmem:[#allocation2 + $0x16f] sm:$0xff]
      %v1545 = vld [vmem:[#allocation2 + $0x187] sm:$0xff]
      %v1546 = vld [vmem:[#allocation2 + $0x18f] sm:$0xff]
      %v1547 = vld [vmem:[#allocation2 + $0x1a7] sm:$0xff]
      %v1548 = vld [vmem:[#allocation2 + $0x1af] sm:$0xff]
      %v1549 = vld [vmem:[#allocation2 + $0x1c7] sm:$0xff]
      %v1550 = vld [vmem:[#allocation2 + $0x1cf] sm:$0xff]
      %v1551 = vld [vmem:[#allocation2 + $0x1e7] sm:$0xff]
      %v1552 = vld [vmem:[#allocation2 + $0x1ef] sm:$0xff]
      %v1553 = vlaneseq
      %v1554 = vshrl.u32 %v1553, 7
      %v1555 = vsub.s32 0, %v1554
      %v1556 = vrot.slane %v1519, %v1555
      %v1557 = vmul.f32 %v1521, %v1556
      %v1558 = vmul.f32 %v1522, %v1556
      %v1559 = vmul.f32 %v1523, %v1556
      %v1560 = vmul.f32 %v1524, %v1556
      %v1561 = vmul.f32 %v1525, %v1556
      %v1562 = vmul.f32 %v1526, %v1556
      %v1563 = vmul.f32 %v1527, %v1556
      %v1564 = vmul.f32 %v1528, %v1556
      %v1565 = vmul.f32 %v1529, %v1556
      %v1566 = vmul.f32 %v1530, %v1556
      %v1567 = vmul.f32 %v1531, %v1556
      %v1568 = vmul.f32 %v1532, %v1556
      %v1569 = vmul.f32 %v1533, %v1556
      %v1570 = vmul.f32 %v1534, %v1556
      %v1571 = vmul.f32 %v1535, %v1556
      %v1572 = vmul.f32 %v1536, %v1556
      %v1573 = vmul.f32 %v1537, %v1556
      %v1574 = vmul.f32 %v1538, %v1556
      %v1575 = vmul.f32 %v1539, %v1556
      %v1576 = vmul.f32 %v1540, %v1556
      %v1577 = vmul.f32 %v1541, %v1556
      %v1578 = vmul.f32 %v1542, %v1556
      %v1579 = vmul.f32 %v1543, %v1556
      %v1580 = vmul.f32 %v1544, %v1556
      %v1581 = vmul.f32 %v1545, %v1556
      %v1582 = vmul.f32 %v1546, %v1556
      %v1583 = vmul.f32 %v1547, %v1556
      %v1584 = vmul.f32 %v1548, %v1556
      %v1585 = vmul.f32 %v1549, %v1556
      %v1586 = vmul.f32 %v1550, %v1556
      %v1587 = vmul.f32 %v1551, %v1556
      %v1588 = vmul.f32 %v1552, %v1556
      %v1589 = vld [vmem:[#allocation2 + $0x8] sm:$0xff]
      %v1590 = vld [vmem:[#allocation2 + $0x10] sm:$0xff]
      %v1591 = vld [vmem:[#allocation2 + $0x28] sm:$0xff]
      %v1592 = vld [vmem:[#allocation2 + $0x30] sm:$0xff]
      %v1593 = vld [vmem:[#allocation2 + $0x48] sm:$0xff]
      %v1594 = vld [vmem:[#allocation2 + $0x50] sm:$0xff]
      %v1595 = vld [vmem:[#allocation2 + $0x68] sm:$0xff]
      %v1596 = vld [vmem:[#allocation2 + $0x70] sm:$0xff]
      %v1597 = vld [vmem:[#allocation2 + $0x88] sm:$0xff]
      %v1598 = vld [vmem:[#allocation2 + $0x90] sm:$0xff]
      %v1599 = vld [vmem:[#allocation2 + $0xa8] sm:$0xff]
      %v1600 = vld [vmem:[#allocation2 + $0xb0] sm:$0xff]
      %v1601 = vld [vmem:[#allocation2 + $0xc8] sm:$0xff]
      %v1602 = vld [vmem:[#allocation2 + $0xd0] sm:$0xff]
      %v1603 = vld [vmem:[#allocation2 + $0xe8] sm:$0xff]
      %v1604 = vld [vmem:[#allocation2 + $0xf0] sm:$0xff]
      %v1605 = vld [vmem:[#allocation2 + $0x108] sm:$0xff]
      %v1606 = vld [vmem:[#allocation2 + $0x110] sm:$0xff]
      %v1607 = vld [vmem:[#allocation2 + $0x128] sm:$0xff]
      %v1608 = vld [vmem:[#allocation2 + $0x130] sm:$0xff]
      %v1609 = vld [vmem:[#allocation2 + $0x148] sm:$0xff]
      %v1610 = vld [vmem:[#allocation2 + $0x150] sm:$0xff]
      %v1611 = vld [vmem:[#allocation2 + $0x168] sm:$0xff]
      %v1612 = vld [vmem:[#allocation2 + $0x170] sm:$0xff]
      %v1613 = vld [vmem:[#allocation2 + $0x188] sm:$0xff]
      %v1614 = vld [vmem:[#allocation2 + $0x190] sm:$0xff]
      %v1615 = vld [vmem:[#allocation2 + $0x1a8] sm:$0xff]
      %v1616 = vld [vmem:[#allocation2 + $0x1b0] sm:$0xff]
      %v1617 = vld [vmem:[#allocation2 + $0x1c8] sm:$0xff]
      %v1618 = vld [vmem:[#allocation2 + $0x1d0] sm:$0xff]
      %v1619 = vld [vmem:[#allocation2 + $0x1e8] sm:$0xff]
      %v1620 = vld [vmem:[#allocation2 + $0x1f0] sm:$0xff]
      %v1621 = vlaneseq
      %v1622 = vshrl.u32 %v1621, 7
      %v1623 = vsub.s32 1, %v1622
      %v1624 = vrot.slane %v1519, %v1623
      %v1625 = vmul.f32 %v1589, %v1624
      %v1626 = vmul.f32 %v1590, %v1624
      %v1627 = vmul.f32 %v1591, %v1624
      %v1628 = vmul.f32 %v1592, %v1624
      %v1629 = vmul.f32 %v1593, %v1624
      %v1630 = vmul.f32 %v1594, %v1624
      %v1631 = vmul.f32 %v1595, %v1624
      %v1632 = vmul.f32 %v1596, %v1624
      %v1633 = vmul.f32 %v1597, %v1624
      %v1634 = vmul.f32 %v1598, %v1624
      %v1635 = vmul.f32 %v1599, %v1624
      %v1636 = vmul.f32 %v1600, %v1624
      %v1637 = vmul.f32 %v1601, %v1624
      %v1638 = vmul.f32 %v1602, %v1624
      %v1639 = vmul.f32 %v1603, %v1624
      %v1640 = vmul.f32 %v1604, %v1624
      %v1641 = vmul.f32 %v1605, %v1624
      %v1642 = vmul.f32 %v1606, %v1624
      %v1643 = vmul.f32 %v1607, %v1624
      %v1644 = vmul.f32 %v1608, %v1624
      %v1645 = vmul.f32 %v1609, %v1624
      %v1646 = vmul.f32 %v1610, %v1624
      %v1647 = vmul.f32 %v1611, %v1624
      %v1648 = vmul.f32 %v1612, %v1624
      %v1649 = vmul.f32 %v1613, %v1624
      %v1650 = vmul.f32 %v1614, %v1624
      %v1651 = vmul.f32 %v1615, %v1624
      %v1652 = vmul.f32 %v1616, %v1624
      %v1653 = vmul.f32 %v1617, %v1624
      %v1654 = vmul.f32 %v1618, %v1624
      %v1655 = vmul.f32 %v1619, %v1624
      %v1656 = vmul.f32 %v1620, %v1624
      %v1657 = vadd.f32 %v1557, %v1625
      %v1658 = vadd.f32 %v1558, %v1626
      %v1659 = vadd.f32 %v1559, %v1627
      %v1660 = vadd.f32 %v1560, %v1628
      %v1661 = vadd.f32 %v1561, %v1629
      %v1662 = vadd.f32 %v1562, %v1630
      %v1663 = vadd.f32 %v1563, %v1631
      %v1664 = vadd.f32 %v1564, %v1632
      %v1665 = vadd.f32 %v1565, %v1633
      %v1666 = vadd.f32 %v1566, %v1634
      %v1667 = vadd.f32 %v1567, %v1635
      %v1668 = vadd.f32 %v1568, %v1636
      %v1669 = vadd.f32 %v1569, %v1637
      %v1670 = vadd.f32 %v1570, %v1638
      %v1671 = vadd.f32 %v1571, %v1639
      %v1672 = vadd.f32 %v1572, %v1640
      %v1673 = vadd.f32 %v1573, %v1641
      %v1674 = vadd.f32 %v1574, %v1642
      %v1675 = vadd.f32 %v1575, %v1643
      %v1676 = vadd.f32 %v1576, %v1644
      %v1677 = vadd.f32 %v1577, %v1645
      %v1678 = vadd.f32 %v1578, %v1646
      %v1679 = vadd.f32 %v1579, %v1647
      %v1680 = vadd.f32 %v1580, %v1648
      %v1681 = vadd.f32 %v1581, %v1649
      %v1682 = vadd.f32 %v1582, %v1650
      %v1683 = vadd.f32 %v1583, %v1651
      %v1684 = vadd.f32 %v1584, %v1652
      %v1685 = vadd.f32 %v1585, %v1653
      %v1686 = vadd.f32 %v1586, %v1654
      %v1687 = vadd.f32 %v1587, %v1655
      %v1688 = vadd.f32 %v1588, %v1656
      %v1689 = vld [vmem:[#allocation2 + $0x9] sm:$0xff]
      %v1690 = vld [vmem:[#allocation2 + $0x11] sm:$0xff]
      %v1691 = vld [vmem:[#allocation2 + $0x29] sm:$0xff]
      %v1692 = vld [vmem:[#allocation2 + $0x31] sm:$0xff]
      %v1693 = vld [vmem:[#allocation2 + $0x49] sm:$0xff]
      %v1694 = vld [vmem:[#allocation2 + $0x51] sm:$0xff]
      %v1695 = vld [vmem:[#allocation2 + $0x69] sm:$0xff]
      %v1696 = vld [vmem:[#allocation2 + $0x71] sm:$0xff]
      %v1697 = vld [vmem:[#allocation2 + $0x89] sm:$0xff]
      %v1698 = vld [vmem:[#allocation2 + $0x91] sm:$0xff]
      %v1699 = vld [vmem:[#allocation2 + $0xa9] sm:$0xff]
      %v1700 = vld [vmem:[#allocation2 + $0xb1] sm:$0xff]
      %v1701 = vld [vmem:[#allocation2 + $0xc9] sm:$0xff]
      %v1702 = vld [vmem:[#allocation2 + $0xd1] sm:$0xff]
      %v1703 = vld [vmem:[#allocation2 + $0xe9] sm:$0xff]
      %v1704 = vld [vmem:[#allocation2 + $0xf1] sm:$0xff]
      %v1705 = vld [vmem:[#allocation2 + $0x109] sm:$0xff]
      %v1706 = vld [vmem:[#allocation2 + $0x111] sm:$0xff]
      %v1707 = vld [vmem:[#allocation2 + $0x129] sm:$0xff]
      %v1708 = vld [vmem:[#allocation2 + $0x131] sm:$0xff]
      %v1709 = vld [vmem:[#allocation2 + $0x149] sm:$0xff]
      %v1710 = vld [vmem:[#allocation2 + $0x151] sm:$0xff]
      %v1711 = vld [vmem:[#allocation2 + $0x169] sm:$0xff]
      %v1712 = vld [vmem:[#allocation2 + $0x171] sm:$0xff]
      %v1713 = vld [vmem:[#allocation2 + $0x189] sm:$0xff]
      %v1714 = vld [vmem:[#allocation2 + $0x191] sm:$0xff]
      %v1715 = vld [vmem:[#allocation2 + $0x1a9] sm:$0xff]
      %v1716 = vld [vmem:[#allocation2 + $0x1b1] sm:$0xff]
      %v1717 = vld [vmem:[#allocation2 + $0x1c9] sm:$0xff]
      %v1718 = vld [vmem:[#allocation2 + $0x1d1] sm:$0xff]
      %v1719 = vld [vmem:[#allocation2 + $0x1e9] sm:$0xff]
      %v1720 = vld [vmem:[#allocation2 + $0x1f1] sm:$0xff]
      %v1721 = vlaneseq
      %v1722 = vshrl.u32 %v1721, 7
      %v1723 = vsub.s32 2, %v1722
      %v1724 = vrot.slane %v1519, %v1723
      %v1725 = vmul.f32 %v1689, %v1724
      %v1726 = vmul.f32 %v1690, %v1724
      %v1727 = vmul.f32 %v1691, %v1724
      %v1728 = vmul.f32 %v1692, %v1724
      %v1729 = vmul.f32 %v1693, %v1724
      %v1730 = vmul.f32 %v1694, %v1724
      %v1731 = vmul.f32 %v1695, %v1724
      %v1732 = vmul.f32 %v1696, %v1724
      %v1733 = vmul.f32 %v1697, %v1724
      %v1734 = vmul.f32 %v1698, %v1724
      %v1735 = vmul.f32 %v1699, %v1724
      %v1736 = vmul.f32 %v1700, %v1724
      %v1737 = vmul.f32 %v1701, %v1724
      %v1738 = vmul.f32 %v1702, %v1724
      %v1739 = vmul.f32 %v1703, %v1724
      %v1740 = vmul.f32 %v1704, %v1724
      %v1741 = vmul.f32 %v1705, %v1724
      %v1742 = vmul.f32 %v1706, %v1724
      %v1743 = vmul.f32 %v1707, %v1724
      %v1744 = vmul.f32 %v1708, %v1724
      %v1745 = vmul.f32 %v1709, %v1724
      %v1746 = vmul.f32 %v1710, %v1724
      %v1747 = vmul.f32 %v1711, %v1724
      %v1748 = vmul.f32 %v1712, %v1724
      %v1749 = vmul.f32 %v1713, %v1724
      %v1750 = vmul.f32 %v1714, %v1724
      %v1751 = vmul.f32 %v1715, %v1724
      %v1752 = vmul.f32 %v1716, %v1724
      %v1753 = vmul.f32 %v1717, %v1724
      %v1754 = vmul.f32 %v1718, %v1724
      %v1755 = vmul.f32 %v1719, %v1724
      %v1756 = vmul.f32 %v1720, %v1724
      %v1757 = vadd.f32 %v1657, %v1725
      %v1758 = vadd.f32 %v1658, %v1726
      %v1759 = vadd.f32 %v1659, %v1727
      %v1760 = vadd.f32 %v1660, %v1728
      %v1761 = vadd.f32 %v1661, %v1729
      %v1762 = vadd.f32 %v1662, %v1730
      %v1763 = vadd.f32 %v1663, %v1731
      %v1764 = vadd.f32 %v1664, %v1732
      %v1765 = vadd.f32 %v1665, %v1733
      %v1766 = vadd.f32 %v1666, %v1734
      %v1767 = vadd.f32 %v1667, %v1735
      %v1768 = vadd.f32 %v1668, %v1736
      %v1769 = vadd.f32 %v1669, %v1737
      %v1770 = vadd.f32 %v1670, %v1738
      %v1771 = vadd.f32 %v1671, %v1739
      %v1772 = vadd.f32 %v1672, %v1740
      %v1773 = vadd.f32 %v1673, %v1741
      %v1774 = vadd.f32 %v1674, %v1742
      %v1775 = vadd.f32 %v1675, %v1743
      %v1776 = vadd.f32 %v1676, %v1744
      %v1777 = vadd.f32 %v1677, %v1745
      %v1778 = vadd.f32 %v1678, %v1746
      %v1779 = vadd.f32 %v1679, %v1747
      %v1780 = vadd.f32 %v1680, %v1748
      %v1781 = vadd.f32 %v1681, %v1749
      %v1782 = vadd.f32 %v1682, %v1750
      %v1783 = vadd.f32 %v1683, %v1751
      %v1784 = vadd.f32 %v1684, %v1752
      %v1785 = vadd.f32 %v1685, %v1753
      %v1786 = vadd.f32 %v1686, %v1754
      %v1787 = vadd.f32 %v1687, %v1755
      %v1788 = vadd.f32 %v1688, %v1756
      %v1789 = vld [vmem:[%s1454 + $0x7] sm:$0xff]
      %v1790 = vld [vmem:[%s1454 + $0xf] sm:$0xff]
      %v1791 = vld [vmem:[%s1454 + $0x27] sm:$0xff]
      %v1792 = vld [vmem:[%s1454 + $0x2f] sm:$0xff]
      %v1793 = vld [vmem:[%s1454 + $0x47] sm:$0xff]
      %v1794 = vld [vmem:[%s1454 + $0x4f] sm:$0xff]
      %v1795 = vld [vmem:[%s1454 + $0x67] sm:$0xff]
      %v1796 = vld [vmem:[%s1454 + $0x6f] sm:$0xff]
      %v1797 = vld [vmem:[%s1454 + $0x87] sm:$0xff]
      %v1798 = vld [vmem:[%s1454 + $0x8f] sm:$0xff]
      %v1799 = vld [vmem:[%s1454 + $0xa7] sm:$0xff]
      %v1800 = vld [vmem:[%s1454 + $0xaf] sm:$0xff]
      %v1801 = vld [vmem:[%s1454 + $0xc7] sm:$0xff]
      %v1802 = vld [vmem:[%s1454 + $0xcf] sm:$0xff]
      %v1803 = vld [vmem:[%s1454 + $0xe7] sm:$0xff]
      %v1804 = vld [vmem:[%s1454 + $0xef] sm:$0xff]
      %v1805 = vld [vmem:[%s1454 + $0x107] sm:$0xff]
      %v1806 = vld [vmem:[%s1454 + $0x10f] sm:$0xff]
      %v1807 = vld [vmem:[%s1454 + $0x127] sm:$0xff]
      %v1808 = vld [vmem:[%s1454 + $0x12f] sm:$0xff]
      %v1809 = vld [vmem:[%s1454 + $0x147] sm:$0xff]
      %v1810 = vld [vmem:[%s1454 + $0x14f] sm:$0xff]
      %v1811 = vld [vmem:[%s1454 + $0x167] sm:$0xff]
      %v1812 = vld [vmem:[%s1454 + $0x16f] sm:$0xff]
      %v1813 = vld [vmem:[%s1454 + $0x187] sm:$0xff]
      %v1814 = vld [vmem:[%s1454 + $0x18f] sm:$0xff]
      %v1815 = vld [vmem:[%s1454 + $0x1a7] sm:$0xff]
      %v1816 = vld [vmem:[%s1454 + $0x1af] sm:$0xff]
      %v1817 = vld [vmem:[%s1454 + $0x1c7] sm:$0xff]
      %v1818 = vld [vmem:[%s1454 + $0x1cf] sm:$0xff]
      %v1819 = vld [vmem:[%s1454 + $0x1e7] sm:$0xff]
      %v1820 = vld [vmem:[%s1454 + $0x1ef] sm:$0xff]
      %v1821 = vlaneseq
      %v1822 = vshrl.u32 %v1821, 7
      %v1823 = vsub.s32 3, %v1822
      %v1824 = vrot.slane %v1519, %v1823
      %v1825 = vmul.f32 %v1789, %v1824
      %v1826 = vmul.f32 %v1790, %v1824
      %v1827 = vmul.f32 %v1791, %v1824
      %v1828 = vmul.f32 %v1792, %v1824
      %v1829 = vmul.f32 %v1793, %v1824
      %v1830 = vmul.f32 %v1794, %v1824
      %v1831 = vmul.f32 %v1795, %v1824
      %v1832 = vmul.f32 %v1796, %v1824
      %v1833 = vmul.f32 %v1797, %v1824
      %v1834 = vmul.f32 %v1798, %v1824
      %v1835 = vmul.f32 %v1799, %v1824
      %v1836 = vmul.f32 %v1800, %v1824
      %v1837 = vmul.f32 %v1801, %v1824
      %v1838 = vmul.f32 %v1802, %v1824
      %v1839 = vmul.f32 %v1803, %v1824
      %v1840 = vmul.f32 %v1804, %v1824
      %v1841 = vmul.f32 %v1805, %v1824
      %v1842 = vmul.f32 %v1806, %v1824
      %v1843 = vmul.f32 %v1807, %v1824
      %v1844 = vmul.f32 %v1808, %v1824
      %v1845 = vmul.f32 %v1809, %v1824
      %v1846 = vmul.f32 %v1810, %v1824
      %v1847 = vmul.f32 %v1811, %v1824
      %v1848 = vmul.f32 %v1812, %v1824
      %v1849 = vmul.f32 %v1813, %v1824
      %v1850 = vmul.f32 %v1814, %v1824
      %v1851 = vmul.f32 %v1815, %v1824
      %v1852 = vmul.f32 %v1816, %v1824
      %v1853 = vmul.f32 %v1817, %v1824
      %v1854 = vmul.f32 %v1818, %v1824
      %v1855 = vmul.f32 %v1819, %v1824
      %v1856 = vmul.f32 %v1820, %v1824
      %v1857 = vadd.f32 %v1757, %v1825
      %v1858 = vadd.f32 %v1758, %v1826
      %v1859 = vadd.f32 %v1759, %v1827
      %v1860 = vadd.f32 %v1760, %v1828
      %v1861 = vadd.f32 %v1761, %v1829
      %v1862 = vadd.f32 %v1762, %v1830
      %v1863 = vadd.f32 %v1763, %v1831
      %v1864 = vadd.f32 %v1764, %v1832
      %v1865 = vadd.f32 %v1765, %v1833
      %v1866 = vadd.f32 %v1766, %v1834
      %v1867 = vadd.f32 %v1767, %v1835
      %v1868 = vadd.f32 %v1768, %v1836
      %v1869 = vadd.f32 %v1769, %v1837
      %v1870 = vadd.f32 %v1770, %v1838
      %v1871 = vadd.f32 %v1771, %v1839
      %v1872 = vadd.f32 %v1772, %v1840
      %v1873 = vadd.f32 %v1773, %v1841
      %v1874 = vadd.f32 %v1774, %v1842
      %v1875 = vadd.f32 %v1775, %v1843
      %v1876 = vadd.f32 %v1776, %v1844
      %v1877 = vadd.f32 %v1777, %v1845
      %v1878 = vadd.f32 %v1778, %v1846
      %v1879 = vadd.f32 %v1779, %v1847
      %v1880 = vadd.f32 %v1780, %v1848
      %v1881 = vadd.f32 %v1781, %v1849
      %v1882 = vadd.f32 %v1782, %v1850
      %v1883 = vadd.f32 %v1783, %v1851
      %v1884 = vadd.f32 %v1784, %v1852
      %v1885 = vadd.f32 %v1785, %v1853
      %v1886 = vadd.f32 %v1786, %v1854
      %v1887 = vadd.f32 %v1787, %v1855
      %v1888 = vadd.f32 %v1788, %v1856
      %v1889 = vld [vmem:[%s1454 + $0x8] sm:$0xff]
      %v1890 = vld [vmem:[%s1454 + $0x10] sm:$0xff]
      %v1891 = vld [vmem:[%s1454 + $0x28] sm:$0xff]
      %v1892 = vld [vmem:[%s1454 + $0x30] sm:$0xff]
      %v1893 = vld [vmem:[%s1454 + $0x48] sm:$0xff]
      %v1894 = vld [vmem:[%s1454 + $0x50] sm:$0xff]
      %v1895 = vld [vmem:[%s1454 + $0x68] sm:$0xff]
      %v1896 = vld [vmem:[%s1454 + $0x70] sm:$0xff]
      %v1897 = vld [vmem:[%s1454 + $0x88] sm:$0xff]
      %v1898 = vld [vmem:[%s1454 + $0x90] sm:$0xff]
      %v1899 = vld [vmem:[%s1454 + $0xa8] sm:$0xff]
      %v1900 = vld [vmem:[%s1454 + $0xb0] sm:$0xff]
      %v1901 = vld [vmem:[%s1454 + $0xc8] sm:$0xff]
      %v1902 = vld [vmem:[%s1454 + $0xd0] sm:$0xff]
      %v1903 = vld [vmem:[%s1454 + $0xe8] sm:$0xff]
      %v1904 = vld [vmem:[%s1454 + $0xf0] sm:$0xff]
      %v1905 = vld [vmem:[%s1454 + $0x108] sm:$0xff]
      %v1906 = vld [vmem:[%s1454 + $0x110] sm:$0xff]
      %v1907 = vld [vmem:[%s1454 + $0x128] sm:$0xff]
      %v1908 = vld [vmem:[%s1454 + $0x130] sm:$0xff]
      %v1909 = vld [vmem:[%s1454 + $0x148] sm:$0xff]
      %v1910 = vld [vmem:[%s1454 + $0x150] sm:$0xff]
      %v1911 = vld [vmem:[%s1454 + $0x168] sm:$0xff]
      %v1912 = vld [vmem:[%s1454 + $0x170] sm:$0xff]
      %v1913 = vld [vmem:[%s1454 + $0x188] sm:$0xff]
      %v1914 = vld [vmem:[%s1454 + $0x190] sm:$0xff]
      %v1915 = vld [vmem:[%s1454 + $0x1a8] sm:$0xff]
      %v1916 = vld [vmem:[%s1454 + $0x1b0] sm:$0xff]
      %v1917 = vld [vmem:[%s1454 + $0x1c8] sm:$0xff]
      %v1918 = vld [vmem:[%s1454 + $0x1d0] sm:$0xff]
      %v1919 = vld [vmem:[%s1454 + $0x1e8] sm:$0xff]
      %v1920 = vld [vmem:[%s1454 + $0x1f0] sm:$0xff]
      %v1921 = vlaneseq
      %v1922 = vshrl.u32 %v1921, 7
      %v1923 = vsub.s32 4, %v1922
      %v1924 = vrot.slane %v1519, %v1923
      %v1925 = vmul.f32 %v1889, %v1924
      %v1926 = vmul.f32 %v1890, %v1924
      %v1927 = vmul.f32 %v1891, %v1924
      %v1928 = vmul.f32 %v1892, %v1924
      %v1929 = vmul.f32 %v1893, %v1924
      %v1930 = vmul.f32 %v1894, %v1924
      %v1931 = vmul.f32 %v1895, %v1924
      %v1932 = vmul.f32 %v1896, %v1924
      %v1933 = vmul.f32 %v1897, %v1924
      %v1934 = vmul.f32 %v1898, %v1924
      %v1935 = vmul.f32 %v1899, %v1924
      %v1936 = vmul.f32 %v1900, %v1924
      %v1937 = vmul.f32 %v1901, %v1924
      %v1938 = vmul.f32 %v1902, %v1924
      %v1939 = vmul.f32 %v1903, %v1924
      %v1940 = vmul.f32 %v1904, %v1924
      %v1941 = vmul.f32 %v1905, %v1924
      %v1942 = vmul.f32 %v1906, %v1924
      %v1943 = vmul.f32 %v1907, %v1924
      %v1944 = vmul.f32 %v1908, %v1924
      %v1945 = vmul.f32 %v1909, %v1924
      %v1946 = vmul.f32 %v1910, %v1924
      %v1947 = vmul.f32 %v1911, %v1924
      %v1948 = vmul.f32 %v1912, %v1924
      %v1949 = vmul.f32 %v1913, %v1924
      %v1950 = vmul.f32 %v1914, %v1924
      %v1951 = vmul.f32 %v1915, %v1924
      %v1952 = vmul.f32 %v1916, %v1924
      %v1953 = vmul.f32 %v1917, %v1924
      %v1954 = vmul.f32 %v1918, %v1924
      %v1955 = vmul.f32 %v1919, %v1924
      %v1956 = vmul.f32 %v1920, %v1924
      %v1957 = vadd.f32 %v1857, %v1925
      %v1958 = vadd.f32 %v1858, %v1926
      %v1959 = vadd.f32 %v1859, %v1927
      %v1960 = vadd.f32 %v1860, %v1928
      %v1961 = vadd.f32 %v1861, %v1929
      %v1962 = vadd.f32 %v1862, %v1930
      %v1963 = vadd.f32 %v1863, %v1931
      %v1964 = vadd.f32 %v1864, %v1932
      %v1965 = vadd.f32 %v1865, %v1933
      %v1966 = vadd.f32 %v1866, %v1934
      %v1967 = vadd.f32 %v1867, %v1935
      %v1968 = vadd.f32 %v1868, %v1936
      %v1969 = vadd.f32 %v1869, %v1937
      %v1970 = vadd.f32 %v1870, %v1938
      %v1971 = vadd.f32 %v1871, %v1939
      %v1972 = vadd.f32 %v1872, %v1940
      %v1973 = vadd.f32 %v1873, %v1941
      %v1974 = vadd.f32 %v1874, %v1942
      %v1975 = vadd.f32 %v1875, %v1943
      %v1976 = vadd.f32 %v1876, %v1944
      %v1977 = vadd.f32 %v1877, %v1945
      %v1978 = vadd.f32 %v1878, %v1946
      %v1979 = vadd.f32 %v1879, %v1947
      %v1980 = vadd.f32 %v1880, %v1948
      %v1981 = vadd.f32 %v1881, %v1949
      %v1982 = vadd.f32 %v1882, %v1950
      %v1983 = vadd.f32 %v1883, %v1951
      %v1984 = vadd.f32 %v1884, %v1952
      %v1985 = vadd.f32 %v1885, %v1953
      %v1986 = vadd.f32 %v1886, %v1954
      %v1987 = vadd.f32 %v1887, %v1955
      %v1988 = vadd.f32 %v1888, %v1956
      %v1989 = vld [vmem:[%s1454 + $0x9] sm:$0xff]
      %v1990 = vld [vmem:[%s1454 + $0x11] sm:$0xff]
      %v1991 = vld [vmem:[%s1454 + $0x29] sm:$0xff]
      %v1992 = vld [vmem:[%s1454 + $0x31] sm:$0xff]
      %v1993 = vld [vmem:[%s1454 + $0x49] sm:$0xff]
      %v1994 = vld [vmem:[%s1454 + $0x51] sm:$0xff]
      %v1995 = vld [vmem:[%s1454 + $0x69] sm:$0xff]
      %v1996 = vld [vmem:[%s1454 + $0x71] sm:$0xff]
      %v1997 = vld [vmem:[%s1454 + $0x89] sm:$0xff]
      %v1998 = vld [vmem:[%s1454 + $0x91] sm:$0xff]
      %v1999 = vld [vmem:[%s1454 + $0xa9] sm:$0xff]
      %v2000 = vld [vmem:[%s1454 + $0xb1] sm:$0xff]
      %v2001 = vld [vmem:[%s1454 + $0xc9] sm:$0xff]
      %v2002 = vld [vmem:[%s1454 + $0xd1] sm:$0xff]
      %v2003 = vld [vmem:[%s1454 + $0xe9] sm:$0xff]
      %v2004 = vld [vmem:[%s1454 + $0xf1] sm:$0xff]
      %v2005 = vld [vmem:[%s1454 + $0x109] sm:$0xff]
      %v2006 = vld [vmem:[%s1454 + $0x111] sm:$0xff]
      %v2007 = vld [vmem:[%s1454 + $0x129] sm:$0xff]
      %v2008 = vld [vmem:[%s1454 + $0x131] sm:$0xff]
      %v2009 = vld [vmem:[%s1454 + $0x149] sm:$0xff]
      %v2010 = vld [vmem:[%s1454 + $0x151] sm:$0xff]
      %v2011 = vld [vmem:[%s1454 + $0x169] sm:$0xff]
      %v2012 = vld [vmem:[%s1454 + $0x171] sm:$0xff]
      %v2013 = vld [vmem:[%s1454 + $0x189] sm:$0xff]
      %v2014 = vld [vmem:[%s1454 + $0x191] sm:$0xff]
      %v2015 = vld [vmem:[%s1454 + $0x1a9] sm:$0xff]
      %v2016 = vld [vmem:[%s1454 + $0x1b1] sm:$0xff]
      %v2017 = vld [vmem:[%s1454 + $0x1c9] sm:$0xff]
      %v2018 = vld [vmem:[%s1454 + $0x1d1] sm:$0xff]
      %v2019 = vld [vmem:[%s1454 + $0x1e9] sm:$0xff]
      %v2020 = vld [vmem:[%s1454 + $0x1f1] sm:$0xff]
      %v2021 = vlaneseq
      %v2022 = vshrl.u32 %v2021, 7
      %v2023 = vsub.s32 5, %v2022
      %v2024 = vrot.slane %v1519, %v2023
      %v2025 = vmul.f32 %v1989, %v2024
      %v2026 = vmul.f32 %v1990, %v2024
      %v2027 = vmul.f32 %v1991, %v2024
      %v2028 = vmul.f32 %v1992, %v2024
      %v2029 = vmul.f32 %v1993, %v2024
      %v2030 = vmul.f32 %v1994, %v2024
      %v2031 = vmul.f32 %v1995, %v2024
      %v2032 = vmul.f32 %v1996, %v2024
      %v2033 = vmul.f32 %v1997, %v2024
      %v2034 = vmul.f32 %v1998, %v2024
      %v2035 = vmul.f32 %v1999, %v2024
      %v2036 = vmul.f32 %v2000, %v2024
      %v2037 = vmul.f32 %v2001, %v2024
      %v2038 = vmul.f32 %v2002, %v2024
      %v2039 = vmul.f32 %v2003, %v2024
      %v2040 = vmul.f32 %v2004, %v2024
      %v2041 = vmul.f32 %v2005, %v2024
      %v2042 = vmul.f32 %v2006, %v2024
      %v2043 = vmul.f32 %v2007, %v2024
      %v2044 = vmul.f32 %v2008, %v2024
      %v2045 = vmul.f32 %v2009, %v2024
      %v2046 = vmul.f32 %v2010, %v2024
      %v2047 = vmul.f32 %v2011, %v2024
      %v2048 = vmul.f32 %v2012, %v2024
      %v2049 = vmul.f32 %v2013, %v2024
      %v2050 = vmul.f32 %v2014, %v2024
      %v2051 = vmul.f32 %v2015, %v2024
      %v2052 = vmul.f32 %v2016, %v2024
      %v2053 = vmul.f32 %v2017, %v2024
      %v2054 = vmul.f32 %v2018, %v2024
      %v2055 = vmul.f32 %v2019, %v2024
      %v2056 = vmul.f32 %v2020, %v2024
      %v2057 = vadd.f32 %v1957, %v2025
      %v2058 = vadd.f32 %v1958, %v2026
      %v2059 = vadd.f32 %v1959, %v2027
      %v2060 = vadd.f32 %v1960, %v2028
      %v2061 = vadd.f32 %v1961, %v2029
      %v2062 = vadd.f32 %v1962, %v2030
      %v2063 = vadd.f32 %v1963, %v2031
      %v2064 = vadd.f32 %v1964, %v2032
      %v2065 = vadd.f32 %v1965, %v2033
      %v2066 = vadd.f32 %v1966, %v2034
      %v2067 = vadd.f32 %v1967, %v2035
      %v2068 = vadd.f32 %v1968, %v2036
      %v2069 = vadd.f32 %v1969, %v2037
      %v2070 = vadd.f32 %v1970, %v2038
      %v2071 = vadd.f32 %v1971, %v2039
      %v2072 = vadd.f32 %v1972, %v2040
      %v2073 = vadd.f32 %v1973, %v2041
      %v2074 = vadd.f32 %v1974, %v2042
      %v2075 = vadd.f32 %v1975, %v2043
      %v2076 = vadd.f32 %v1976, %v2044
      %v2077 = vadd.f32 %v1977, %v2045
      %v2078 = vadd.f32 %v1978, %v2046
      %v2079 = vadd.f32 %v1979, %v2047
      %v2080 = vadd.f32 %v1980, %v2048
      %v2081 = vadd.f32 %v1981, %v2049
      %v2082 = vadd.f32 %v1982, %v2050
      %v2083 = vadd.f32 %v1983, %v2051
      %v2084 = vadd.f32 %v1984, %v2052
      %v2085 = vadd.f32 %v1985, %v2053
      %v2086 = vadd.f32 %v1986, %v2054
      %v2087 = vadd.f32 %v1987, %v2055
      %v2088 = vadd.f32 %v1988, %v2056
      %s2089 = scalar_lea.vmem [#allocation2], 64
      %v2090 = vld [vmem:[%s2089 + $0x7] sm:$0xff]
      %v2091 = vld [vmem:[%s2089 + $0xf] sm:$0xff]
      %v2092 = vld [vmem:[%s2089 + $0x27] sm:$0xff]
      %v2093 = vld [vmem:[%s2089 + $0x2f] sm:$0xff]
      %v2094 = vld [vmem:[%s2089 + $0x47] sm:$0xff]
      %v2095 = vld [vmem:[%s2089 + $0x4f] sm:$0xff]
      %v2096 = vld [vmem:[%s2089 + $0x67] sm:$0xff]
      %v2097 = vld [vmem:[%s2089 + $0x6f] sm:$0xff]
      %v2098 = vld [vmem:[%s2089 + $0x87] sm:$0xff]
      %v2099 = vld [vmem:[%s2089 + $0x8f] sm:$0xff]
      %v2100 = vld [vmem:[%s2089 + $0xa7] sm:$0xff]
      %v2101 = vld [vmem:[%s2089 + $0xaf] sm:$0xff]
      %v2102 = vld [vmem:[%s2089 + $0xc7] sm:$0xff]
      %v2103 = vld [vmem:[%s2089 + $0xcf] sm:$0xff]
      %v2104 = vld [vmem:[%s2089 + $0xe7] sm:$0xff]
      %v2105 = vld [vmem:[%s2089 + $0xef] sm:$0xff]
      %v2106 = vld [vmem:[%s2089 + $0x107] sm:$0xff]
      %v2107 = vld [vmem:[%s2089 + $0x10f] sm:$0xff]
      %v2108 = vld [vmem:[%s2089 + $0x127] sm:$0xff]
      %v2109 = vld [vmem:[%s2089 + $0x12f] sm:$0xff]
      %v2110 = vld [vmem:[%s2089 + $0x147] sm:$0xff]
      %v2111 = vld [vmem:[%s2089 + $0x14f] sm:$0xff]
      %v2112 = vld [vmem:[%s2089 + $0x167] sm:$0xff]
      %v2113 = vld [vmem:[%s2089 + $0x16f] sm:$0xff]
      %v2114 = vld [vmem:[%s2089 + $0x187] sm:$0xff]
      %v2115 = vld [vmem:[%s2089 + $0x18f] sm:$0xff]
      %v2116 = vld [vmem:[%s2089 + $0x1a7] sm:$0xff]
      %v2117 = vld [vmem:[%s2089 + $0x1af] sm:$0xff]
      %v2118 = vld [vmem:[%s2089 + $0x1c7] sm:$0xff]
      %v2119 = vld [vmem:[%s2089 + $0x1cf] sm:$0xff]
      %v2120 = vld [vmem:[%s2089 + $0x1e7] sm:$0xff]
      %v2121 = vld [vmem:[%s2089 + $0x1ef] sm:$0xff]
      %v2122 = vlaneseq
      %v2123 = vshrl.u32 %v2122, 7
      %v2124 = vsub.s32 6, %v2123
      %v2125 = vrot.slane %v1519, %v2124
      %v2126 = vmul.f32 %v2090, %v2125
      %v2127 = vmul.f32 %v2091, %v2125
      %v2128 = vmul.f32 %v2092, %v2125
      %v2129 = vmul.f32 %v2093, %v2125
      %v2130 = vmul.f32 %v2094, %v2125
      %v2131 = vmul.f32 %v2095, %v2125
      %v2132 = vmul.f32 %v2096, %v2125
      %v2133 = vmul.f32 %v2097, %v2125
      %v2134 = vmul.f32 %v2098, %v2125
      %v2135 = vmul.f32 %v2099, %v2125
      %v2136 = vmul.f32 %v2100, %v2125
      %v2137 = vmul.f32 %v2101, %v2125
      %v2138 = vmul.f32 %v2102, %v2125
      %v2139 = vmul.f32 %v2103, %v2125
      %v2140 = vmul.f32 %v2104, %v2125
      %v2141 = vmul.f32 %v2105, %v2125
      %v2142 = vmul.f32 %v2106, %v2125
      %v2143 = vmul.f32 %v2107, %v2125
      %v2144 = vmul.f32 %v2108, %v2125
      %v2145 = vmul.f32 %v2109, %v2125
      %v2146 = vmul.f32 %v2110, %v2125
      %v2147 = vmul.f32 %v2111, %v2125
      %v2148 = vmul.f32 %v2112, %v2125
      %v2149 = vmul.f32 %v2113, %v2125
      %v2150 = vmul.f32 %v2114, %v2125
      %v2151 = vmul.f32 %v2115, %v2125
      %v2152 = vmul.f32 %v2116, %v2125
      %v2153 = vmul.f32 %v2117, %v2125
      %v2154 = vmul.f32 %v2118, %v2125
      %v2155 = vmul.f32 %v2119, %v2125
      %v2156 = vmul.f32 %v2120, %v2125
      %v2157 = vmul.f32 %v2121, %v2125
      %v2158 = vadd.f32 %v2057, %v2126
      %v2159 = vadd.f32 %v2058, %v2127
      %v2160 = vadd.f32 %v2059, %v2128
      %v2161 = vadd.f32 %v2060, %v2129
      %v2162 = vadd.f32 %v2061, %v2130
      %v2163 = vadd.f32 %v2062, %v2131
      %v2164 = vadd.f32 %v2063, %v2132
      %v2165 = vadd.f32 %v2064, %v2133
      %v2166 = vadd.f32 %v2065, %v2134
      %v2167 = vadd.f32 %v2066, %v2135
      %v2168 = vadd.f32 %v2067, %v2136
      %v2169 = vadd.f32 %v2068, %v2137
      %v2170 = vadd.f32 %v2069, %v2138
      %v2171 = vadd.f32 %v2070, %v2139
      %v2172 = vadd.f32 %v2071, %v2140
      %v2173 = vadd.f32 %v2072, %v2141
      %v2174 = vadd.f32 %v2073, %v2142
      %v2175 = vadd.f32 %v2074, %v2143
      %v2176 = vadd.f32 %v2075, %v2144
      %v2177 = vadd.f32 %v2076, %v2145
      %v2178 = vadd.f32 %v2077, %v2146
      %v2179 = vadd.f32 %v2078, %v2147
      %v2180 = vadd.f32 %v2079, %v2148
      %v2181 = vadd.f32 %v2080, %v2149
      %v2182 = vadd.f32 %v2081, %v2150
      %v2183 = vadd.f32 %v2082, %v2151
      %v2184 = vadd.f32 %v2083, %v2152
      %v2185 = vadd.f32 %v2084, %v2153
      %v2186 = vadd.f32 %v2085, %v2154
      %v2187 = vadd.f32 %v2086, %v2155
      %v2188 = vadd.f32 %v2087, %v2156
      %v2189 = vadd.f32 %v2088, %v2157
      %v2190 = vld [vmem:[%s2089 + $0x8] sm:$0xff]
      %v2191 = vld [vmem:[%s2089 + $0x10] sm:$0xff]
      %v2192 = vld [vmem:[%s2089 + $0x28] sm:$0xff]
      %v2193 = vld [vmem:[%s2089 + $0x30] sm:$0xff]
      %v2194 = vld [vmem:[%s2089 + $0x48] sm:$0xff]
      %v2195 = vld [vmem:[%s2089 + $0x50] sm:$0xff]
      %v2196 = vld [vmem:[%s2089 + $0x68] sm:$0xff]
      %v2197 = vld [vmem:[%s2089 + $0x70] sm:$0xff]
      %v2198 = vld [vmem:[%s2089 + $0x88] sm:$0xff]
      %v2199 = vld [vmem:[%s2089 + $0x90] sm:$0xff]
      %v2200 = vld [vmem:[%s2089 + $0xa8] sm:$0xff]
      %v2201 = vld [vmem:[%s2089 + $0xb0] sm:$0xff]
      %v2202 = vld [vmem:[%s2089 + $0xc8] sm:$0xff]
      %v2203 = vld [vmem:[%s2089 + $0xd0] sm:$0xff]
      %v2204 = vld [vmem:[%s2089 + $0xe8] sm:$0xff]
      %v2205 = vld [vmem:[%s2089 + $0xf0] sm:$0xff]
      %v2206 = vld [vmem:[%s2089 + $0x108] sm:$0xff]
      %v2207 = vld [vmem:[%s2089 + $0x110] sm:$0xff]
      %v2208 = vld [vmem:[%s2089 + $0x128] sm:$0xff]
      %v2209 = vld [vmem:[%s2089 + $0x130] sm:$0xff]
      %v2210 = vld [vmem:[%s2089 + $0x148] sm:$0xff]
      %v2211 = vld [vmem:[%s2089 + $0x150] sm:$0xff]
      %v2212 = vld [vmem:[%s2089 + $0x168] sm:$0xff]
      %v2213 = vld [vmem:[%s2089 + $0x170] sm:$0xff]
      %v2214 = vld [vmem:[%s2089 + $0x188] sm:$0xff]
      %v2215 = vld [vmem:[%s2089 + $0x190] sm:$0xff]
      %v2216 = vld [vmem:[%s2089 + $0x1a8] sm:$0xff]
      %v2217 = vld [vmem:[%s2089 + $0x1b0] sm:$0xff]
      %v2218 = vld [vmem:[%s2089 + $0x1c8] sm:$0xff]
      %v2219 = vld [vmem:[%s2089 + $0x1d0] sm:$0xff]
      %v2220 = vld [vmem:[%s2089 + $0x1e8] sm:$0xff]
      %v2221 = vld [vmem:[%s2089 + $0x1f0] sm:$0xff]
      %v2222 = vlaneseq
      %v2223 = vshrl.u32 %v2222, 7
      %v2224 = vsub.s32 7, %v2223
      %v2225 = vrot.slane %v1519, %v2224
      %v2226 = vmul.f32 %v2190, %v2225
      %v2227 = vmul.f32 %v2191, %v2225
      %v2228 = vmul.f32 %v2192, %v2225
      %v2229 = vmul.f32 %v2193, %v2225
      %v2230 = vmul.f32 %v2194, %v2225
      %v2231 = vmul.f32 %v2195, %v2225
      %v2232 = vmul.f32 %v2196, %v2225
      %v2233 = vmul.f32 %v2197, %v2225
      %v2234 = vmul.f32 %v2198, %v2225
      %v2235 = vmul.f32 %v2199, %v2225
      %v2236 = vmul.f32 %v2200, %v2225
      %v2237 = vmul.f32 %v2201, %v2225
      %v2238 = vmul.f32 %v2202, %v2225
      %v2239 = vmul.f32 %v2203, %v2225
      %v2240 = vmul.f32 %v2204, %v2225
      %v2241 = vmul.f32 %v2205, %v2225
      %v2242 = vmul.f32 %v2206, %v2225
      %v2243 = vmul.f32 %v2207, %v2225
      %v2244 = vmul.f32 %v2208, %v2225
      %v2245 = vmul.f32 %v2209, %v2225
      %v2246 = vmul.f32 %v2210, %v2225
      %v2247 = vmul.f32 %v2211, %v2225
      %v2248 = vmul.f32 %v2212, %v2225
      %v2249 = vmul.f32 %v2213, %v2225
      %v2250 = vmul.f32 %v2214, %v2225
      %v2251 = vmul.f32 %v2215, %v2225
      %v2252 = vmul.f32 %v2216, %v2225
      %v2253 = vmul.f32 %v2217, %v2225
      %v2254 = vmul.f32 %v2218, %v2225
      %v2255 = vmul.f32 %v2219, %v2225
      %v2256 = vmul.f32 %v2220, %v2225
      %v2257 = vmul.f32 %v2221, %v2225
      %v2258 = vadd.f32 %v2158, %v2226
      %v2259 = vadd.f32 %v2159, %v2227
      %v2260 = vadd.f32 %v2160, %v2228
      %v2261 = vadd.f32 %v2161, %v2229
      %v2262 = vadd.f32 %v2162, %v2230
      %v2263 = vadd.f32 %v2163, %v2231
      %v2264 = vadd.f32 %v2164, %v2232
      %v2265 = vadd.f32 %v2165, %v2233
      %v2266 = vadd.f32 %v2166, %v2234
      %v2267 = vadd.f32 %v2167, %v2235
      %v2268 = vadd.f32 %v2168, %v2236
      %v2269 = vadd.f32 %v2169, %v2237
      %v2270 = vadd.f32 %v2170, %v2238
      %v2271 = vadd.f32 %v2171, %v2239
      %v2272 = vadd.f32 %v2172, %v2240
      %v2273 = vadd.f32 %v2173, %v2241
      %v2274 = vadd.f32 %v2174, %v2242
      %v2275 = vadd.f32 %v2175, %v2243
      %v2276 = vadd.f32 %v2176, %v2244
      %v2277 = vadd.f32 %v2177, %v2245
      %v2278 = vadd.f32 %v2178, %v2246
      %v2279 = vadd.f32 %v2179, %v2247
      %v2280 = vadd.f32 %v2180, %v2248
      %v2281 = vadd.f32 %v2181, %v2249
      %v2282 = vadd.f32 %v2182, %v2250
      %v2283 = vadd.f32 %v2183, %v2251
      %v2284 = vadd.f32 %v2184, %v2252
      %v2285 = vadd.f32 %v2185, %v2253
      %v2286 = vadd.f32 %v2186, %v2254
      %v2287 = vadd.f32 %v2187, %v2255
      %v2288 = vadd.f32 %v2188, %v2256
      %v2289 = vadd.f32 %v2189, %v2257
      %v2290 = vld [vmem:[%s2089 + $0x9] sm:$0xff]
      %v2291 = vld [vmem:[%s2089 + $0x11] sm:$0xff]
      %v2292 = vld [vmem:[%s2089 + $0x29] sm:$0xff]
      %v2293 = vld [vmem:[%s2089 + $0x31] sm:$0xff]
      %v2294 = vld [vmem:[%s2089 + $0x49] sm:$0xff]
      %v2295 = vld [vmem:[%s2089 + $0x51] sm:$0xff]
      %v2296 = vld [vmem:[%s2089 + $0x69] sm:$0xff]
      %v2297 = vld [vmem:[%s2089 + $0x71] sm:$0xff]
      %v2298 = vld [vmem:[%s2089 + $0x89] sm:$0xff]
      %v2299 = vld [vmem:[%s2089 + $0x91] sm:$0xff]
      %v2300 = vld [vmem:[%s2089 + $0xa9] sm:$0xff]
      %v2301 = vld [vmem:[%s2089 + $0xb1] sm:$0xff]
      %v2302 = vld [vmem:[%s2089 + $0xc9] sm:$0xff]
      %v2303 = vld [vmem:[%s2089 + $0xd1] sm:$0xff]
      %v2304 = vld [vmem:[%s2089 + $0xe9] sm:$0xff]
      %v2305 = vld [vmem:[%s2089 + $0xf1] sm:$0xff]
      %v2306 = vld [vmem:[%s2089 + $0x109] sm:$0xff]
      %v2307 = vld [vmem:[%s2089 + $0x111] sm:$0xff]
      %v2308 = vld [vmem:[%s2089 + $0x129] sm:$0xff]
      %v2309 = vld [vmem:[%s2089 + $0x131] sm:$0xff]
      %v2310 = vld [vmem:[%s2089 + $0x149] sm:$0xff]
      %v2311 = vld [vmem:[%s2089 + $0x151] sm:$0xff]
      %v2312 = vld [vmem:[%s2089 + $0x169] sm:$0xff]
      %v2313 = vld [vmem:[%s2089 + $0x171] sm:$0xff]
      %v2314 = vld [vmem:[%s2089 + $0x189] sm:$0xff]
      %v2315 = vld [vmem:[%s2089 + $0x191] sm:$0xff]
      %v2316 = vld [vmem:[%s2089 + $0x1a9] sm:$0xff]
      %v2317 = vld [vmem:[%s2089 + $0x1b1] sm:$0xff]
      %v2318 = vld [vmem:[%s2089 + $0x1c9] sm:$0xff]
      %v2319 = vld [vmem:[%s2089 + $0x1d1] sm:$0xff]
      %v2320 = vld [vmem:[%s2089 + $0x1e9] sm:$0xff]
      %v2321 = vld [vmem:[%s2089 + $0x1f1] sm:$0xff]
      %v2322 = vlaneseq
      %v2323 = vshrl.u32 %v2322, 7
      %v2324 = vsub.s32 0, %v2323
      %v2325 = vrot.slane %v1520, %v2324
      %v2326 = vmul.f32 %v2290, %v2325
      %v2327 = vmul.f32 %v2291, %v2325
      %v2328 = vmul.f32 %v2292, %v2325
      %v2329 = vmul.f32 %v2293, %v2325
      %v2330 = vmul.f32 %v2294, %v2325
      %v2331 = vmul.f32 %v2295, %v2325
      %v2332 = vmul.f32 %v2296, %v2325
      %v2333 = vmul.f32 %v2297, %v2325
      %v2334 = vmul.f32 %v2298, %v2325
      %v2335 = vmul.f32 %v2299, %v2325
      %v2336 = vmul.f32 %v2300, %v2325
      %v2337 = vmul.f32 %v2301, %v2325
      %v2338 = vmul.f32 %v2302, %v2325
      %v2339 = vmul.f32 %v2303, %v2325
      %v2340 = vmul.f32 %v2304, %v2325
      %v2341 = vmul.f32 %v2305, %v2325
      %v2342 = vmul.f32 %v2306, %v2325
      %v2343 = vmul.f32 %v2307, %v2325
      %v2344 = vmul.f32 %v2308, %v2325
      %v2345 = vmul.f32 %v2309, %v2325
      %v2346 = vmul.f32 %v2310, %v2325
      %v2347 = vmul.f32 %v2311, %v2325
      %v2348 = vmul.f32 %v2312, %v2325
      %v2349 = vmul.f32 %v2313, %v2325
      %v2350 = vmul.f32 %v2314, %v2325
      %v2351 = vmul.f32 %v2315, %v2325
      %v2352 = vmul.f32 %v2316, %v2325
      %v2353 = vmul.f32 %v2317, %v2325
      %v2354 = vmul.f32 %v2318, %v2325
      %v2355 = vmul.f32 %v2319, %v2325
      %v2356 = vmul.f32 %v2320, %v2325
      %v2357 = vmul.f32 %v2321, %v2325
      %v2358 = vadd.f32 %v2258, %v2326
      %v2359 = vadd.f32 %v2259, %v2327
      %v2360 = vadd.f32 %v2260, %v2328
      %v2361 = vadd.f32 %v2261, %v2329
      %v2362 = vadd.f32 %v2262, %v2330
      %v2363 = vadd.f32 %v2263, %v2331
      %v2364 = vadd.f32 %v2264, %v2332
      %v2365 = vadd.f32 %v2265, %v2333
      %v2366 = vadd.f32 %v2266, %v2334
      %v2367 = vadd.f32 %v2267, %v2335
      %v2368 = vadd.f32 %v2268, %v2336
      %v2369 = vadd.f32 %v2269, %v2337
      %v2370 = vadd.f32 %v2270, %v2338
      %v2371 = vadd.f32 %v2271, %v2339
      %v2372 = vadd.f32 %v2272, %v2340
      %v2373 = vadd.f32 %v2273, %v2341
      %v2374 = vadd.f32 %v2274, %v2342
      %v2375 = vadd.f32 %v2275, %v2343
      %v2376 = vadd.f32 %v2276, %v2344
      %v2377 = vadd.f32 %v2277, %v2345
      %v2378 = vadd.f32 %v2278, %v2346
      %v2379 = vadd.f32 %v2279, %v2347
      %v2380 = vadd.f32 %v2280, %v2348
      %v2381 = vadd.f32 %v2281, %v2349
      %v2382 = vadd.f32 %v2282, %v2350
      %v2383 = vadd.f32 %v2283, %v2351
      %v2384 = vadd.f32 %v2284, %v2352
      %v2385 = vadd.f32 %v2285, %v2353
      %v2386 = vadd.f32 %v2286, %v2354
      %v2387 = vadd.f32 %v2287, %v2355
      %v2388 = vadd.f32 %v2288, %v2356
      %v2389 = vadd.f32 %v2289, %v2357
      %v2390 = vld [vmem:[%s6] sm:$0x1]
      %v2392 = vlaneseq
      %v2393 = vshrl.u32 %v2392, 7
      %v2394 = vsub.s32 0, %v2393
      %v2395 = vrot.slane %v2390, %v2394
      %v2397 = vmul.f32 %v2358, %v2395
      %v2398 = vmul.f32 %v2359, %v2395
      %v2399 = vmul.f32 %v2360, %v2395
      %v2400 = vmul.f32 %v2361, %v2395
      %v2401 = vmul.f32 %v2362, %v2395
      %v2402 = vmul.f32 %v2363, %v2395
      %v2403 = vmul.f32 %v2364, %v2395
      %v2404 = vmul.f32 %v2365, %v2395
      %v2405 = vmul.f32 %v2366, %v2395
      %v2406 = vmul.f32 %v2367, %v2395
      %v2407 = vmul.f32 %v2368, %v2395
      %v2408 = vmul.f32 %v2369, %v2395
      %v2409 = vmul.f32 %v2370, %v2395
      %v2410 = vmul.f32 %v2371, %v2395
      %v2411 = vmul.f32 %v2372, %v2395
      %v2412 = vmul.f32 %v2373, %v2395
      %v2413 = vmul.f32 %v2374, %v2395
      %v2414 = vmul.f32 %v2375, %v2395
      %v2415 = vmul.f32 %v2376, %v2395
      %v2416 = vmul.f32 %v2377, %v2395
      %v2417 = vmul.f32 %v2378, %v2395
      %v2418 = vmul.f32 %v2379, %v2395
      %v2419 = vmul.f32 %v2380, %v2395
      %v2420 = vmul.f32 %v2381, %v2395
      %v2421 = vmul.f32 %v2382, %v2395
      %v2422 = vmul.f32 %v2383, %v2395
      %v2423 = vmul.f32 %v2384, %v2395
      %v2424 = vmul.f32 %v2385, %v2395
      %v2425 = vmul.f32 %v2386, %v2395
      %v2426 = vmul.f32 %v2387, %v2395
      %v2427 = vmul.f32 %v2388, %v2395
      %v2428 = vmul.f32 %v2389, %v2395
      %v2429 = vld [vmem:[%s7] sm:$0x1]
      %v2431 = vlaneseq
      %v2432 = vshrl.u32 %v2431, 7
      %v2433 = vsub.s32 0, %v2432
      %v2434 = vrot.slane %v2429, %v2433
      %v2436 = vadd.f32 %v2397, %v2434
      %v2437 = vadd.f32 %v2398, %v2434
      %v2438 = vadd.f32 %v2399, %v2434
      %v2439 = vadd.f32 %v2400, %v2434
      %v2440 = vadd.f32 %v2401, %v2434
      %v2441 = vadd.f32 %v2402, %v2434
      %v2442 = vadd.f32 %v2403, %v2434
      %v2443 = vadd.f32 %v2404, %v2434
      %v2444 = vadd.f32 %v2405, %v2434
      %v2445 = vadd.f32 %v2406, %v2434
      %v2446 = vadd.f32 %v2407, %v2434
      %v2447 = vadd.f32 %v2408, %v2434
      %v2448 = vadd.f32 %v2409, %v2434
      %v2449 = vadd.f32 %v2410, %v2434
      %v2450 = vadd.f32 %v2411, %v2434
      %v2451 = vadd.f32 %v2412, %v2434
      %v2452 = vadd.f32 %v2413, %v2434
      %v2453 = vadd.f32 %v2414, %v2434
      %v2454 = vadd.f32 %v2415, %v2434
      %v2455 = vadd.f32 %v2416, %v2434
      %v2456 = vadd.f32 %v2417, %v2434
      %v2457 = vadd.f32 %v2418, %v2434
      %v2458 = vadd.f32 %v2419, %v2434
      %v2459 = vadd.f32 %v2420, %v2434
      %v2460 = vadd.f32 %v2421, %v2434
      %v2461 = vadd.f32 %v2422, %v2434
      %v2462 = vadd.f32 %v2423, %v2434
      %v2463 = vadd.f32 %v2424, %v2434
      %v2464 = vadd.f32 %v2425, %v2434
      %v2465 = vadd.f32 %v2426, %v2434
      %v2466 = vadd.f32 %v2427, %v2434
      %v2467 = vadd.f32 %v2428, %v2434
      %vm2468 = vcmp.gt.f32.partialorder %v2436, 0.0
      %vm2469 = vcmp.gt.f32.partialorder %v2437, 0.0
      %vm2470 = vcmp.gt.f32.partialorder %v2438, 0.0
      %vm2471 = vcmp.gt.f32.partialorder %v2439, 0.0
      %vm2472 = vcmp.gt.f32.partialorder %v2440, 0.0
      %vm2473 = vcmp.gt.f32.partialorder %v2441, 0.0
      %vm2474 = vcmp.gt.f32.partialorder %v2442, 0.0
      %vm2475 = vcmp.gt.f32.partialorder %v2443, 0.0
      %vm2476 = vcmp.gt.f32.partialorder %v2444, 0.0
      %vm2477 = vcmp.gt.f32.partialorder %v2445, 0.0
      %vm2478 = vcmp.gt.f32.partialorder %v2446, 0.0
      %vm2479 = vcmp.gt.f32.partialorder %v2447, 0.0
      %vm2480 = vcmp.gt.f32.partialorder %v2448, 0.0
      %vm2481 = vcmp.gt.f32.partialorder %v2449, 0.0
      %vm2482 = vcmp.gt.f32.partialorder %v2450, 0.0
      %vm2483 = vcmp.gt.f32.partialorder %v2451, 0.0
      %vm2484 = vcmp.gt.f32.partialorder %v2452, 0.0
      %vm2485 = vcmp.gt.f32.partialorder %v2453, 0.0
      %vm2486 = vcmp.gt.f32.partialorder %v2454, 0.0
      %vm2487 = vcmp.gt.f32.partialorder %v2455, 0.0
      %vm2488 = vcmp.gt.f32.partialorder %v2456, 0.0
      %vm2489 = vcmp.gt.f32.partialorder %v2457, 0.0
      %vm2490 = vcmp.gt.f32.partialorder %v2458, 0.0
      %vm2491 = vcmp.gt.f32.partialorder %v2459, 0.0
      %vm2492 = vcmp.gt.f32.partialorder %v2460, 0.0
      %vm2493 = vcmp.gt.f32.partialorder %v2461, 0.0
      %vm2494 = vcmp.gt.f32.partialorder %v2462, 0.0
      %vm2495 = vcmp.gt.f32.partialorder %v2463, 0.0
      %vm2496 = vcmp.gt.f32.partialorder %v2464, 0.0
      %vm2497 = vcmp.gt.f32.partialorder %v2465, 0.0
      %vm2498 = vcmp.gt.f32.partialorder %v2466, 0.0
      %vm2499 = vcmp.gt.f32.partialorder %v2467, 0.0
      %v2500 = vld [vmem:[%s8] sm:$0x1]
      %v2502 = vlaneseq
      %v2503 = vshrl.u32 %v2502, 7
      %v2504 = vsub.s32 0, %v2503
      %v2505 = vrot.slane %v2500, %v2504
      %v2507 = vmul.f32 %v2436, %v2505
      %v2508 = vmul.f32 %v2437, %v2505
      %v2509 = vmul.f32 %v2438, %v2505
      %v2510 = vmul.f32 %v2439, %v2505
      %v2511 = vmul.f32 %v2440, %v2505
      %v2512 = vmul.f32 %v2441, %v2505
      %v2513 = vmul.f32 %v2442, %v2505
      %v2514 = vmul.f32 %v2443, %v2505
      %v2515 = vmul.f32 %v2444, %v2505
      %v2516 = vmul.f32 %v2445, %v2505
      %v2517 = vmul.f32 %v2446, %v2505
      %v2518 = vmul.f32 %v2447, %v2505
      %v2519 = vmul.f32 %v2448, %v2505
      %v2520 = vmul.f32 %v2449, %v2505
      %v2521 = vmul.f32 %v2450, %v2505
      %v2522 = vmul.f32 %v2451, %v2505
      %v2523 = vmul.f32 %v2452, %v2505
      %v2524 = vmul.f32 %v2453, %v2505
      %v2525 = vmul.f32 %v2454, %v2505
      %v2526 = vmul.f32 %v2455, %v2505
      %v2527 = vmul.f32 %v2456, %v2505
      %v2528 = vmul.f32 %v2457, %v2505
      %v2529 = vmul.f32 %v2458, %v2505
      %v2530 = vmul.f32 %v2459, %v2505
      %v2531 = vmul.f32 %v2460, %v2505
      %v2532 = vmul.f32 %v2461, %v2505
      %v2533 = vmul.f32 %v2462, %v2505
      %v2534 = vmul.f32 %v2463, %v2505
      %v2535 = vmul.f32 %v2464, %v2505
      %v2536 = vmul.f32 %v2465, %v2505
      %v2537 = vmul.f32 %v2466, %v2505
      %v2538 = vmul.f32 %v2467, %v2505
      %v2539 = vsel %vm2468, %v2436, %v2507
      %v2540 = vsel %vm2469, %v2437, %v2508
      %v2541 = vsel %vm2470, %v2438, %v2509
      %v2542 = vsel %vm2471, %v2439, %v2510
      %v2543 = vsel %vm2472, %v2440, %v2511
      %v2544 = vsel %vm2473, %v2441, %v2512
      %v2545 = vsel %vm2474, %v2442, %v2513
      %v2546 = vsel %vm2475, %v2443, %v2514
      %v2547 = vsel %vm2476, %v2444, %v2515
      %v2548 = vsel %vm2477, %v2445, %v2516
      %v2549 = vsel %vm2478, %v2446, %v2517
      %v2550 = vsel %vm2479, %v2447, %v2518
      %v2551 = vsel %vm2480, %v2448, %v2519
      %v2552 = vsel %vm2481, %v2449, %v2520
      %v2553 = vsel %vm2482, %v2450, %v2521
      %v2554 = vsel %vm2483, %v2451, %v2522
      %v2555 = vsel %vm2484, %v2452, %v2523
      %v2556 = vsel %vm2485, %v2453, %v2524
      %v2557 = vsel %vm2486, %v2454, %v2525
      %v2558 = vsel %vm2487, %v2455, %v2526
      %v2559 = vsel %vm2488, %v2456, %v2527
      %v2560 = vsel %vm2489, %v2457, %v2528
      %v2561 = vsel %vm2490, %v2458, %v2529
      %v2562 = vsel %vm2491, %v2459, %v2530
      %v2563 = vsel %vm2492, %v2460, %v2531
      %v2564 = vsel %vm2493, %v2461, %v2532
      %v2565 = vsel %vm2494, %v2462, %v2533
      %v2566 = vsel %vm2495, %v2463, %v2534
      %v2567 = vsel %vm2496, %v2464, %v2535
      %v2568 = vsel %vm2497, %v2465, %v2536
      %v2569 = vsel %vm2498, %v2466, %v2537
      %v2570 = vsel %vm2499, %v2467, %v2538
      %v2571 = vld [vmem:[%s9] sm:$0xf]
      %v2572 = vld [vmem:[%s9 + $0x4] sm:$0xf]
      %v2573 = vld [vmem:[%s9 + $0x8] sm:$0xf]
      %v2574 = vld [vmem:[%s9 + $0xc] sm:$0xf]
      %v2575 = vld [vmem:[%s9 + $0x10] sm:$0xf]
      %v2576 = vld [vmem:[%s9 + $0x14] sm:$0xf]
      %v2577 = vld [vmem:[%s9 + $0x18] sm:$0xf]
      %v2578 = vld [vmem:[%s9 + $0x1c] sm:$0xf]
      %v2579 = vld [vmem:[%s9 + $0x20] sm:$0xf]
      %v2580 = vld [vmem:[%s9 + $0x24] sm:$0xf]
      %v2581 = vld [vmem:[%s9 + $0x28] sm:$0xf]
      %v2582 = vld [vmem:[%s9 + $0x2c] sm:$0xf]
      %v2583 = vld [vmem:[%s9 + $0x30] sm:$0xf]
      %v2584 = vld [vmem:[%s9 + $0x34] sm:$0xf]
      %v2585 = vld [vmem:[%s9 + $0x38] sm:$0xf]
      %v2586 = vld [vmem:[%s9 + $0x3c] sm:$0xf]
      %v2587 = vunpack.c.l.bf16 %v2571
      %v2588 = vunpack.c.l.bf16 %v2572
      %v2589 = vunpack.c.l.bf16 %v2573
      %v2590 = vunpack.c.l.bf16 %v2574
      %v2591 = vunpack.c.l.bf16 %v2575
      %v2592 = vunpack.c.l.bf16 %v2576
      %v2593 = vunpack.c.l.bf16 %v2577
      %v2594 = vunpack.c.l.bf16 %v2578
      %v2595 = vunpack.c.l.bf16 %v2579
      %v2596 = vunpack.c.l.bf16 %v2580
      %v2597 = vunpack.c.l.bf16 %v2581
      %v2598 = vunpack.c.l.bf16 %v2582
      %v2599 = vunpack.c.l.bf16 %v2583
      %v2600 = vunpack.c.l.bf16 %v2584
      %v2601 = vunpack.c.l.bf16 %v2585
      %v2602 = vunpack.c.l.bf16 %v2586
      %2603 = vmatprep.subr.mxu0 0.0
      %2604 = vmatpush1.msra.mxu0 %v2587
      %2605 = vmatprep.subr.mxu0 0.0
      %2606 = vmatpush1.msra.mxu0 %v2588
      %2607 = vmatprep.subr.mxu0 0.0
      %2608 = vmatpush1.msra.mxu0 %v2589
      %2609 = vmatprep.subr.mxu0 0.0
      %2610 = vmatpush1.msra.mxu0 %v2590
      %2611 = vmatprep.subr.mxu0 0.0
      %2612 = vmatpush1.msra.mxu0 %v2591
      %2613 = vmatprep.subr.mxu0 0.0
      %2614 = vmatpush1.msra.mxu0 %v2592
      %2615 = vmatprep.subr.mxu0 0.0
      %2616 = vmatpush1.msra.mxu0 %v2593
      %2617 = vmatprep.subr.mxu0 0.0
      %2618 = vmatpush1.msra.mxu0 %v2594
      %2619 = vmatprep.subr.mxu0 0.0
      %2620 = vmatpush1.msra.mxu0 %v2595
      %2621 = vmatprep.subr.mxu0 0.0
      %2622 = vmatpush1.msra.mxu0 %v2596
      %2623 = vmatprep.subr.mxu0 0.0
      %2624 = vmatpush1.msra.mxu0 %v2597
      %2625 = vmatprep.subr.mxu0 0.0
      %2626 = vmatpush1.msra.mxu0 %v2598
      %2627 = vmatprep.subr.mxu0 0.0
      %2628 = vmatpush1.msra.mxu0 %v2599
      %2629 = vmatprep.subr.mxu0 0.0
      %2630 = vmatpush1.msra.mxu0 %v2600
      %2631 = vmatprep.subr.mxu0 0.0
      %2632 = vmatpush1.msra.mxu0 %v2601
      %2633 = vmatprep.subr.mxu0 0.0
      %2634 = vmatpush1.msra.mxu0 %v2602
      %2635 = vmatprep.subr.mxu0 0.0
      %2636 = vmatpush1.msra.mxu0 0.0
      %2637 = vmatprep.subr.mxu0 0.0
      %2638 = vmatpush1.msra.mxu0 0.0
      %2639 = vmatprep.subr.mxu0 0.0
      %2640 = vmatpush1.msra.mxu0 0.0
      %2641 = vmatprep.subr.mxu0 0.0
      %2642 = vmatpush1.msra.mxu0 0.0
      %2643 = vmatprep.subr.mxu0 0.0
      %2644 = vmatpush1.msra.mxu0 0.0
      %2645 = vmatprep.subr.mxu0 0.0
      %2646 = vmatpush1.msra.mxu0 0.0
      %2647 = vmatprep.subr.mxu0 0.0
      %2648 = vmatpush1.msra.mxu0 0.0
      %2649 = vmatprep.subr.mxu0 0.0
      %2650 = vmatpush1.msra.mxu0 0.0
      %2651 = vmatprep.subr.mxu0 0.0
      %2652 = vmatpush1.msra.mxu0 0.0
      %2653 = vmatprep.subr.mxu0 0.0
      %2654 = vmatpush1.msra.mxu0 0.0
      %2655 = vmatprep.subr.mxu0 0.0
      %2656 = vmatpush1.msra.mxu0 0.0
      %2657 = vmatprep.subr.mxu0 0.0
      %2658 = vmatpush1.msra.mxu0 0.0
      %2659 = vmatprep.subr.mxu0 0.0
      %2660 = vmatpush1.msra.mxu0 0.0
      %2661 = vmatprep.subr.mxu0 0.0
      %2662 = vmatpush1.msra.mxu0 0.0
      %2663 = vmatprep.subr.mxu0 0.0
      %2664 = vmatpush1.msra.mxu0 0.0
      %2665 = vmatprep.subr.mxu0 0.0
      %2666 = vmatpush1.msra.mxu0 0.0
      %2667 = vmatprep.mubr.f32.mxu0 0.0
      %2668 = vmatmul.mubr.f32.gmra.mrb[0].mxu0 %v2539
      %v2669 = vpop.f32.mrb[0].mxu0
      %v2670 = vadd.f32 0.0, %v2669
      %v2671 = vpop.f32.mrb[0].mxu0
      %2672 = vmatprep.mubr.f32.mxu0 0.0
      %2673 = vmatmul.mubr.f32.gmra.mrb[0].mxu0 %v2540
      %v2674 = vpop.f32.mrb[0].mxu0
      %v2675 = vadd.f32 0.0, %v2674
      %v2676 = vpop.f32.mrb[0].mxu0
      %2677 = vmatprep.mubr.f32.mxu0 0.0
      %2678 = vmatmul.mubr.f32.gmra.mrb[0].mxu0 %v2541
      %v2679 = vpop.f32.mrb[0].mxu0
      %v2680 = vadd.f32 0.0, %v2679
      %v2681 = vpop.f32.mrb[0].mxu0
      %2682 = vmatprep.mubr.f32.mxu0 0.0
      %2683 = vmatmul.mubr.f32.gmra.mrb[0].mxu0 %v2542
      %v2684 = vpop.f32.mrb[0].mxu0
      %v2685 = vadd.f32 0.0, %v2684
      %v2686 = vpop.f32.mrb[0].mxu0
      %2687 = vmatprep.mubr.f32.mxu0 0.0
      %2688 = vmatmul.mubr.f32.gmra.mrb[0].mxu0 %v2543
      %v2689 = vpop.f32.mrb[0].mxu0
      %v2690 = vadd.f32 0.0, %v2689
      %v2691 = vpop.f32.mrb[0].mxu0
      %2692 = vmatprep.mubr.f32.mxu0 0.0
      %2693 = vmatmul.mubr.f32.gmra.mrb[0].mxu0 %v2544
      %v2694 = vpop.f32.mrb[0].mxu0
      %v2695 = vadd.f32 0.0, %v2694
      %v2696 = vpop.f32.mrb[0].mxu0
      %2697 = vmatprep.mubr.f32.mxu0 0.0
      %2698 = vmatmul.mubr.f32.gmra.mrb[0].mxu0 %v2545
      %v2699 = vpop.f32.mrb[0].mxu0
      %v2700 = vadd.f32 0.0, %v2699
      %v2701 = vpop.f32.mrb[0].mxu0
      %2702 = vmatprep.mubr.f32.mxu0 0.0
      %2703 = vmatmul.mubr.f32.gmra.mrb[0].mxu0 %v2546
      %v2704 = vpop.f32.mrb[0].mxu0
      %v2705 = vadd.f32 0.0, %v2704
      %v2706 = vpop.f32.mrb[0].mxu0
      %2707 = vmatprep.mubr.f32.mxu0 0.0
      %2708 = vmatmul.mubr.f32.gmra.mrb[0].mxu0 %v2547
      %v2709 = vpop.f32.mrb[0].mxu0
      %v2710 = vadd.f32 0.0, %v2709
      %v2711 = vpop.f32.mrb[0].mxu0
      %2712 = vmatprep.mubr.f32.mxu0 0.0
      %2713 = vmatmul.mubr.f32.gmra.mrb[0].mxu0 %v2548
      %v2714 = vpop.f32.mrb[0].mxu0
      %v2715 = vadd.f32 0.0, %v2714
      %v2716 = vpop.f32.mrb[0].mxu0
      %2717 = vmatprep.mubr.f32.mxu0 0.0
      %2718 = vmatmul.mubr.f32.gmra.mrb[0].mxu0 %v2549
      %v2719 = vpop.f32.mrb[0].mxu0
      %v2720 = vadd.f32 0.0, %v2719
      %v2721 = vpop.f32.mrb[0].mxu0
      %2722 = vmatprep.mubr.f32.mxu0 0.0
      %2723 = vmatmul.mubr.f32.gmra.mrb[0].mxu0 %v2550
      %v2724 = vpop.f32.mrb[0].mxu0
      %v2725 = vadd.f32 0.0, %v2724
      %v2726 = vpop.f32.mrb[0].mxu0
      %2727 = vmatprep.mubr.f32.mxu0 0.0
      %2728 = vmatmul.mubr.f32.gmra.mrb[0].mxu0 %v2551
      %v2729 = vpop.f32.mrb[0].mxu0
      %v2730 = vadd.f32 0.0, %v2729
      %v2731 = vpop.f32.mrb[0].mxu0
      %2732 = vmatprep.mubr.f32.mxu0 0.0
      %2733 = vmatmul.mubr.f32.gmra.mrb[0].mxu0 %v2552
      %v2734 = vpop.f32.mrb[0].mxu0
      %v2735 = vadd.f32 0.0, %v2734
      %v2736 = vpop.f32.mrb[0].mxu0
      %2737 = vmatprep.mubr.f32.mxu0 0.0
      %2738 = vmatmul.mubr.f32.gmra.mrb[0].mxu0 %v2553
      %v2739 = vpop.f32.mrb[0].mxu0
      %v2740 = vadd.f32 0.0, %v2739
      %v2741 = vpop.f32.mrb[0].mxu0
      %2742 = vmatprep.mubr.f32.mxu0 0.0
      %2743 = vmatmul.mubr.f32.gmra.mrb[0].mxu0 %v2554
      %v2744 = vpop.f32.mrb[0].mxu0
      %v2745 = vadd.f32 0.0, %v2744
      %v2746 = vpop.f32.mrb[0].mxu0
      %2747 = vmatprep.mubr.f32.mxu0 0.0
      %2748 = vmatmul.mubr.f32.gmra.mrb[0].mxu0 %v2555
      %v2749 = vpop.f32.mrb[0].mxu0
      %v2750 = vadd.f32 0.0, %v2749
      %v2751 = vpop.f32.mrb[0].mxu0
      %2752 = vmatprep.mubr.f32.mxu0 0.0
      %2753 = vmatmul.mubr.f32.gmra.mrb[0].mxu0 %v2556
      %v2754 = vpop.f32.mrb[0].mxu0
      %v2755 = vadd.f32 0.0, %v2754
      %v2756 = vpop.f32.mrb[0].mxu0
      %2757 = vmatprep.mubr.f32.mxu0 0.0
      %2758 = vmatmul.mubr.f32.gmra.mrb[0].mxu0 %v2557
      %v2759 = vpop.f32.mrb[0].mxu0
      %v2760 = vadd.f32 0.0, %v2759
      %v2761 = vpop.f32.mrb[0].mxu0
      %2762 = vmatprep.mubr.f32.mxu0 0.0
      %2763 = vmatmul.mubr.f32.gmra.mrb[0].mxu0 %v2558
      %v2764 = vpop.f32.mrb[0].mxu0
      %v2765 = vadd.f32 0.0, %v2764
      %v2766 = vpop.f32.mrb[0].mxu0
      %2767 = vmatprep.mubr.f32.mxu0 0.0
      %2768 = vmatmul.mubr.f32.gmra.mrb[0].mxu0 %v2559
      %v2769 = vpop.f32.mrb[0].mxu0
      %v2770 = vadd.f32 0.0, %v2769
      %v2771 = vpop.f32.mrb[0].mxu0
      %2772 = vmatprep.mubr.f32.mxu0 0.0
      %2773 = vmatmul.mubr.f32.gmra.mrb[0].mxu0 %v2560
      %v2774 = vpop.f32.mrb[0].mxu0
      %v2775 = vadd.f32 0.0, %v2774
      %v2776 = vpop.f32.mrb[0].mxu0
      %2777 = vmatprep.mubr.f32.mxu0 0.0
      %2778 = vmatmul.mubr.f32.gmra.mrb[0].mxu0 %v2561
      %v2779 = vpop.f32.mrb[0].mxu0
      %v2780 = vadd.f32 0.0, %v2779
      %v2781 = vpop.f32.mrb[0].mxu0
      %2782 = vmatprep.mubr.f32.mxu0 0.0
      %2783 = vmatmul.mubr.f32.gmra.mrb[0].mxu0 %v2562
      %v2784 = vpop.f32.mrb[0].mxu0
      %v2785 = vadd.f32 0.0, %v2784
      %v2786 = vpop.f32.mrb[0].mxu0
      %2787 = vmatprep.mubr.f32.mxu0 0.0
      %2788 = vmatmul.mubr.f32.gmra.mrb[0].mxu0 %v2563
      %v2789 = vpop.f32.mrb[0].mxu0
      %v2790 = vadd.f32 0.0, %v2789
      %v2791 = vpop.f32.mrb[0].mxu0
      %2792 = vmatprep.mubr.f32.mxu0 0.0
      %2793 = vmatmul.mubr.f32.gmra.mrb[0].mxu0 %v2564
      %v2794 = vpop.f32.mrb[0].mxu0
      %v2795 = vadd.f32 0.0, %v2794
      %v2796 = vpop.f32.mrb[0].mxu0
      %2797 = vmatprep.mubr.f32.mxu0 0.0
      %2798 = vmatmul.mubr.f32.gmra.mrb[0].mxu0 %v2565
      %v2799 = vpop.f32.mrb[0].mxu0
      %v2800 = vadd.f32 0.0, %v2799
      %v2801 = vpop.f32.mrb[0].mxu0
      %2802 = vmatprep.mubr.f32.mxu0 0.0
      %2803 = vmatmul.mubr.f32.gmra.mrb[0].mxu0 %v2566
      %v2804 = vpop.f32.mrb[0].mxu0
      %v2805 = vadd.f32 0.0, %v2804
      %v2806 = vpop.f32.mrb[0].mxu0
      %2807 = vmatprep.mubr.f32.mxu0 0.0
      %2808 = vmatmul.mubr.f32.gmra.mrb[0].mxu0 %v2567
      %v2809 = vpop.f32.mrb[0].mxu0
      %v2810 = vadd.f32 0.0, %v2809
      %v2811 = vpop.f32.mrb[0].mxu0
      %2812 = vmatprep.mubr.f32.mxu0 0.0
      %2813 = vmatmul.mubr.f32.gmra.mrb[0].mxu0 %v2568
      %v2814 = vpop.f32.mrb[0].mxu0
      %v2815 = vadd.f32 0.0, %v2814
      %v2816 = vpop.f32.mrb[0].mxu0
      %2817 = vmatprep.mubr.f32.mxu0 0.0
      %2818 = vmatmul.mubr.f32.gmra.mrb[0].mxu0 %v2569
      %v2819 = vpop.f32.mrb[0].mxu0
      %v2820 = vadd.f32 0.0, %v2819
      %v2821 = vpop.f32.mrb[0].mxu0
      %2822 = vmatprep.mubr.f32.mxu0 0.0
      %2823 = vmatmul.mubr.f32.gmra.mrb[0].mxu0 %v2570
      %v2824 = vpop.f32.mrb[0].mxu0
      %v2825 = vadd.f32 0.0, %v2824
      %v2826 = vpop.f32.mrb[0].mxu0
      %2827 = vdwg.mxu0
      %v2828 = vld [vmem:[%s10] sm:$0x1]
      %v2830 = vlaneseq
      %v2831 = vshrl.u32 %v2830, 7
      %v2832 = vsub.s32 0, %v2831
      %v2833 = vrot.slane %v2828, %v2832
      %v2835 = vmul.f32 %v2670, %v2833
      %v2836 = vmul.f32 %v2675, %v2833
      %v2837 = vmul.f32 %v2680, %v2833
      %v2838 = vmul.f32 %v2685, %v2833
      %v2839 = vmul.f32 %v2690, %v2833
      %v2840 = vmul.f32 %v2695, %v2833
      %v2841 = vmul.f32 %v2700, %v2833
      %v2842 = vmul.f32 %v2705, %v2833
      %v2843 = vmul.f32 %v2710, %v2833
      %v2844 = vmul.f32 %v2715, %v2833
      %v2845 = vmul.f32 %v2720, %v2833
      %v2846 = vmul.f32 %v2725, %v2833
      %v2847 = vmul.f32 %v2730, %v2833
      %v2848 = vmul.f32 %v2735, %v2833
      %v2849 = vmul.f32 %v2740, %v2833
      %v2850 = vmul.f32 %v2745, %v2833
      %v2851 = vmul.f32 %v2750, %v2833
      %v2852 = vmul.f32 %v2755, %v2833
      %v2853 = vmul.f32 %v2760, %v2833
      %v2854 = vmul.f32 %v2765, %v2833
      %v2855 = vmul.f32 %v2770, %v2833
      %v2856 = vmul.f32 %v2775, %v2833
      %v2857 = vmul.f32 %v2780, %v2833
      %v2858 = vmul.f32 %v2785, %v2833
      %v2859 = vmul.f32 %v2790, %v2833
      %v2860 = vmul.f32 %v2795, %v2833
      %v2861 = vmul.f32 %v2800, %v2833
      %v2862 = vmul.f32 %v2805, %v2833
      %v2863 = vmul.f32 %v2810, %v2833
      %v2864 = vmul.f32 %v2815, %v2833
      %v2865 = vmul.f32 %v2820, %v2833
      %v2866 = vmul.f32 %v2825, %v2833
      %v2867 = vld [vmem:[%s11] sm:$0x1]
      %v2869 = vlaneseq
      %v2870 = vshrl.u32 %v2869, 7
      %v2871 = vsub.s32 0, %v2870
      %v2872 = vrot.slane %v2867, %v2871
      %v2874 = vadd.f32 %v2835, %v2872
      %v2875 = vadd.f32 %v2836, %v2872
      %v2876 = vadd.f32 %v2837, %v2872
      %v2877 = vadd.f32 %v2838, %v2872
      %v2878 = vadd.f32 %v2839, %v2872
      %v2879 = vadd.f32 %v2840, %v2872
      %v2880 = vadd.f32 %v2841, %v2872
      %v2881 = vadd.f32 %v2842, %v2872
      %v2882 = vadd.f32 %v2843, %v2872
      %v2883 = vadd.f32 %v2844, %v2872
      %v2884 = vadd.f32 %v2845, %v2872
      %v2885 = vadd.f32 %v2846, %v2872
      %v2886 = vadd.f32 %v2847, %v2872
      %v2887 = vadd.f32 %v2848, %v2872
      %v2888 = vadd.f32 %v2849, %v2872
      %v2889 = vadd.f32 %v2850, %v2872
      %v2890 = vadd.f32 %v2851, %v2872
      %v2891 = vadd.f32 %v2852, %v2872
      %v2892 = vadd.f32 %v2853, %v2872
      %v2893 = vadd.f32 %v2854, %v2872
      %v2894 = vadd.f32 %v2855, %v2872
      %v2895 = vadd.f32 %v2856, %v2872
      %v2896 = vadd.f32 %v2857, %v2872
      %v2897 = vadd.f32 %v2858, %v2872
      %v2898 = vadd.f32 %v2859, %v2872
      %v2899 = vadd.f32 %v2860, %v2872
      %v2900 = vadd.f32 %v2861, %v2872
      %v2901 = vadd.f32 %v2862, %v2872
      %v2902 = vadd.f32 %v2863, %v2872
      %v2903 = vadd.f32 %v2864, %v2872
      %v2904 = vadd.f32 %v2865, %v2872
      %v2905 = vadd.f32 %v2866, %v2872
      %v2906 = vadd.f32 %v2874, %v446
      %v2907 = vadd.f32 %v2875, %v447
      %v2908 = vadd.f32 %v2876, %v448
      %v2909 = vadd.f32 %v2877, %v449
      %v2910 = vadd.f32 %v2878, %v450
      %v2911 = vadd.f32 %v2879, %v451
      %v2912 = vadd.f32 %v2880, %v452
      %v2913 = vadd.f32 %v2881, %v453
      %v2914 = vadd.f32 %v2882, %v454
      %v2915 = vadd.f32 %v2883, %v455
      %v2916 = vadd.f32 %v2884, %v456
      %v2917 = vadd.f32 %v2885, %v457
      %v2918 = vadd.f32 %v2886, %v458
      %v2919 = vadd.f32 %v2887, %v459
      %v2920 = vadd.f32 %v2888, %v460
      %v2921 = vadd.f32 %v2889, %v461
      %v2922 = vadd.f32 %v2890, %v462
      %v2923 = vadd.f32 %v2891, %v463
      %v2924 = vadd.f32 %v2892, %v464
      %v2925 = vadd.f32 %v2893, %v465
      %v2926 = vadd.f32 %v2894, %v466
      %v2927 = vadd.f32 %v2895, %v467
      %v2928 = vadd.f32 %v2896, %v468
      %v2929 = vadd.f32 %v2897, %v469
      %v2930 = vadd.f32 %v2898, %v470
      %v2931 = vadd.f32 %v2899, %v471
      %v2932 = vadd.f32 %v2900, %v472
      %v2933 = vadd.f32 %v2901, %v473
      %v2934 = vadd.f32 %v2902, %v474
      %v2935 = vadd.f32 %v2903, %v475
      %v2936 = vadd.f32 %v2904, %v476
      %v2937 = vadd.f32 %v2905, %v477
      %2938 = vst [vmem:[%s413] sm:$0xff] %v2906
      %2939 = vst [vmem:[%s413 + $0x8] sm:$0xff] %v2907
      %2940 = vst [vmem:[%s413 + $0x10] sm:$0xff] %v2908
      %2941 = vst [vmem:[%s413 + $0x18] sm:$0xff] %v2909
      %2942 = vst [vmem:[%s413 + $0x20] sm:$0xff] %v2910
      %2943 = vst [vmem:[%s413 + $0x28] sm:$0xff] %v2911
      %2944 = vst [vmem:[%s413 + $0x30] sm:$0xff] %v2912
      %2945 = vst [vmem:[%s413 + $0x38] sm:$0xff] %v2913
      %2946 = vst [vmem:[%s413 + $0x40] sm:$0xff] %v2914
      %2947 = vst [vmem:[%s413 + $0x48] sm:$0xff] %v2915
      %2948 = vst [vmem:[%s413 + $0x50] sm:$0xff] %v2916
      %2949 = vst [vmem:[%s413 + $0x58] sm:$0xff] %v2917
      %2950 = vst [vmem:[%s413 + $0x60] sm:$0xff] %v2918
      %2951 = vst [vmem:[%s413 + $0x68] sm:$0xff] %v2919
      %2952 = vst [vmem:[%s413 + $0x70] sm:$0xff] %v2920
      %2953 = vst [vmem:[%s413 + $0x78] sm:$0xff] %v2921
      %2954 = vst [vmem:[%s413 + $0x80] sm:$0xff] %v2922
      %2955 = vst [vmem:[%s413 + $0x88] sm:$0xff] %v2923
      %2956 = vst [vmem:[%s413 + $0x90] sm:$0xff] %v2924
      %2957 = vst [vmem:[%s413 + $0x98] sm:$0xff] %v2925
      %2958 = vst [vmem:[%s413 + $0xa0] sm:$0xff] %v2926
      %2959 = vst [vmem:[%s413 + $0xa8] sm:$0xff] %v2927
      %2960 = vst [vmem:[%s413 + $0xb0] sm:$0xff] %v2928
      %2961 = vst [vmem:[%s413 + $0xb8] sm:$0xff] %v2929
      %2962 = vst [vmem:[%s413 + $0xc0] sm:$0xff] %v2930
      %2963 = vst [vmem:[%s413 + $0xc8] sm:$0xff] %v2931
      %2964 = vst [vmem:[%s413 + $0xd0] sm:$0xff] %v2932
      %2965 = vst [vmem:[%s413 + $0xd8] sm:$0xff] %v2933
      %2966 = vst [vmem:[%s413 + $0xe0] sm:$0xff] %v2934
      %2967 = vst [vmem:[%s413 + $0xe8] sm:$0xff] %v2935
      %2968 = vst [vmem:[%s413 + $0xf0] sm:$0xff] %v2936
      %2969 = vst [vmem:[%s413 + $0xf8] sm:$0xff] %v2937
      %p2970 = scmp.lt.s32.totalorder %s23, 1
      %s2971 = scalar_select %p2970, %s23, 1
      %s2972 = smul.addr %s2971, 32
      %s2973 = smul.addr %s2972, 8
      %s2974 = scalar_lea.vmem %s12, %s2973
      // Predicated region
      $region69: #{bottleneck_forward.1} parent=67 // pred_check
        %p2975 = pneg %p298
      $region70: #{bottleneck_forward.1} parent=67 // pred_check_branch
        %2977 = sbr.rel (%p2975) target = $region72
      $region71: #{bottleneck_forward.1} parent=67 // pred_region
        _
      $region72: #{bottleneck_forward.1} parent=67 // pred_fallthru
        _
    $region68: #{bottleneck_forward.1} parent=5 // pred_fallthru
      _
    %p2978 = scmp.le.s32.totalorder 2, %s18
    // Predicated region
    $region73: #{bottleneck_forward.1} parent=5 // pred_check
      %p2979 = pneg %p2978
    $region74: #{bottleneck_forward.1} parent=5 // pred_check_branch
      %2981 = sbr.rel (%p2979) target = $region76
    $region75: #{bottleneck_forward.1} parent=5 // pred_region
      %s2982 = ssub.s32 %s18, 2
      // Predicated region
      $region77: #{bottleneck_forward.1} parent=75 // pred_check
        %p2983 = pneg %p304
      $region78: #{bottleneck_forward.1} parent=75 // pred_check_branch
        %2985 = sbr.rel (%p2983) target = $region80
      $region79: #{bottleneck_forward.1} parent=75 // pred_region
        %p2986 = scmp.lt.s32.totalorder %s24, 1
        %s2987 = scalar_select %p2986, %s24, 1
        %s2988 = smul.addr %s2987, 32
        %s2989 = smul.addr %s2988, 8
        %s2990 = scalar_lea.vmem %s12, %s2989
      $region80: #{bottleneck_forward.1} parent=75 // pred_fallthru
        _
    $region76: #{bottleneck_forward.1} parent=5 // pred_fallthru
      _
  $region6: #{bottleneck_forward.1} parent=0 // loop_footer
    %s22 = sadd.s32 1, %s18
  $region7: #{bottleneck_forward.1} parent=0 // loop_footer_branch
    %17 = sbr.rel target = $region3
  $region8: #{bottleneck_forward.1} parent=0 // loop_exit
    _

</llo_original>
